<compile_context>
chip_gen: v6e
topology: v6e:2x2x1
jax: 0.10.0
libtpu: 0.0.40
codegen_flags: <defaults>
</compile_context>

<pallas_src>
import functools

import jax
import jax.numpy as jnp
from jax.experimental import pallas as pl
from jax.experimental.pallas import tpu as pltpu

NUM_OPS = 15   # ShearX, ShearY, TranslateX, TranslateY, Rotate, HFlip, Invert,
               # Solarize, Posterize, Contrast, Saturate, Brightness, Sharpness,
               # AutoContrast, Equalize
NUM_PARAMS = 7  # thr, post_mul, post_div, m_contrast, m_saturate, m_bright, m_sharp


def _augmenter_kernel(sel_ref, x_ref, par_ref, mean_ref, std_ref, o_ref,
                      *, use_lane_roll=True):
    NB, C, H, W = o_ref.shape
    R = NB * C * H

    mean = mean_ref[...]                       # (1, C, 1, 1)
    std = std_ref[...]                         # (1, C, 1, 1)

    def par(p):                                # (NB, 1, 1, 1) per-image parameter
        return par_ref[:, :, :, p:p + 1]

    # ops 0..4 (ShearX, ShearY, TranslateX, TranslateY, Rotate):
    # TODO(synk): differentiable affine warps (grid_sample) have no clean Pallas
    # mapping here; treated as identity.
    # op 14 (Equalize):
    # TODO(synk): per-channel 256-bin histogram equalization (CDF LUT) skipped.

    # ---------------- pass 1 (unconditional, one full-block read+write) ------
    # denormalize -> Invert -> Solarize -> Posterize -> Contrast -> Saturate ->
    # Brightness, all fused into a single load/compute/store of the block.
    x = x_ref[...].astype(jnp.float32) * std + mean            # denormalize

    m6 = (sel_ref[6] != 0).astype(jnp.float32)                 # op 6: Invert
    x = x + m6 * (1.0 - 2.0 * x)                               # == 1-x iff m6 == 1

    x = jnp.where(x < par(0), x, 1.0 - x)                      # op 7: Solarize (thr=+inf when off)

    m8 = (sel_ref[8] != 0).astype(jnp.float32)                 # op 8: Posterize
    x = x + m8 * (jnp.floor(x * par(1)) * par(2) - x)          # floor(x*255/step)*step/255

    # ops 9-11: Contrast / Saturate / Brightness share one luminance pass.
    # Not gated: when all three coins are off this is pure VALU/XLU filler with
    # no extra VMEM pass (identities via m == 1), cheaper than a gated RMW pass.
    g = 0.299 * x[:, 0:1] + 0.587 * x[:, 1:2] + 0.114 * x[:, 2:3]     # (NB, 1, H, W)
    g_mean = jnp.sum(jnp.sum(g, axis=3, keepdims=True),
                     axis=2, keepdims=True) * (1.0 / (H * W))         # (NB, 1, 1, 1)
    mc = par(3)
    ms = par(4)
    mb = par(5)
    x = g_mean + mc * (x - g_mean)                             # op 9: Contrast
    g = g_mean + mc * (g - g_mean)                             # luminance of post-contrast image
    x = g + ms * (x - g)                                       # op 10: Saturate
    o_ref[...] = (x * mb).astype(o_ref.dtype)                  # op 11: Brightness

    # ---------------- pass 2 (gated, p=0.5): Sharpness -----------------------
    # blend toward a 3x3 PIL-SMOOTH blur ([[1,1,1],[1,5,1],[1,1,1]]/13)
    # (zero-padded at the borders instead of PIL's keep-border behaviour)
    @pl.when(sel_ref[12] != 0)
    def _():
        x4 = o_ref[...]
        x2 = x4.reshape(R, W)

        if use_lane_roll:
            # horizontal tridiagonal sum via lane rolls (XLU; no MXU matmul)
            lane = jax.lax.broadcasted_iota(jnp.int32, (1, W), 1)
            has_l = (lane >= 1).astype(jnp.float32)            # has a left neighbour
            has_r = (lane <= W - 2).astype(jnp.float32)        # has a right neighbour
            s = x2 + has_l * pltpu.roll(x2, 1, 1) + has_r * pltpu.roll(x2, W - 1, 1)
        else:
            # fallback: tridiagonal matrix built in-kernel from iota (no HBM input)
            ii = jax.lax.broadcasted_iota(jnp.int32, (W, W), 0)
            jj = jax.lax.broadcasted_iota(jnp.int32, (W, W), 1)
            tri = ((ii - jj <= 1).astype(jnp.float32) *
                   (jj - ii <= 1).astype(jnp.float32))
            s = jnp.dot(x2, tri, preferred_element_type=jnp.float32)

        # row-boundary masks (row above / below within the same image), built
        # in-kernel from a tiny (H, 1) iota tiled over the flattened rows.
        rowh = jax.lax.broadcasted_iota(jnp.int32, (H, 1), 0)            # (H, 1)
        has_a = jnp.tile((rowh >= 1).astype(jnp.float32), (NB * C, 1))   # (R, 1)
        has_b = jnp.tile((rowh <= H - 2).astype(jnp.float32), (NB * C, 1))

        # vertical sum via sublane rolls; accumulate into one running value to
        # limit live block-sized temporaries.
        acc = s + 4.0 * x2
        acc = acc + has_a * pltpu.roll(s, 1, 0)
        acc = acc + has_b * pltpu.roll(s, R - 1, 0)
        blur = (acc * (1.0 / 13.0)).reshape(NB, C, H, W)
        o_ref[...] = (blur + par(6) * (x4 - blur)).astype(o_ref.dtype)

    # ---------------- pass 3 (unconditional): AutoContrast + renormalize -----
    x = o_ref[...].astype(jnp.float32)
    mn = jnp.min(jnp.min(x, axis=3, keepdims=True), axis=2, keepdims=True)
    mx = jnp.max(jnp.max(x, axis=3, keepdims=True), axis=2, keepdims=True)
    m13 = (sel_ref[13] != 0).astype(jnp.float32)               # op 13: AutoContrast
    scale = (1.0 - m13) + m13 / jnp.maximum(mx - mn, 1e-5)     # (NB, C, 1, 1)
    shift = m13 * mn
    inv_std = 1.0 / std
    o_ref[...] = (((x - shift) * scale - mean) * inv_std).astype(o_ref.dtype)


def augmenter_forward(x, mag, mean, std, key, images_per_block=None):
    """Augmenter.forward(x, mag) with cutout=False, before_ops=after_ops=None."""
    N, C, H, W = x.shape
    assert C == 3 and mag.shape == (N, NUM_OPS)
    assert x.dtype == jnp.float32, "kernel uses the f32 output block as working buffer"

    # ---- tiny (N, 15) glue in XLA: sigmoid + per-op derived parameters ----
    sig = jax.nn.sigmoid(mag.astype(jnp.float32))
    # per-op Bernoulli(0.5) coin (`torch.rand(1) < 0.5`), one per op per call,
    # shared across the batch
    sel = (jax.random.uniform(key, (NUM_OPS,)) < 0.5).astype(jnp.int32)

    # Fold the "coin off" state into the per-image parameters wherever the op
    # has an exact parametric identity (threshold = +inf, blend magnitude = 1).
    thr = jnp.where(sel[7] != 0, sig[:, 7], jnp.inf)                 # Solarize
    bits = jnp.floor(8.0 * sig[:, 8]).astype(jnp.int32)              # Posterize bits
    step = jnp.right_shift(256, bits).astype(jnp.float32)            # exact 2**(8-bits)
    post_mul = 255.0 / step
    post_div = step / 255.0
    m_contrast = jnp.where(sel[9] != 0, 0.05 + 0.9 * sig[:, 9], 1.0)
    m_saturate = jnp.where(sel[10] != 0, sig[:, 10], 1.0)
    m_bright = jnp.where(sel[11] != 0, 0.05 + 0.9 * sig[:, 11], 1.0)
    m_sharp = 0.05 + 0.9 * sig[:, 12]
    params = jnp.stack([thr, post_mul, post_div, m_contrast,
                        m_saturate, m_bright, m_sharp], axis=1)       # (N, P)

    # op 5 (HorizontalFlip): exact lane reversal, executed only when the coin
    # fires; it commutes exactly with the per-channel denormalize, so applying
    # it before the kernel preserves op ordering and removes the MXU
    # permutation matmul from the kernel.
    x = jax.lax.cond(sel[5] != 0, lambda v: jnp.flip(v, axis=-1), lambda v: v, x)

    # ---- generation-aware VMEM budget and images-per-block ----
    per_img_bytes = C * H * W * 4
    try:
        vmem_cap = int(getattr(pltpu.get_tpu_info(), "vmem_capacity_bytes", 0))
    except Exception:
        vmem_cap = 0
    if vmem_cap <= 0:
        vmem_cap = 64 * 1024 * 1024            # conservative default (v7x per-TC)
    # ~40 MiB of the 64 MiB on v7x, ~96 MiB of the 128 MiB on v5e/v6e
    vmem_budget = (40 if vmem_cap <= 64 * 1024 * 1024 else 96) * 1024 * 1024
    if images_per_block is None:
        # per grid step: 2x input (double-buffered) + 2x output + ~5 block-sized
        # Mosaic temporaries (pass-1 value + gray, sharpness x/s/acc) ~= 9 blocks
        images_per_block = max(1, vmem_budget // (9 * per_img_bytes))
    NB = int(min(images_per_block, N))
    N_pad = ((N + NB - 1) // NB) * NB
    if N_pad != N:
        x = jnp.pad(x, ((0, N_pad - N), (0, 0), (0, 0), (0, 0)))
        params = jnp.pad(params, ((0, N_pad - N), (0, 0)), constant_values=1.0)
    params = params.reshape(N_pad, 1, 1, NUM_PARAMS)

    mean4 = jnp.asarray(mean, jnp.float32).reshape(1, C, 1, 1)
    std4 = jnp.asarray(std, jnp.float32).reshape(1, C, 1, 1)

    grid_spec = pltpu.PrefetchScalarGridSpec(
        num_scalar_prefetch=1,                      # sel -> SMEM (gates pl.when)
        grid=(N_pad // NB,),
        in_specs=[
            pl.BlockSpec((NB, C, H, W), lambda b, _s: (b, 0, 0, 0)),            # x
            pl.BlockSpec((NB, 1, 1, NUM_PARAMS), lambda b, _s: (b, 0, 0, 0)),   # params
            pl.BlockSpec((1, C, 1, 1), lambda b, _s: (0, 0, 0, 0)),             # mean
            pl.BlockSpec((1, C, 1, 1), lambda b, _s: (0, 0, 0, 0)),             # std
        ],
        out_specs=pl.BlockSpec((NB, C, H, W), lambda b, _s: (b, 0, 0, 0)),
    )

    def call(use_lane_roll):
        return pl.pallas_call(
            functools.partial(_augmenter_kernel, use_lane_roll=use_lane_roll),
            out_shape=jax.ShapeDtypeStruct((N_pad, C, H, W), x.dtype),
            grid_spec=grid_spec,
            compiler_params=pltpu.CompilerParams(
                # TODO(synk): pltpu.CORE_PARALLEL here for v7x dual TensorCore.
                dimension_semantics=("parallel",),
                vmem_limit_bytes=int(vmem_budget)),
        )(sel, x, params, mean4, std4)

    try:
        out = call(True)
    except Exception:
        # Lane-axis rotate unavailable for this W on this backend: fall back to
        # the in-kernel tridiagonal matmul for the horizontal blur sum.
        out = call(False)
    return out[:N]


if __name__ == "__main__":
    key = jax.random.PRNGKey(0)
    kx, km, ksel = jax.random.split(key, 3)

    N, C, H, W = 2, 3, 16, 16
    x = jax.random.normal(kx, (N, C, H, W), dtype=jnp.float32)
    mag = jax.random.normal(km, (N, NUM_OPS), dtype=jnp.float32)
    mean = jnp.array([0.485, 0.456, 0.406], dtype=jnp.float32)
    std = jnp.array([0.229, 0.224, 0.225], dtype=jnp.float32)

    out = augmenter_forward(x, mag, mean, std, ksel)
    out = jax.block_until_ready(out)
    assert out.shape == (N, C, H, W) and out.dtype == x.dtype
    assert bool(jnp.all(jnp.isfinite(out)))
    print("KERNEL_OK")
</pallas_src>

<mosaic_0001>
module attributes {stable_mosaic.version = 11 : i64} {
  func.func @_augmenter_kernel(%arg0: i32, %arg1: memref<15xi32, #tpu.memory_space<smem>>, %arg2: memref<2x3x16x16xf32, #tpu.memory_space<vmem>>, %arg3: memref<2x1x1x7xf32, #tpu.memory_space<vmem>>, %arg4: memref<1x3x1x1xf32, #tpu.memory_space<vmem>>, %arg5: memref<1x3x1x1xf32, #tpu.memory_space<vmem>>, %arg6: memref<2x3x16x16xf32, #tpu.memory_space<vmem>>) attributes {dimension_semantics = [#tpu.dimension_semantics<parallel>], iteration_bounds = array<i64: 1>, scalar_prefetch = 1 : i64, scratch_operands = 0 : i64, tpu.core_type = #tpu.core_type<tc>, window_params = [{transform_indices = @transform_0, window_bounds = array<i64: 2, 3, 16, 16>}, {transform_indices = @transform_1, window_bounds = array<i64: 2, 1, 1, 7>}, {pipeline_mode = #tpu.pipeline_mode<synchronous>, transform_indices = @transform_2, window_bounds = array<i64: 1, 3, 1, 1>}, {pipeline_mode = #tpu.pipeline_mode<synchronous>, transform_indices = @transform_3, window_bounds = array<i64: 1, 3, 1, 1>}, {transform_indices = @transform_4, window_bounds = array<i64: 2, 3, 16, 16>}]} {
    %c0 = arith.constant 0 : index
    %c0_0 = arith.constant 0 : index
    %c0_1 = arith.constant 0 : index
    %c0_2 = arith.constant 0 : index
    %0 = vector.load %arg4[%c0, %c0_0, %c0_1, %c0_2] : memref<1x3x1x1xf32, #tpu.memory_space<vmem>>, vector<1x3x1x1xf32>
    %c0_3 = arith.constant 0 : index
    %c0_4 = arith.constant 0 : index
    %c0_5 = arith.constant 0 : index
    %c0_6 = arith.constant 0 : index
    %1 = vector.load %arg5[%c0_3, %c0_4, %c0_5, %c0_6] : memref<1x3x1x1xf32, #tpu.memory_space<vmem>>, vector<1x3x1x1xf32>
    %c0_7 = arith.constant 0 : index
    %c0_8 = arith.constant 0 : index
    %c0_9 = arith.constant 0 : index
    %c0_10 = arith.constant 0 : index
    %2 = vector.load %arg2[%c0_7, %c0_8, %c0_9, %c0_10] : memref<2x3x16x16xf32, #tpu.memory_space<vmem>>, vector<2x3x16x16xf32>
    %3 = vector.broadcast %1 : vector<1x3x1x1xf32> to vector<2x3x16x16xf32>
    %4 = arith.mulf %2, %3 : vector<2x3x16x16xf32>
    %5 = vector.broadcast %0 : vector<1x3x1x1xf32> to vector<2x3x16x16xf32>
    %6 = arith.addf %4, %5 : vector<2x3x16x16xf32>
    %c6 = arith.constant 6 : index
    %7 = memref.load %arg1[%c6] : memref<15xi32, #tpu.memory_space<smem>>
    %c0_i32 = arith.constant 0 : i32
    %8 = arith.cmpi ne, %7, %c0_i32 : i32
    %9 = arith.extui %8 : i1 to i32
    %10 = arith.sitofp %9 : i32 to f32
    %cst = arith.constant 2.000000e+00 : f32
    %11 = vector.broadcast %cst : f32 to vector<2x3x16x16xf32>
    %12 = arith.mulf %11, %6 : vector<2x3x16x16xf32>
    %cst_11 = arith.constant 1.000000e+00 : f32
    %13 = vector.broadcast %cst_11 : f32 to vector<2x3x16x16xf32>
    %14 = arith.subf %13, %12 : vector<2x3x16x16xf32>
    %15 = vector.broadcast %10 : f32 to vector<2x3x16x16xf32>
    %16 = arith.mulf %15, %14 : vector<2x3x16x16xf32>
    %17 = arith.addf %6, %16 : vector<2x3x16x16xf32>
    %c0_12 = arith.constant 0 : index
    %c0_13 = arith.constant 0 : index
    %c0_14 = arith.constant 0 : index
    %c0_15 = arith.constant 0 : index
    %18 = vector.load %arg3[%c0_12, %c0_13, %c0_14, %c0_15] : memref<2x1x1x7xf32, #tpu.memory_space<vmem>>, vector<2x1x1x1xf32>
    %19 = vector.broadcast %18 : vector<2x1x1x1xf32> to vector<2x3x16x16xf32>
    %20 = arith.cmpf olt, %17, %19 : vector<2x3x16x16xf32>
    %cst_16 = arith.constant 1.000000e+00 : f32
    %21 = vector.broadcast %cst_16 : f32 to vector<2x3x16x16xf32>
    %22 = arith.subf %21, %17 : vector<2x3x16x16xf32>
    %23 = arith.select %20, %17, %22 : vector<2x3x16x16xi1>, vector<2x3x16x16xf32>
    %c8 = arith.constant 8 : index
    %24 = memref.load %arg1[%c8] : memref<15xi32, #tpu.memory_space<smem>>
    %c0_i32_17 = arith.constant 0 : i32
    %25 = arith.cmpi ne, %24, %c0_i32_17 : i32
    %26 = arith.extui %25 : i1 to i32
    %27 = arith.sitofp %26 : i32 to f32
    %c0_18 = arith.constant 0 : index
    %c0_19 = arith.constant 0 : index
    %c0_20 = arith.constant 0 : index
    %c1 = arith.constant 1 : index
    %28 = vector.load %arg3[%c0_18, %c0_19, %c0_20, %c1] : memref<2x1x1x7xf32, #tpu.memory_space<vmem>>, vector<2x1x1x1xf32>
    %29 = vector.broadcast %28 : vector<2x1x1x1xf32> to vector<2x3x16x16xf32>
    %30 = arith.mulf %23, %29 : vector<2x3x16x16xf32>
    %31 = math.floor %30 : vector<2x3x16x16xf32>
    %c0_21 = arith.constant 0 : index
    %c0_22 = arith.constant 0 : index
    %c0_23 = arith.constant 0 : index
    %c2 = arith.constant 2 : index
    %32 = vector.load %arg3[%c0_21, %c0_22, %c0_23, %c2] : memref<2x1x1x7xf32, #tpu.memory_space<vmem>>, vector<2x1x1x1xf32>
    %33 = vector.broadcast %32 : vector<2x1x1x1xf32> to vector<2x3x16x16xf32>
    %34 = arith.mulf %31, %33 : vector<2x3x16x16xf32>
    %35 = arith.subf %34, %23 : vector<2x3x16x16xf32>
    %36 = vector.broadcast %27 : f32 to vector<2x3x16x16xf32>
    %37 = arith.mulf %36, %35 : vector<2x3x16x16xf32>
    %38 = arith.addf %23, %37 : vector<2x3x16x16xf32>
    %39 = vector.extract_strided_slice %38 {offsets = [0, 0, 0, 0], sizes = [2, 1, 16, 16], strides = [1, 1, 1, 1]} : vector<2x3x16x16xf32> to vector<2x1x16x16xf32>
    %cst_24 = arith.constant 2.990000e-01 : f32
    %40 = vector.broadcast %cst_24 : f32 to vector<2x1x16x16xf32>
    %41 = arith.mulf %40, %39 : vector<2x1x16x16xf32>
    %42 = vector.extract_strided_slice %38 {offsets = [0, 1, 0, 0], sizes = [2, 1, 16, 16], strides = [1, 1, 1, 1]} : vector<2x3x16x16xf32> to vector<2x1x16x16xf32>
    %cst_25 = arith.constant 5.870000e-01 : f32
    %43 = vector.broadcast %cst_25 : f32 to vector<2x1x16x16xf32>
    %44 = arith.mulf %43, %42 : vector<2x1x16x16xf32>
    %45 = arith.addf %41, %44 : vector<2x1x16x16xf32>
    %46 = vector.extract_strided_slice %38 {offsets = [0, 2, 0, 0], sizes = [2, 1, 16, 16], strides = [1, 1, 1, 1]} : vector<2x3x16x16xf32> to vector<2x1x16x16xf32>
    %cst_26 = arith.constant 1.140000e-01 : f32
    %47 = vector.broadcast %cst_26 : f32 to vector<2x1x16x16xf32>
    %48 = arith.mulf %47, %46 : vector<2x1x16x16xf32>
    %49 = arith.addf %45, %48 : vector<2x1x16x16xf32>
    %cst_27 = arith.constant dense<0.000000e+00> : vector<2x1x16xf32>
    %50 = vector.multi_reduction <add>, %49, %cst_27 [3] : vector<2x1x16x16xf32> to vector<2x1x16xf32>
    %51 = vector.shape_cast %50 : vector<2x1x16xf32> to vector<2x1x16x1xf32>
    %cst_28 = arith.constant dense<0.000000e+00> : vector<2x1x1xf32>
    %52 = vector.multi_reduction <add>, %51, %cst_28 [2] : vector<2x1x16x1xf32> to vector<2x1x1xf32>
    %53 = vector.shape_cast %52 : vector<2x1x1xf32> to vector<2x1x1x1xf32>
    %cst_29 = arith.constant 3.906250e-03 : f32
    %54 = vector.broadcast %cst_29 : f32 to vector<2x1x1x1xf32>
    %55 = arith.mulf %53, %54 : vector<2x1x1x1xf32>
    %c0_30 = arith.constant 0 : index
    %c0_31 = arith.constant 0 : index
    %c0_32 = arith.constant 0 : index
    %c3 = arith.constant 3 : index
    %56 = vector.load %arg3[%c0_30, %c0_31, %c0_32, %c3] : memref<2x1x1x7xf32, #tpu.memory_space<vmem>>, vector<2x1x1x1xf32>
    %c0_33 = arith.constant 0 : index
    %c0_34 = arith.constant 0 : index
    %c0_35 = arith.constant 0 : index
    %c4 = arith.constant 4 : index
    %57 = vector.load %arg3[%c0_33, %c0_34, %c0_35, %c4] : memref<2x1x1x7xf32, #tpu.memory_space<vmem>>, vector<2x1x1x1xf32>
    %c0_36 = arith.constant 0 : index
    %c0_37 = arith.constant 0 : index
    %c0_38 = arith.constant 0 : index
    %c5 = arith.constant 5 : index
    %58 = vector.load %arg3[%c0_36, %c0_37, %c0_38, %c5] : memref<2x1x1x7xf32, #tpu.memory_space<vmem>>, vector<2x1x1x1xf32>
    %59 = vector.broadcast %55 : vector<2x1x1x1xf32> to vector<2x3x16x16xf32>
    %60 = arith.subf %38, %59 : vector<2x3x16x16xf32>
    %61 = vector.broadcast %56 : vector<2x1x1x1xf32> to vector<2x3x16x16xf32>
    %62 = arith.mulf %61, %60 : vector<2x3x16x16xf32>
    %63 = vector.broadcast %55 : vector<2x1x1x1xf32> to vector<2x3x16x16xf32>
    %64 = arith.addf %63, %62 : vector<2x3x16x16xf32>
    %65 = vector.broadcast %55 : vector<2x1x1x1xf32> to vector<2x1x16x16xf32>
    %66 = arith.subf %49, %65 : vector<2x1x16x16xf32>
    %67 = vector.broadcast %56 : vector<2x1x1x1xf32> to vector<2x1x16x16xf32>
    %68 = arith.mulf %67, %66 : vector<2x1x16x16xf32>
    %69 = vector.broadcast %55 : vector<2x1x1x1xf32> to vector<2x1x16x16xf32>
    %70 = arith.addf %69, %68 : vector<2x1x16x16xf32>
    %71 = vector.broadcast %70 : vector<2x1x16x16xf32> to vector<2x3x16x16xf32>
    %72 = arith.subf %64, %71 : vector<2x3x16x16xf32>
    %73 = vector.broadcast %57 : vector<2x1x1x1xf32> to vector<2x3x16x16xf32>
    %74 = arith.mulf %73, %72 : vector<2x3x16x16xf32>
    %75 = vector.broadcast %70 : vector<2x1x16x16xf32> to vector<2x3x16x16xf32>
    %76 = arith.addf %75, %74 : vector<2x3x16x16xf32>
    %77 = vector.broadcast %58 : vector<2x1x1x1xf32> to vector<2x3x16x16xf32>
    %78 = arith.mulf %76, %77 : vector<2x3x16x16xf32>
    %c0_39 = arith.constant 0 : index
    %c0_40 = arith.constant 0 : index
    %c0_41 = arith.constant 0 : index
    %c0_42 = arith.constant 0 : index
    %79 = vector.load %arg6[%c0_39, %c0_40, %c0_41, %c0_42] : memref<2x3x16x16xf32, #tpu.memory_space<vmem>>, vector<2x3x16x16xf32>
    tpu.vector_store %arg6[%c0_39, %c0_40, %c0_41, %c0_42], %78 {strides = array<i32>} : memref<2x3x16x16xf32, #tpu.memory_space<vmem>>, vector<2x3x16x16xf32>,
    %c12 = arith.constant 12 : index
    %80 = memref.load %arg1[%c12] : memref<15xi32, #tpu.memory_space<smem>>
    %c0_i32_43 = arith.constant 0 : i32
    %81 = arith.cmpi ne, %80, %c0_i32_43 : i32
    %82 = arith.extui %81 : i1 to i32
    %c0_i32_44 = arith.constant 0 : i32
    %83 = arith.cmpi ne, %82, %c0_i32_44 : i32
    scf.if %83 {
      %c0_61 = arith.constant 0 : index
      %c0_62 = arith.constant 0 : index
      %c0_63 = arith.constant 0 : index
      %c0_64 = arith.constant 0 : index
      %118 = vector.load %arg6[%c0_61, %c0_62, %c0_63, %c0_64] : memref<2x3x16x16xf32, #tpu.memory_space<vmem>>, vector<2x3x16x16xf32>
      %119 = vector.shape_cast %118 : vector<2x3x16x16xf32> to vector<96x16xf32>
      %120 = tpu.iota {dimensions = array<i32: 1>} : vector<1x16xi32>
      %c1_i32 = arith.constant 1 : i32
      %121 = vector.broadcast %c1_i32 : i32 to vector<1x16xi32>
      %122 = arith.cmpi sge, %120, %121 : vector<1x16xi32>
      %123 = arith.extui %122 : vector<1x16xi1> to vector<1x16xi32>
      %124 = arith.sitofp %123 : vector<1x16xi32> to vector<1x16xf32>
      %c14_i32 = arith.constant 14 : i32
      %125 = vector.broadcast %c14_i32 : i32 to vector<1x16xi32>
      %126 = arith.cmpi sle, %120, %125 : vector<1x16xi32>
      %127 = arith.extui %126 : vector<1x16xi1> to vector<1x16xi32>
      %128 = arith.sitofp %127 : vector<1x16xi32> to vector<1x16xf32>
      %c1_i32_65 = arith.constant 1 : i32
      %129 = tpu.dynamic_rotate %119 by %c1_i32_65 dim 1 : vector<96x16xf32>, i32 -> vector<96x16xf32>
      %130 = vector.broadcast %124 : vector<1x16xf32> to vector<96x16xf32>
      %131 = arith.mulf %130, %129 : vector<96x16xf32>
      %132 = arith.addf %119, %131 : vector<96x16xf32>
      %c15_i32 = arith.constant 15 : i32
      %133 = tpu.dynamic_rotate %119 by %c15_i32 dim 1 : vector<96x16xf32>, i32 -> vector<96x16xf32>
      %134 = vector.broadcast %128 : vector<1x16xf32> to vector<96x16xf32>
      %135 = arith.mulf %134, %133 : vector<96x16xf32>
      %136 = arith.addf %132, %135 : vector<96x16xf32>
      %137 = tpu.iota {dimensions = array<i32: 0>} : vector<16x1xi32>
      %c1_i32_66 = arith.constant 1 : i32
      %138 = vector.broadcast %c1_i32_66 : i32 to vector<16x1xi32>
      %139 = arith.cmpi sge, %137, %138 : vector<16x1xi32>
      %140 = arith.extui %139 : vector<16x1xi1> to vector<16x1xi32>
      %141 = arith.sitofp %140 : vector<16x1xi32> to vector<16x1xf32>
      %142 = tpu.concatenate %141, %141, %141, %141, %141, %141 in 0 : vector<16x1xf32>, vector<16x1xf32>, vector<16x1xf32>, vector<16x1xf32>, vector<16x1xf32>, vector<16x1xf32> -> vector<96x1xf32>
      %c14_i32_67 = arith.constant 14 : i32
      %143 = vector.broadcast %c14_i32_67 : i32 to vector<16x1xi32>
      %144 = arith.cmpi sle, %137, %143 : vector<16x1xi32>
      %145 = arith.extui %144 : vector<16x1xi1> to vector<16x1xi32>
      %146 = arith.sitofp %145 : vector<16x1xi32> to vector<16x1xf32>
      %147 = tpu.concatenate %146, %146, %146, %146, %146, %146 in 0 : vector<16x1xf32>, vector<16x1xf32>, vector<16x1xf32>, vector<16x1xf32>, vector<16x1xf32>, vector<16x1xf32> -> vector<96x1xf32>
      %cst_68 = arith.constant 4.000000e+00 : f32
      %148 = vector.broadcast %cst_68 : f32 to vector<96x16xf32>
      %149 = arith.mulf %148, %119 : vector<96x16xf32>
      %150 = arith.addf %136, %149 : vector<96x16xf32>
      %c1_i32_69 = arith.constant 1 : i32
      %151 = tpu.dynamic_rotate %136 by %c1_i32_69 dim 0 : vector<96x16xf32>, i32 -> vector<96x16xf32>
      %152 = vector.broadcast %142 : vector<96x1xf32> to vector<96x16xf32>
      %153 = arith.mulf %152, %151 : vector<96x16xf32>
      %154 = arith.addf %150, %153 : vector<96x16xf32>
      %c95_i32 = arith.constant 95 : i32
      %155 = tpu.dynamic_rotate %136 by %c95_i32 dim 0 : vector<96x16xf32>, i32 -> vector<96x16xf32>
      %156 = vector.broadcast %147 : vector<96x1xf32> to vector<96x16xf32>
      %157 = arith.mulf %156, %155 : vector<96x16xf32>
      %158 = arith.addf %154, %157 : vector<96x16xf32>
      %cst_70 = arith.constant 0.0769230798 : f32
      %159 = vector.broadcast %cst_70 : f32 to vector<96x16xf32>
      %160 = arith.mulf %158, %159 : vector<96x16xf32>
      %161 = vector.shape_cast %160 : vector<96x16xf32> to vector<2x3x16x16xf32>
      %c0_71 = arith.constant 0 : index
      %c0_72 = arith.constant 0 : index
      %c0_73 = arith.constant 0 : index
      %c6_74 = arith.constant 6 : index
      %162 = vector.load %arg3[%c0_71, %c0_72, %c0_73, %c6_74] : memref<2x1x1x7xf32, #tpu.memory_space<vmem>>, vector<2x1x1x1xf32>
      %163 = arith.subf %118, %161 : vector<2x3x16x16xf32>
      %164 = vector.broadcast %162 : vector<2x1x1x1xf32> to vector<2x3x16x16xf32>
      %165 = arith.mulf %164, %163 : vector<2x3x16x16xf32>
      %166 = arith.addf %161, %165 : vector<2x3x16x16xf32>
      %c0_75 = arith.constant 0 : index
      %c0_76 = arith.constant 0 : index
      %c0_77 = arith.constant 0 : index
      %c0_78 = arith.constant 0 : index
      %167 = vector.load %arg6[%c0_75, %c0_76, %c0_77, %c0_78] : memref<2x3x16x16xf32, #tpu.memory_space<vmem>>, vector<2x3x16x16xf32>
      tpu.vector_store %arg6[%c0_75, %c0_76, %c0_77, %c0_78], %166 {strides = array<i32>} : memref<2x3x16x16xf32, #tpu.memory_space<vmem>>, vector<2x3x16x16xf32>,
    } else {
    }
    %c0_45 = arith.constant 0 : index
    %c0_46 = arith.constant 0 : index
    %c0_47 = arith.constant 0 : index
    %c0_48 = arith.constant 0 : index
    %84 = vector.load %arg6[%c0_45, %c0_46, %c0_47, %c0_48] : memref<2x3x16x16xf32, #tpu.memory_space<vmem>>, vector<2x3x16x16xf32>
    %cst_49 = arith.constant dense<0x7F800000> : vector<2x3x16xf32>
    %85 = vector.multi_reduction <minimumf>, %84, %cst_49 [3] : vector<2x3x16x16xf32> to vector<2x3x16xf32>
    %86 = vector.shape_cast %85 : vector<2x3x16xf32> to vector<2x3x16x1xf32>
    %cst_50 = arith.constant dense<0x7F800000> : vector<2x3x1xf32>
    %87 = vector.multi_reduction <minimumf>, %86, %cst_50 [2] : vector<2x3x16x1xf32> to vector<2x3x1xf32>
    %88 = vector.shape_cast %87 : vector<2x3x1xf32> to vector<2x3x1x1xf32>
    %cst_51 = arith.constant dense<0xFF800000> : vector<2x3x16xf32>
    %89 = vector.multi_reduction <maximumf>, %84, %cst_51 [3] : vector<2x3x16x16xf32> to vector<2x3x16xf32>
    %90 = vector.shape_cast %89 : vector<2x3x16xf32> to vector<2x3x16x1xf32>
    %cst_52 = arith.constant dense<0xFF800000> : vector<2x3x1xf32>
    %91 = vector.multi_reduction <maximumf>, %90, %cst_52 [2] : vector<2x3x16x1xf32> to vector<2x3x1xf32>
    %92 = vector.shape_cast %91 : vector<2x3x1xf32> to vector<2x3x1x1xf32>
    %c13 = arith.constant 13 : index
    %93 = memref.load %arg1[%c13] : memref<15xi32, #tpu.memory_space<smem>>
    %c0_i32_53 = arith.constant 0 : i32
    %94 = arith.cmpi ne, %93, %c0_i32_53 : i32
    %95 = arith.extui %94 : i1 to i32
    %96 = arith.sitofp %95 : i32 to f32
    %cst_54 = arith.constant 1.000000e+00 : f32
    %97 = arith.subf %cst_54, %96 : f32
    %98 = arith.subf %92, %88 : vector<2x3x1x1xf32>
    %cst_55 = arith.constant 9.99999974E-6 : f32
    %99 = vector.broadcast %cst_55 : f32 to vector<2x3x1x1xf32>
    %100 = arith.maximumf %98, %99 : vector<2x3x1x1xf32>
    %101 = vector.broadcast %96 : f32 to vector<2x3x1x1xf32>
    %102 = arith.divf %101, %100 : vector<2x3x1x1xf32>
    %103 = vector.broadcast %97 : f32 to vector<2x3x1x1xf32>
    %104 = arith.addf %103, %102 : vector<2x3x1x1xf32>
    %105 = vector.broadcast %96 : f32 to vector<2x3x1x1xf32>
    %106 = arith.mulf %105, %88 : vector<2x3x1x1xf32>
    %cst_56 = arith.constant 1.000000e+00 : f32
    %107 = vector.broadcast %cst_56 : f32 to vector<1x3x1x1xf32>
    %108 = arith.divf %107, %1 : vector<1x3x1x1xf32>
    %109 = vector.broadcast %106 : vector<2x3x1x1xf32> to vector<2x3x16x16xf32>
    %110 = arith.subf %84, %109 : vector<2x3x16x16xf32>
    %111 = vector.broadcast %104 : vector<2x3x1x1xf32> to vector<2x3x16x16xf32>
    %112 = arith.mulf %110, %111 : vector<2x3x16x16xf32>
    %113 = vector.broadcast %0 : vector<1x3x1x1xf32> to vector<2x3x16x16xf32>
    %114 = arith.subf %112, %113 : vector<2x3x16x16xf32>
    %115 = vector.broadcast %108 : vector<1x3x1x1xf32> to vector<2x3x16x16xf32>
    %116 = arith.mulf %114, %115 : vector<2x3x16x16xf32>
    %c0_57 = arith.constant 0 : index
    %c0_58 = arith.constant 0 : index
    %c0_59 = arith.constant 0 : index
    %c0_60 = arith.constant 0 : index
    %117 = vector.load %arg6[%c0_57, %c0_58, %c0_59, %c0_60] : memref<2x3x16x16xf32, #tpu.memory_space<vmem>>, vector<2x3x16x16xf32>
    tpu.vector_store %arg6[%c0_57, %c0_58, %c0_59, %c0_60], %116 {strides = array<i32>} : memref<2x3x16x16xf32, #tpu.memory_space<vmem>>, vector<2x3x16x16xf32>,
    return
  }
  func.func @transform_0(%arg0: i32, %arg1: memref<15xi32, #tpu.memory_space<smem>>) -> (i32, i32, i32, i32) {
    %c0_i32 = arith.constant 0 : i32
    %c0_i32_0 = arith.constant 0 : i32
    %c0_i32_1 = arith.constant 0 : i32
    %c0_i32_2 = arith.constant 0 : i32
    return %arg0, %c0_i32, %c0_i32_0, %c0_i32_1 : i32, i32, i32, i32
  }
  func.func @transform_1(%arg0: i32, %arg1: memref<15xi32, #tpu.memory_space<smem>>) -> (i32, i32, i32, i32) {
    %c0_i32 = arith.constant 0 : i32
    %c0_i32_0 = arith.constant 0 : i32
    %c0_i32_1 = arith.constant 0 : i32
    %c0_i32_2 = arith.constant 0 : i32
    return %arg0, %c0_i32, %c0_i32_0, %c0_i32_1 : i32, i32, i32, i32
  }
  func.func @transform_2(%arg0: i32, %arg1: memref<15xi32, #tpu.memory_space<smem>>) -> (i32, i32, i32, i32) {
    %c0_i32 = arith.constant 0 : i32
    %c0_i32_0 = arith.constant 0 : i32
    %c0_i32_1 = arith.constant 0 : i32
    %c0_i32_2 = arith.constant 0 : i32
    %c0_i32_3 = arith.constant 0 : i32
    return %c0_i32, %c0_i32_0, %c0_i32_1, %c0_i32_2 : i32, i32, i32, i32
  }
  func.func @transform_3(%arg0: i32, %arg1: memref<15xi32, #tpu.memory_space<smem>>) -> (i32, i32, i32, i32) {
    %c0_i32 = arith.constant 0 : i32
    %c0_i32_0 = arith.constant 0 : i32
    %c0_i32_1 = arith.constant 0 : i32
    %c0_i32_2 = arith.constant 0 : i32
    %c0_i32_3 = arith.constant 0 : i32
    return %c0_i32, %c0_i32_0, %c0_i32_1, %c0_i32_2 : i32, i32, i32, i32
  }
  func.func @transform_4(%arg0: i32, %arg1: memref<15xi32, #tpu.memory_space<smem>>) -> (i32, i32, i32, i32) {
    %c0_i32 = arith.constant 0 : i32
    %c0_i32_0 = arith.constant 0 : i32
    %c0_i32_1 = arith.constant 0 : i32
    %c0_i32_2 = arith.constant 0 : i32
    return %arg0, %c0_i32, %c0_i32_0, %c0_i32_1 : i32, i32, i32, i32
  }
}

module attributes {stable_mosaic.version = 11 : i64} {
  func.func @_augmenter_kernel(%arg0: i32, %arg1: memref<15xi32, #tpu.memory_space<smem>>, %arg2: memref<2x3x16x16xf32, #tpu.memory_space<vmem>>, %arg3: memref<2x1x1x7xf32, #tpu.memory_space<vmem>>, %arg4: memref<1x3x1x1xf32, #tpu.memory_space<vmem>>, %arg5: memref<1x3x1x1xf32, #tpu.memory_space<vmem>>, %arg6: memref<2x3x16x16xf32, #tpu.memory_space<vmem>>) attributes {dimension_semantics = [#tpu.dimension_semantics<parallel>], iteration_bounds = array<i64: 1>, scalar_prefetch = 1 : i64, scratch_operands = 0 : i64, tpu.core_type = #tpu.core_type<tc>, window_params = [{transform_indices = @transform_0, window_bounds = array<i64: 2, 3, 16, 16>}, {transform_indices = @transform_1, window_bounds = array<i64: 2, 1, 1, 7>}, {pipeline_mode = #tpu.pipeline_mode<synchronous>, transform_indices = @transform_2, window_bounds = array<i64: 1, 3, 1, 1>}, {pipeline_mode = #tpu.pipeline_mode<synchronous>, transform_indices = @transform_3, window_bounds = array<i64: 1, 3, 1, 1>}, {transform_indices = @transform_4, window_bounds = array<i64: 2, 3, 16, 16>}]} {
    %c0 = arith.constant 0 : index
    %c0_0 = arith.constant 0 : index
    %c0_1 = arith.constant 0 : index
    %c0_2 = arith.constant 0 : index
    %0 = vector.load %arg4[%c0, %c0_0, %c0_1, %c0_2] : memref<1x3x1x1xf32, #tpu.memory_space<vmem>>, vector<1x3x1x1xf32>
    %c0_3 = arith.constant 0 : index
    %c0_4 = arith.constant 0 : index
    %c0_5 = arith.constant 0 : index
    %c0_6 = arith.constant 0 : index
    %1 = vector.load %arg5[%c0_3, %c0_4, %c0_5, %c0_6] : memref<1x3x1x1xf32, #tpu.memory_space<vmem>>, vector<1x3x1x1xf32>
    %c0_7 = arith.constant 0 : index
    %c0_8 = arith.constant 0 : index
    %c0_9 = arith.constant 0 : index
    %c0_10 = arith.constant 0 : index
    %2 = vector.load %arg2[%c0_7, %c0_8, %c0_9, %c0_10] : memref<2x3x16x16xf32, #tpu.memory_space<vmem>>, vector<2x3x16x16xf32>
    %3 = vector.broadcast %1 : vector<1x3x1x1xf32> to vector<2x3x16x16xf32>
    %4 = arith.mulf %2, %3 : vector<2x3x16x16xf32>
    %5 = vector.broadcast %0 : vector<1x3x1x1xf32> to vector<2x3x16x16xf32>
    %6 = arith.addf %4, %5 : vector<2x3x16x16xf32>
    %c6 = arith.constant 6 : index
    %7 = memref.load %arg1[%c6] : memref<15xi32, #tpu.memory_space<smem>>
    %c0_i32 = arith.constant 0 : i32
    %8 = arith.cmpi ne, %7, %c0_i32 : i32
    %9 = arith.extui %8 : i1 to i32
    %10 = arith.sitofp %9 : i32 to f32
    %cst = arith.constant 2.000000e+00 : f32
    %11 = vector.broadcast %cst : f32 to vector<2x3x16x16xf32>
    %12 = arith.mulf %11, %6 : vector<2x3x16x16xf32>
    %cst_11 = arith.constant 1.000000e+00 : f32
    %13 = vector.broadcast %cst_11 : f32 to vector<2x3x16x16xf32>
    %14 = arith.subf %13, %12 : vector<2x3x16x16xf32>
    %15 = vector.broadcast %10 : f32 to vector<2x3x16x16xf32>
    %16 = arith.mulf %15, %14 : vector<2x3x16x16xf32>
    %17 = arith.addf %6, %16 : vector<2x3x16x16xf32>
    %c0_12 = arith.constant 0 : index
    %c0_13 = arith.constant 0 : index
    %c0_14 = arith.constant 0 : index
    %c0_15 = arith.constant 0 : index
    %18 = vector.load %arg3[%c0_12, %c0_13, %c0_14, %c0_15] : memref<2x1x1x7xf32, #tpu.memory_space<vmem>>, vector<2x1x1x1xf32>
    %19 = vector.broadcast %18 : vector<2x1x1x1xf32> to vector<2x3x16x16xf32>
    %20 = arith.cmpf olt, %17, %19 : vector<2x3x16x16xf32>
    %cst_16 = arith.constant 1.000000e+00 : f32
    %21 = vector.broadcast %cst_16 : f32 to vector<2x3x16x16xf32>
    %22 = arith.subf %21, %17 : vector<2x3x16x16xf32>
    %23 = arith.select %20, %17, %22 : vector<2x3x16x16xi1>, vector<2x3x16x16xf32>
    %c8 = arith.constant 8 : index
    %24 = memref.load %arg1[%c8] : memref<15xi32, #tpu.memory_space<smem>>
    %c0_i32_17 = arith.constant 0 : i32
    %25 = arith.cmpi ne, %24, %c0_i32_17 : i32
    %26 = arith.extui %25 : i1 to i32
    %27 = arith.sitofp %26 : i32 to f32
    %c0_18 = arith.constant 0 : index
    %c0_19 = arith.constant 0 : index
    %c0_20 = arith.constant 0 : index
    %c1 = arith.constant 1 : index
    %28 = vector.load %arg3[%c0_18, %c0_19, %c0_20, %c1] : memref<2x1x1x7xf32, #tpu.memory_space<vmem>>, vector<2x1x1x1xf32>
    %29 = vector.broadcast %28 : vector<2x1x1x1xf32> to vector<2x3x16x16xf32>
    %30 = arith.mulf %23, %29 : vector<2x3x16x16xf32>
    %31 = math.floor %30 : vector<2x3x16x16xf32>
    %c0_21 = arith.constant 0 : index
    %c0_22 = arith.constant 0 : index
    %c0_23 = arith.constant 0 : index
    %c2 = arith.constant 2 : index
    %32 = vector.load %arg3[%c0_21, %c0_22, %c0_23, %c2] : memref<2x1x1x7xf32, #tpu.memory_space<vmem>>, vector<2x1x1x1xf32>
    %33 = vector.broadcast %32 : vector<2x1x1x1xf32> to vector<2x3x16x16xf32>
    %34 = arith.mulf %31, %33 : vector<2x3x16x16xf32>
    %35 = arith.subf %34, %23 : vector<2x3x16x16xf32>
    %36 = vector.broadcast %27 : f32 to vector<2x3x16x16xf32>
    %37 = arith.mulf %36, %35 : vector<2x3x16x16xf32>
    %38 = arith.addf %23, %37 : vector<2x3x16x16xf32>
    %39 = vector.extract_strided_slice %38 {offsets = [0, 0, 0, 0], sizes = [2, 1, 16, 16], strides = [1, 1, 1, 1]} : vector<2x3x16x16xf32> to vector<2x1x16x16xf32>
    %cst_24 = arith.constant 2.990000e-01 : f32
    %40 = vector.broadcast %cst_24 : f32 to vector<2x1x16x16xf32>
    %41 = arith.mulf %40, %39 : vector<2x1x16x16xf32>
    %42 = vector.extract_strided_slice %38 {offsets = [0, 1, 0, 0], sizes = [2, 1, 16, 16], strides = [1, 1, 1, 1]} : vector<2x3x16x16xf32> to vector<2x1x16x16xf32>
    %cst_25 = arith.constant 5.870000e-01 : f32
    %43 = vector.broadcast %cst_25 : f32 to vector<2x1x16x16xf32>
    %44 = arith.mulf %43, %42 : vector<2x1x16x16xf32>
    %45 = arith.addf %41, %44 : vector<2x1x16x16xf32>
    %46 = vector.extract_strided_slice %38 {offsets = [0, 2, 0, 0], sizes = [2, 1, 16, 16], strides = [1, 1, 1, 1]} : vector<2x3x16x16xf32> to vector<2x1x16x16xf32>
    %cst_26 = arith.constant 1.140000e-01 : f32
    %47 = vector.broadcast %cst_26 : f32 to vector<2x1x16x16xf32>
    %48 = arith.mulf %47, %46 : vector<2x1x16x16xf32>
    %49 = arith.addf %45, %48 : vector<2x1x16x16xf32>
    %cst_27 = arith.constant dense<0.000000e+00> : vector<2x1x16xf32>
    %50 = vector.multi_reduction <add>, %49, %cst_27 [3] : vector<2x1x16x16xf32> to vector<2x1x16xf32>
    %51 = vector.shape_cast %50 : vector<2x1x16xf32> to vector<2x1x16x1xf32>
    %cst_28 = arith.constant dense<0.000000e+00> : vector<2x1x1xf32>
    %52 = vector.multi_reduction <add>, %51, %cst_28 [2] : vector<2x1x16x1xf32> to vector<2x1x1xf32>
    %53 = vector.shape_cast %52 : vector<2x1x1xf32> to vector<2x1x1x1xf32>
    %cst_29 = arith.constant 3.906250e-03 : f32
    %54 = vector.broadcast %cst_29 : f32 to vector<2x1x1x1xf32>
    %55 = arith.mulf %53, %54 : vector<2x1x1x1xf32>
    %c0_30 = arith.constant 0 : index
    %c0_31 = arith.constant 0 : index
    %c0_32 = arith.constant 0 : index
    %c3 = arith.constant 3 : index
    %56 = vector.load %arg3[%c0_30, %c0_31, %c0_32, %c3] : memref<2x1x1x7xf32, #tpu.memory_space<vmem>>, vector<2x1x1x1xf32>
    %c0_33 = arith.constant 0 : index
    %c0_34 = arith.constant 0 : index
    %c0_35 = arith.constant 0 : index
    %c4 = arith.constant 4 : index
    %57 = vector.load %arg3[%c0_33, %c0_34, %c0_35, %c4] : memref<2x1x1x7xf32, #tpu.memory_space<vmem>>, vector<2x1x1x1xf32>
    %c0_36 = arith.constant 0 : index
    %c0_37 = arith.constant 0 : index
    %c0_38 = arith.constant 0 : index
    %c5 = arith.constant 5 : index
    %58 = vector.load %arg3[%c0_36, %c0_37, %c0_38, %c5] : memref<2x1x1x7xf32, #tpu.memory_space<vmem>>, vector<2x1x1x1xf32>
    %59 = vector.broadcast %55 : vector<2x1x1x1xf32> to vector<2x3x16x16xf32>
    %60 = arith.subf %38, %59 : vector<2x3x16x16xf32>
    %61 = vector.broadcast %56 : vector<2x1x1x1xf32> to vector<2x3x16x16xf32>
    %62 = arith.mulf %61, %60 : vector<2x3x16x16xf32>
    %63 = vector.broadcast %55 : vector<2x1x1x1xf32> to vector<2x3x16x16xf32>
    %64 = arith.addf %63, %62 : vector<2x3x16x16xf32>
    %65 = vector.broadcast %55 : vector<2x1x1x1xf32> to vector<2x1x16x16xf32>
    %66 = arith.subf %49, %65 : vector<2x1x16x16xf32>
    %67 = vector.broadcast %56 : vector<2x1x1x1xf32> to vector<2x1x16x16xf32>
    %68 = arith.mulf %67, %66 : vector<2x1x16x16xf32>
    %69 = vector.broadcast %55 : vector<2x1x1x1xf32> to vector<2x1x16x16xf32>
    %70 = arith.addf %69, %68 : vector<2x1x16x16xf32>
    %71 = vector.broadcast %70 : vector<2x1x16x16xf32> to vector<2x3x16x16xf32>
    %72 = arith.subf %64, %71 : vector<2x3x16x16xf32>
    %73 = vector.broadcast %57 : vector<2x1x1x1xf32> to vector<2x3x16x16xf32>
    %74 = arith.mulf %73, %72 : vector<2x3x16x16xf32>
    %75 = vector.broadcast %70 : vector<2x1x16x16xf32> to vector<2x3x16x16xf32>
    %76 = arith.addf %75, %74 : vector<2x3x16x16xf32>
    %77 = vector.broadcast %58 : vector<2x1x1x1xf32> to vector<2x3x16x16xf32>
    %78 = arith.mulf %76, %77 : vector<2x3x16x16xf32>
    %c0_39 = arith.constant 0 : index
    %c0_40 = arith.constant 0 : index
    %c0_41 = arith.constant 0 : index
    %c0_42 = arith.constant 0 : index
    %79 = vector.load %arg6[%c0_39, %c0_40, %c0_41, %c0_42] : memref<2x3x16x16xf32, #tpu.memory_space<vmem>>, vector<2x3x16x16xf32>
    tpu.vector_store %arg6[%c0_39, %c0_40, %c0_41, %c0_42], %78 {strides = array<i32>} : memref<2x3x16x16xf32, #tpu.memory_space<vmem>>, vector<2x3x16x16xf32>,
    %c12 = arith.constant 12 : index
    %80 = memref.load %arg1[%c12] : memref<15xi32, #tpu.memory_space<smem>>
    %c0_i32_43 = arith.constant 0 : i32
    %81 = arith.cmpi ne, %80, %c0_i32_43 : i32
    %82 = arith.extui %81 : i1 to i32
    %c0_i32_44 = arith.constant 0 : i32
    %83 = arith.cmpi ne, %82, %c0_i32_44 : i32
    scf.if %83 {
      %c0_61 = arith.constant 0 : index
      %c0_62 = arith.constant 0 : index
      %c0_63 = arith.constant 0 : index
      %c0_64 = arith.constant 0 : index
      %118 = vector.load %arg6[%c0_61, %c0_62, %c0_63, %c0_64] : memref<2x3x16x16xf32, #tpu.memory_space<vmem>>, vector<2x3x16x16xf32>
      %119 = vector.shape_cast %118 : vector<2x3x16x16xf32> to vector<96x16xf32>
      %120 = tpu.iota {dimensions = array<i32: 0>} : vector<16x16xi32>
      %121 = tpu.iota {dimensions = array<i32: 1>} : vector<16x16xi32>
      %122 = arith.subi %120, %121 : vector<16x16xi32>
      %c1_i32 = arith.constant 1 : i32
      %123 = vector.broadcast %c1_i32 : i32 to vector<16x16xi32>
      %124 = arith.cmpi sle, %122, %123 : vector<16x16xi32>
      %125 = arith.extui %124 : vector<16x16xi1> to vector<16x16xi32>
      %126 = arith.sitofp %125 : vector<16x16xi32> to vector<16x16xf32>
      %127 = arith.subi %121, %120 : vector<16x16xi32>
      %c1_i32_65 = arith.constant 1 : i32
      %128 = vector.broadcast %c1_i32_65 : i32 to vector<16x16xi32>
      %129 = arith.cmpi sle, %127, %128 : vector<16x16xi32>
      %130 = arith.extui %129 : vector<16x16xi1> to vector<16x16xi32>
      %131 = arith.sitofp %130 : vector<16x16xi32> to vector<16x16xf32>
      %132 = arith.mulf %126, %131 : vector<16x16xf32>
      %cst_66 = arith.constant dense<0.000000e+00> : vector<96x16xf32>
      %133 = tpu.matmul %119, %132, %cst_66 {dimension_numbers = #tpu.dot_dimension_numbers<[1], [0], [0], [1], [0, 0, 1, 1], [], []>} : vector<96x16xf32>, vector<16x16xf32>, vector<96x16xf32> -> vector<96x16xf32>
      %134 = tpu.iota {dimensions = array<i32: 0>} : vector<16x1xi32>
      %c1_i32_67 = arith.constant 1 : i32
      %135 = vector.broadcast %c1_i32_67 : i32 to vector<16x1xi32>
      %136 = arith.cmpi sge, %134, %135 : vector<16x1xi32>
      %137 = arith.extui %136 : vector<16x1xi1> to vector<16x1xi32>
      %138 = arith.sitofp %137 : vector<16x1xi32> to vector<16x1xf32>
      %139 = tpu.concatenate %138, %138, %138, %138, %138, %138 in 0 : vector<16x1xf32>, vector<16x1xf32>, vector<16x1xf32>, vector<16x1xf32>, vector<16x1xf32>, vector<16x1xf32> -> vector<96x1xf32>
      %c14_i32 = arith.constant 14 : i32
      %140 = vector.broadcast %c14_i32 : i32 to vector<16x1xi32>
      %141 = arith.cmpi sle, %134, %140 : vector<16x1xi32>
      %142 = arith.extui %141 : vector<16x1xi1> to vector<16x1xi32>
      %143 = arith.sitofp %142 : vector<16x1xi32> to vector<16x1xf32>
      %144 = tpu.concatenate %143, %143, %143, %143, %143, %143 in 0 : vector<16x1xf32>, vector<16x1xf32>, vector<16x1xf32>, vector<16x1xf32>, vector<16x1xf32>, vector<16x1xf32> -> vector<96x1xf32>
      %cst_68 = arith.constant 4.000000e+00 : f32
      %145 = vector.broadcast %cst_68 : f32 to vector<96x16xf32>
      %146 = arith.mulf %145, %119 : vector<96x16xf32>
      %147 = arith.addf %133, %146 : vector<96x16xf32>
      %c1_i32_69 = arith.constant 1 : i32
      %148 = tpu.dynamic_rotate %133 by %c1_i32_69 dim 0 : vector<96x16xf32>, i32 -> vector<96x16xf32>
      %149 = vector.broadcast %139 : vector<96x1xf32> to vector<96x16xf32>
      %150 = arith.mulf %149, %148 : vector<96x16xf32>
      %151 = arith.addf %147, %150 : vector<96x16xf32>
      %c95_i32 = arith.constant 95 : i32
      %152 = tpu.dynamic_rotate %133 by %c95_i32 dim 0 : vector<96x16xf32>, i32 -> vector<96x16xf32>
      %153 = vector.broadcast %144 : vector<96x1xf32> to vector<96x16xf32>
      %154 = arith.mulf %153, %152 : vector<96x16xf32>
      %155 = arith.addf %151, %154 : vector<96x16xf32>
      %cst_70 = arith.constant 0.0769230798 : f32
      %156 = vector.broadcast %cst_70 : f32 to vector<96x16xf32>
      %157 = arith.mulf %155, %156 : vector<96x16xf32>
      %158 = vector.shape_cast %157 : vector<96x16xf32> to vector<2x3x16x16xf32>
      %c0_71 = arith.constant 0 : index
      %c0_72 = arith.constant 0 : index
      %c0_73 = arith.constant 0 : index
      %c6_74 = arith.constant 6 : index
      %159 = vector.load %arg3[%c0_71, %c0_72, %c0_73, %c6_74] : memref<2x1x1x7xf32, #tpu.memory_space<vmem>>, vector<2x1x1x1xf32>
      %160 = arith.subf %118, %158 : vector<2x3x16x16xf32>
      %161 = vector.broadcast %159 : vector<2x1x1x1xf32> to vector<2x3x16x16xf32>
      %162 = arith.mulf %161, %160 : vector<2x3x16x16xf32>
      %163 = arith.addf %158, %162 : vector<2x3x16x16xf32>
      %c0_75 = arith.constant 0 : index
      %c0_76 = arith.constant 0 : index
      %c0_77 = arith.constant 0 : index
      %c0_78 = arith.constant 0 : index
      %164 = vector.load %arg6[%c0_75, %c0_76, %c0_77, %c0_78] : memref<2x3x16x16xf32, #tpu.memory_space<vmem>>, vector<2x3x16x16xf32>
      tpu.vector_store %arg6[%c0_75, %c0_76, %c0_77, %c0_78], %163 {strides = array<i32>} : memref<2x3x16x16xf32, #tpu.memory_space<vmem>>, vector<2x3x16x16xf32>,
    } else {
    }
    %c0_45 = arith.constant 0 : index
    %c0_46 = arith.constant 0 : index
    %c0_47 = arith.constant 0 : index
    %c0_48 = arith.constant 0 : index
    %84 = vector.load %arg6[%c0_45, %c0_46, %c0_47, %c0_48] : memref<2x3x16x16xf32, #tpu.memory_space<vmem>>, vector<2x3x16x16xf32>
    %cst_49 = arith.constant dense<0x7F800000> : vector<2x3x16xf32>
    %85 = vector.multi_reduction <minimumf>, %84, %cst_49 [3] : vector<2x3x16x16xf32> to vector<2x3x16xf32>
    %86 = vector.shape_cast %85 : vector<2x3x16xf32> to vector<2x3x16x1xf32>
    %cst_50 = arith.constant dense<0x7F800000> : vector<2x3x1xf32>
    %87 = vector.multi_reduction <minimumf>, %86, %cst_50 [2] : vector<2x3x16x1xf32> to vector<2x3x1xf32>
    %88 = vector.shape_cast %87 : vector<2x3x1xf32> to vector<2x3x1x1xf32>
    %cst_51 = arith.constant dense<0xFF800000> : vector<2x3x16xf32>
    %89 = vector.multi_reduction <maximumf>, %84, %cst_51 [3] : vector<2x3x16x16xf32> to vector<2x3x16xf32>
    %90 = vector.shape_cast %89 : vector<2x3x16xf32> to vector<2x3x16x1xf32>
    %cst_52 = arith.constant dense<0xFF800000> : vector<2x3x1xf32>
    %91 = vector.multi_reduction <maximumf>, %90, %cst_52 [2] : vector<2x3x16x1xf32> to vector<2x3x1xf32>
    %92 = vector.shape_cast %91 : vector<2x3x1xf32> to vector<2x3x1x1xf32>
    %c13 = arith.constant 13 : index
    %93 = memref.load %arg1[%c13] : memref<15xi32, #tpu.memory_space<smem>>
    %c0_i32_53 = arith.constant 0 : i32
    %94 = arith.cmpi ne, %93, %c0_i32_53 : i32
    %95 = arith.extui %94 : i1 to i32
    %96 = arith.sitofp %95 : i32 to f32
    %cst_54 = arith.constant 1.000000e+00 : f32
    %97 = arith.subf %cst_54, %96 : f32
    %98 = arith.subf %92, %88 : vector<2x3x1x1xf32>
    %cst_55 = arith.constant 9.99999974E-6 : f32
    %99 = vector.broadcast %cst_55 : f32 to vector<2x3x1x1xf32>
    %100 = arith.maximumf %98, %99 : vector<2x3x1x1xf32>
    %101 = vector.broadcast %96 : f32 to vector<2x3x1x1xf32>
    %102 = arith.divf %101, %100 : vector<2x3x1x1xf32>
    %103 = vector.broadcast %97 : f32 to vector<2x3x1x1xf32>
    %104 = arith.addf %103, %102 : vector<2x3x1x1xf32>
    %105 = vector.broadcast %96 : f32 to vector<2x3x1x1xf32>
    %106 = arith.mulf %105, %88 : vector<2x3x1x1xf32>
    %cst_56 = arith.constant 1.000000e+00 : f32
    %107 = vector.broadcast %cst_56 : f32 to vector<1x3x1x1xf32>
    %108 = arith.divf %107, %1 : vector<1x3x1x1xf32>
    %109 = vector.broadcast %106 : vector<2x3x1x1xf32> to vector<2x3x16x16xf32>
    %110 = arith.subf %84, %109 : vector<2x3x16x16xf32>
    %111 = vector.broadcast %104 : vector<2x3x1x1xf32> to vector<2x3x16x16xf32>
    %112 = arith.mulf %110, %111 : vector<2x3x16x16xf32>
    %113 = vector.broadcast %0 : vector<1x3x1x1xf32> to vector<2x3x16x16xf32>
    %114 = arith.subf %112, %113 : vector<2x3x16x16xf32>
    %115 = vector.broadcast %108 : vector<1x3x1x1xf32> to vector<2x3x16x16xf32>
    %116 = arith.mulf %114, %115 : vector<2x3x16x16xf32>
    %c0_57 = arith.constant 0 : index
    %c0_58 = arith.constant 0 : index
    %c0_59 = arith.constant 0 : index
    %c0_60 = arith.constant 0 : index
    %117 = vector.load %arg6[%c0_57, %c0_58, %c0_59, %c0_60] : memref<2x3x16x16xf32, #tpu.memory_space<vmem>>, vector<2x3x16x16xf32>
    tpu.vector_store %arg6[%c0_57, %c0_58, %c0_59, %c0_60], %116 {strides = array<i32>} : memref<2x3x16x16xf32, #tpu.memory_space<vmem>>, vector<2x3x16x16xf32>,
    return
  }
  func.func @transform_0(%arg0: i32, %arg1: memref<15xi32, #tpu.memory_space<smem>>) -> (i32, i32, i32, i32) {
    %c0_i32 = arith.constant 0 : i32
    %c0_i32_0 = arith.constant 0 : i32
    %c0_i32_1 = arith.constant 0 : i32
    %c0_i32_2 = arith.constant 0 : i32
    return %arg0, %c0_i32, %c0_i32_0, %c0_i32_1 : i32, i32, i32, i32
  }
  func.func @transform_1(%arg0: i32, %arg1: memref<15xi32, #tpu.memory_space<smem>>) -> (i32, i32, i32, i32) {
    %c0_i32 = arith.constant 0 : i32
    %c0_i32_0 = arith.constant 0 : i32
    %c0_i32_1 = arith.constant 0 : i32
    %c0_i32_2 = arith.constant 0 : i32
    return %arg0, %c0_i32, %c0_i32_0, %c0_i32_1 : i32, i32, i32, i32
  }
  func.func @transform_2(%arg0: i32, %arg1: memref<15xi32, #tpu.memory_space<smem>>) -> (i32, i32, i32, i32) {
    %c0_i32 = arith.constant 0 : i32
    %c0_i32_0 = arith.constant 0 : i32
    %c0_i32_1 = arith.constant 0 : i32
    %c0_i32_2 = arith.constant 0 : i32
    %c0_i32_3 = arith.constant 0 : i32
    return %c0_i32, %c0_i32_0, %c0_i32_1, %c0_i32_2 : i32, i32, i32, i32
  }
  func.func @transform_3(%arg0: i32, %arg1: memref<15xi32, #tpu.memory_space<smem>>) -> (i32, i32, i32, i32) {
    %c0_i32 = arith.constant 0 : i32
    %c0_i32_0 = arith.constant 0 : i32
    %c0_i32_1 = arith.constant 0 : i32
    %c0_i32_2 = arith.constant 0 : i32
    %c0_i32_3 = arith.constant 0 : i32
    return %c0_i32, %c0_i32_0, %c0_i32_1, %c0_i32_2 : i32, i32, i32, i32
  }
  func.func @transform_4(%arg0: i32, %arg1: memref<15xi32, #tpu.memory_space<smem>>) -> (i32, i32, i32, i32) {
    %c0_i32 = arith.constant 0 : i32
    %c0_i32_0 = arith.constant 0 : i32
    %c0_i32_1 = arith.constant 0 : i32
    %c0_i32_2 = arith.constant 0 : i32
    return %arg0, %c0_i32, %c0_i32_0, %c0_i32_1 : i32, i32, i32, i32
  }
}

</mosaic_0001>

<llo_original>
// kernel: tpu_custom_call.1
$region0: #{tpu_custom_call.1}
  #allocation0 [shape = 'u32[]', space=smem, size = 0x4, offset = 0x4, fixed_abs, tag = 'smem constant byte address 0x4 - core index']
  #allocation1 [shape = 'u32[144,128]{1,0:T(1,128)}', space=vmem, size = 0x12000, scoped, tag = 'internal scratch']
  #allocation2 [shape = 's32[1]{0}', space=sflag, size = 0x4, scoped, tag = 'scoped memory for tpu_custom_call.1']
  #allocation3 [shape = 'u8[512]{0}', space=smem, size = 0x200, scoped, tag = 'prefetched SMEM operand 0']
  %s0 = inlined_call_operand.vmem [shape: s32[15], index: 0, kind: input, shape index: {}]
  %s1 = inlined_call_operand.hbm [shape: f32[2,3,16,16], index: 1, kind: input, shape index: {}]
  %s2 = inlined_call_operand.vmem [shape: f32[2,1,1,7], index: 2, kind: input, shape index: {}]
  %s3 = inlined_call_operand.vmem [shape: f32[1,3,1,1], index: 3, kind: input, shape index: {}]
  %s4 = inlined_call_operand.vmem [shape: f32[1,3,1,1], index: 4, kind: input, shape index: {}]
  %s5 = inlined_call_operand.hbm [shape: f32[2,3,16,16], index: 5, kind: output, shape index: {}]
  %s6 = sld [smem:[#allocation0]]
  $region34: #{tpu_custom_call.1} parent=0
    _
  %s8 = ssub.s32 1, %s6
  %s9 = scalar_select 0, %s8, %s6
  %s10 = sshll.u32 %s0, 4
  %s11 = int_to_ptr.vmem [resolvable:$true] %s10
  %13 = dma.vmem_to_smem %s11, 16, [#allocation3], [#allocation2]
  %14 = dma.done [#allocation2], 16
  %15 = sfence
  $region1: #{tpu_custom_call.1} parent=0
    #allocation4 [shape = 'u8[49152]{0}', space=vmem, size = 0xc000, scoped, tag = 'input window, operand 1, single buffered']
    #allocation5 [shape = 's32[1]{0}', space=sflag, size = 0x4, scoped, tag = 'scoped memory for tpu_custom_call.1']
    #allocation6 [shape = 's32[1]{0}', space=sflag, size = 0x4, scoped, tag = 'scoped memory for tpu_custom_call.1']
    #allocation7 [shape = 'u8[49152]{0}', space=vmem, size = 0xc000, scoped, tag = 'output window, operand 0, single buffered']
    %16 = vsyncpa [#allocation5], 0
    %17 = vsyncpa [#allocation6], 0
    // Predicated region
    $region2: #{tpu_custom_call.1} parent=1 // pred_check
      _
    $region3: #{tpu_custom_call.1} parent=1 // pred_check_branch
      %19 = sbr.rel (0) target = $region5
    $region4: #{tpu_custom_call.1} parent=1 // pred_region
      %s21 = ssub.s32 1536, 1536
      %22 = vsyncadd [#allocation5], %s21
      %s23 = sshll.u32 [#allocation4], 4
      %s24 = int_to_ptr.vmem [resolvable:$true] %s23
      %29 = dma.hbm_to_vmem [thread:$0]  %s1, 1536, %s24, [#allocation5], 128, 128, 8
    $region5: #{tpu_custom_call.1} parent=1 // pred_fallthru
      _
    // Predicated region
    $region6: #{tpu_custom_call.1} parent=1 // pred_check
      _
    $region7: #{tpu_custom_call.1} parent=1 // pred_check_branch
      %31 = sbr.rel (0) target = $region9
    $region8: #{tpu_custom_call.1} parent=1 // pred_region
      _
    $region9: #{tpu_custom_call.1} parent=1 // pred_fallthru
      _
    // Predicated region
    $region10: #{tpu_custom_call.1} parent=1 // pred_check
      _
    $region11: #{tpu_custom_call.1} parent=1 // pred_check_branch
      %33 = sbr.rel (0) target = $region13
    $region12: #{tpu_custom_call.1} parent=1 // pred_region
      _
    $region13: #{tpu_custom_call.1} parent=1 // pred_fallthru
      _
    // Predicated region
    $region14: #{tpu_custom_call.1} parent=1 // pred_check
      _
    $region15: #{tpu_custom_call.1} parent=1 // pred_check_branch
      %35 = sbr.rel (0) target = $region17
    $region16: #{tpu_custom_call.1} parent=1 // pred_region
      _
    $region17: #{tpu_custom_call.1} parent=1 // pred_fallthru
      _
    // Predicated region
    $region18: #{tpu_custom_call.1} parent=1 // pred_check
      _
    $region19: #{tpu_custom_call.1} parent=1 // pred_check_branch
      %37 = sbr.rel (0) target = $region21
    $region20: #{tpu_custom_call.1} parent=1 // pred_region
      %38 = dma.done [#allocation5], 1536
    $region21: #{tpu_custom_call.1} parent=1 // pred_fallthru
      _
    %v39 = vld [vmem:[%s3] sm:$0x1]
    %v40 = vld [vmem:[%s3 + $0x1] sm:$0x1]
    %v41 = vld [vmem:[%s3 + $0x2] sm:$0x1]
    %v42 = vld [vmem:[%s4] sm:$0x1]
    %v43 = vld [vmem:[%s4 + $0x1] sm:$0x1]
    %v44 = vld [vmem:[%s4 + $0x2] sm:$0x1]
    %v45 = vld [vmem:[#allocation4] sm:$0xff]
    %v46 = vld [vmem:[#allocation4 + $0x8] sm:$0xff]
    %v47 = vld [vmem:[#allocation4 + $0x10] sm:$0xff]
    %v48 = vld [vmem:[#allocation4 + $0x18] sm:$0xff]
    %v49 = vld [vmem:[#allocation4 + $0x20] sm:$0xff]
    %v50 = vld [vmem:[#allocation4 + $0x28] sm:$0xff]
    %v51 = vld [vmem:[#allocation4 + $0x30] sm:$0xff]
    %v52 = vld [vmem:[#allocation4 + $0x38] sm:$0xff]
    %v53 = vld [vmem:[#allocation4 + $0x40] sm:$0xff]
    %v54 = vld [vmem:[#allocation4 + $0x48] sm:$0xff]
    %v55 = vld [vmem:[#allocation4 + $0x50] sm:$0xff]
    %v56 = vld [vmem:[#allocation4 + $0x58] sm:$0xff]
    %v60 = vlaneseq
    %v61 = vshrl.u32 %v60, 7
    %v62 = vsub.s32 0, %v61
    %v63 = vrot.slane %v42, %v62
    %v64 = vlaneseq
    %v65 = vshrl.u32 %v64, 7
    %v66 = vsub.s32 0, %v65
    %v67 = vrot.slane %v43, %v66
    %v68 = vlaneseq
    %v69 = vshrl.u32 %v68, 7
    %v70 = vsub.s32 0, %v69
    %v71 = vrot.slane %v44, %v70
    %72 = vset.pattern.permute.xlu0 0
    %73 = vperm.xlu0 %72, %v63
    %v74 = vpop.permute.xlu0 %73
    %76 = vset.pattern.permute.xlu0 0
    %77 = vperm.xlu0 %76, %v67
    %v78 = vpop.permute.xlu0 %77
    %80 = vset.pattern.permute.xlu0 0
    %81 = vperm.xlu0 %80, %v71
    %v82 = vpop.permute.xlu0 %81
    %v84 = vmul.f32 %v45, %v74
    %v85 = vmul.f32 %v46, %v74
    %v86 = vmul.f32 %v47, %v78
    %v87 = vmul.f32 %v48, %v78
    %v88 = vmul.f32 %v49, %v82
    %v89 = vmul.f32 %v50, %v82
    %v90 = vmul.f32 %v51, %v74
    %v91 = vmul.f32 %v52, %v74
    %v92 = vmul.f32 %v53, %v78
    %v93 = vmul.f32 %v54, %v78
    %v94 = vmul.f32 %v55, %v82
    %v95 = vmul.f32 %v56, %v82
    %v99 = vlaneseq
    %v100 = vshrl.u32 %v99, 7
    %v101 = vsub.s32 0, %v100
    %v102 = vrot.slane %v39, %v101
    %v103 = vlaneseq
    %v104 = vshrl.u32 %v103, 7
    %v105 = vsub.s32 0, %v104
    %v106 = vrot.slane %v40, %v105
    %v107 = vlaneseq
    %v108 = vshrl.u32 %v107, 7
    %v109 = vsub.s32 0, %v108
    %v110 = vrot.slane %v41, %v109
    %111 = vset.pattern.permute.xlu0 0
    %112 = vperm.xlu0 %111, %v102
    %v113 = vpop.permute.xlu0 %112
    %115 = vset.pattern.permute.xlu0 0
    %116 = vperm.xlu0 %115, %v106
    %v117 = vpop.permute.xlu0 %116
    %119 = vset.pattern.permute.xlu0 0
    %120 = vperm.xlu0 %119, %v110
    %v121 = vpop.permute.xlu0 %120
    %v123 = vadd.f32 %v84, %v113
    %v124 = vadd.f32 %v85, %v113
    %v125 = vadd.f32 %v86, %v117
    %v126 = vadd.f32 %v87, %v117
    %v127 = vadd.f32 %v88, %v121
    %v128 = vadd.f32 %v89, %v121
    %v129 = vadd.f32 %v90, %v113
    %v130 = vadd.f32 %v91, %v113
    %v131 = vadd.f32 %v92, %v117
    %v132 = vadd.f32 %v93, %v117
    %v133 = vadd.f32 %v94, %v121
    %v134 = vadd.f32 %v95, %v121
    %s135 = sld [smem:[#allocation3 + $0x6]]
    %p136 = scmp.ne.s32.totalorder %s135, 0
    %s137 = scalar_select %p136, 1, 0
    %s138 = scvt.s32.f32 %s137
    %v139 = vmul.f32 %v123, 2.0
    %v140 = vmul.f32 %v124, 2.0
    %v141 = vmul.f32 %v125, 2.0
    %v142 = vmul.f32 %v126, 2.0
    %v143 = vmul.f32 %v127, 2.0
    %v144 = vmul.f32 %v128, 2.0
    %v145 = vmul.f32 %v129, 2.0
    %v146 = vmul.f32 %v130, 2.0
    %v147 = vmul.f32 %v131, 2.0
    %v148 = vmul.f32 %v132, 2.0
    %v149 = vmul.f32 %v133, 2.0
    %v150 = vmul.f32 %v134, 2.0
    %v151 = vsub.f32 1.0, %v139
    %v152 = vsub.f32 1.0, %v140
    %v153 = vsub.f32 1.0, %v141
    %v154 = vsub.f32 1.0, %v142
    %v155 = vsub.f32 1.0, %v143
    %v156 = vsub.f32 1.0, %v144
    %v157 = vsub.f32 1.0, %v145
    %v158 = vsub.f32 1.0, %v146
    %v159 = vsub.f32 1.0, %v147
    %v160 = vsub.f32 1.0, %v148
    %v161 = vsub.f32 1.0, %v149
    %v162 = vsub.f32 1.0, %v150
    %v163 = vstv %s138
    %v164 = vmul.f32 %v163, %v151
    %v165 = vmul.f32 %v163, %v152
    %v166 = vmul.f32 %v163, %v153
    %v167 = vmul.f32 %v163, %v154
    %v168 = vmul.f32 %v163, %v155
    %v169 = vmul.f32 %v163, %v156
    %v170 = vmul.f32 %v163, %v157
    %v171 = vmul.f32 %v163, %v158
    %v172 = vmul.f32 %v163, %v159
    %v173 = vmul.f32 %v163, %v160
    %v174 = vmul.f32 %v163, %v161
    %v175 = vmul.f32 %v163, %v162
    %v176 = vadd.f32 %v123, %v164
    %v177 = vadd.f32 %v124, %v165
    %v178 = vadd.f32 %v125, %v166
    %v179 = vadd.f32 %v126, %v167
    %v180 = vadd.f32 %v127, %v168
    %v181 = vadd.f32 %v128, %v169
    %v182 = vadd.f32 %v129, %v170
    %v183 = vadd.f32 %v130, %v171
    %v184 = vadd.f32 %v131, %v172
    %v185 = vadd.f32 %v132, %v173
    %v186 = vadd.f32 %v133, %v174
    %v187 = vadd.f32 %v134, %v175
    %v188 = vld [vmem:[%s2] sm:$0x1]
    %v189 = vld [vmem:[%s2 + $0x1] sm:$0x1]
    %v192 = vlaneseq
    %v193 = vshrl.u32 %v192, 7
    %v194 = vsub.s32 0, %v193
    %v195 = vrot.slane %v188, %v194
    %v196 = vlaneseq
    %v197 = vshrl.u32 %v196, 7
    %v198 = vsub.s32 0, %v197
    %v199 = vrot.slane %v189, %v198
    %200 = vset.pattern.permute.xlu0 0
    %201 = vperm.xlu0 %200, %v195
    %v202 = vpop.permute.xlu0 %201
    %204 = vset.pattern.permute.xlu0 0
    %205 = vperm.xlu0 %204, %v199
    %v206 = vpop.permute.xlu0 %205
    %vm208 = vcmp.lt.f32.partialorder %v176, %v202
    %vm209 = vcmp.lt.f32.partialorder %v177, %v202
    %vm210 = vcmp.lt.f32.partialorder %v178, %v202
    %vm211 = vcmp.lt.f32.partialorder %v179, %v202
    %vm212 = vcmp.lt.f32.partialorder %v180, %v202
    %vm213 = vcmp.lt.f32.partialorder %v181, %v202
    %vm214 = vcmp.lt.f32.partialorder %v182, %v206
    %vm215 = vcmp.lt.f32.partialorder %v183, %v206
    %vm216 = vcmp.lt.f32.partialorder %v184, %v206
    %vm217 = vcmp.lt.f32.partialorder %v185, %v206
    %vm218 = vcmp.lt.f32.partialorder %v186, %v206
    %vm219 = vcmp.lt.f32.partialorder %v187, %v206
    %v220 = vsub.f32 1.0, %v176
    %v221 = vsub.f32 1.0, %v177
    %v222 = vsub.f32 1.0, %v178
    %v223 = vsub.f32 1.0, %v179
    %v224 = vsub.f32 1.0, %v180
    %v225 = vsub.f32 1.0, %v181
    %v226 = vsub.f32 1.0, %v182
    %v227 = vsub.f32 1.0, %v183
    %v228 = vsub.f32 1.0, %v184
    %v229 = vsub.f32 1.0, %v185
    %v230 = vsub.f32 1.0, %v186
    %v231 = vsub.f32 1.0, %v187
    %v232 = vsel %vm208, %v176, %v220
    %v233 = vsel %vm209, %v177, %v221
    %v234 = vsel %vm210, %v178, %v222
    %v235 = vsel %vm211, %v179, %v223
    %v236 = vsel %vm212, %v180, %v224
    %v237 = vsel %vm213, %v181, %v225
    %v238 = vsel %vm214, %v182, %v226
    %v239 = vsel %vm215, %v183, %v227
    %v240 = vsel %vm216, %v184, %v228
    %v241 = vsel %vm217, %v185, %v229
    %v242 = vsel %vm218, %v186, %v230
    %v243 = vsel %vm219, %v187, %v231
    %s244 = sld [smem:[#allocation3 + $0x8]]
    %p245 = scmp.ne.s32.totalorder %s244, 0
    %s246 = scalar_select %p245, 1, 0
    %s247 = scvt.s32.f32 %s246
    %248 = vset.pattern.permute.xlu0 1
    %249 = vperm.xlu0 %248, %v195
    %v250 = vpop.permute.xlu0 %249
    %252 = vset.pattern.permute.xlu0 1
    %253 = vperm.xlu0 %252, %v199
    %v254 = vpop.permute.xlu0 %253
    %v256 = vmul.f32 %v232, %v250
    %v257 = vmul.f32 %v233, %v250
    %v258 = vmul.f32 %v234, %v250
    %v259 = vmul.f32 %v235, %v250
    %v260 = vmul.f32 %v236, %v250
    %v261 = vmul.f32 %v237, %v250
    %v262 = vmul.f32 %v238, %v254
    %v263 = vmul.f32 %v239, %v254
    %v264 = vmul.f32 %v240, %v254
    %v265 = vmul.f32 %v241, %v254
    %v266 = vmul.f32 %v242, %v254
    %v267 = vmul.f32 %v243, %v254
    %v268 = vfloor.f32 %v256
    %v269 = vfloor.f32 %v257
    %v270 = vfloor.f32 %v258
    %v271 = vfloor.f32 %v259
    %v272 = vfloor.f32 %v260
    %v273 = vfloor.f32 %v261
    %v274 = vfloor.f32 %v262
    %v275 = vfloor.f32 %v263
    %v276 = vfloor.f32 %v264
    %v277 = vfloor.f32 %v265
    %v278 = vfloor.f32 %v266
    %v279 = vfloor.f32 %v267
    %280 = vset.pattern.permute.xlu0 2
    %281 = vperm.xlu0 %280, %v195
    %v282 = vpop.permute.xlu0 %281
    %284 = vset.pattern.permute.xlu0 2
    %285 = vperm.xlu0 %284, %v199
    %v286 = vpop.permute.xlu0 %285
    %v288 = vmul.f32 %v268, %v282
    %v289 = vmul.f32 %v269, %v282
    %v290 = vmul.f32 %v270, %v282
    %v291 = vmul.f32 %v271, %v282
    %v292 = vmul.f32 %v272, %v282
    %v293 = vmul.f32 %v273, %v282
    %v294 = vmul.f32 %v274, %v286
    %v295 = vmul.f32 %v275, %v286
    %v296 = vmul.f32 %v276, %v286
    %v297 = vmul.f32 %v277, %v286
    %v298 = vmul.f32 %v278, %v286
    %v299 = vmul.f32 %v279, %v286
    %v300 = vsub.f32 %v288, %v232
    %v301 = vsub.f32 %v289, %v233
    %v302 = vsub.f32 %v290, %v234
    %v303 = vsub.f32 %v291, %v235
    %v304 = vsub.f32 %v292, %v236
    %v305 = vsub.f32 %v293, %v237
    %v306 = vsub.f32 %v294, %v238
    %v307 = vsub.f32 %v295, %v239
    %v308 = vsub.f32 %v296, %v240
    %v309 = vsub.f32 %v297, %v241
    %v310 = vsub.f32 %v298, %v242
    %v311 = vsub.f32 %v299, %v243
    %v312 = vstv %s247
    %v313 = vmul.f32 %v312, %v300
    %v314 = vmul.f32 %v312, %v301
    %v315 = vmul.f32 %v312, %v302
    %v316 = vmul.f32 %v312, %v303
    %v317 = vmul.f32 %v312, %v304
    %v318 = vmul.f32 %v312, %v305
    %v319 = vmul.f32 %v312, %v306
    %v320 = vmul.f32 %v312, %v307
    %v321 = vmul.f32 %v312, %v308
    %v322 = vmul.f32 %v312, %v309
    %v323 = vmul.f32 %v312, %v310
    %v324 = vmul.f32 %v312, %v311
    %v325 = vadd.f32 %v232, %v313
    %v326 = vadd.f32 %v233, %v314
    %v327 = vadd.f32 %v234, %v315
    %v328 = vadd.f32 %v235, %v316
    %v329 = vadd.f32 %v236, %v317
    %v330 = vadd.f32 %v237, %v318
    %v331 = vadd.f32 %v238, %v319
    %v332 = vadd.f32 %v239, %v320
    %v333 = vadd.f32 %v240, %v321
    %v334 = vadd.f32 %v241, %v322
    %v335 = vadd.f32 %v242, %v323
    %v336 = vadd.f32 %v243, %v324
    %v337 = vmul.f32 %v325, 0.299
    %v338 = vmul.f32 %v326, 0.299
    %v339 = vmul.f32 %v331, 0.299
    %v340 = vmul.f32 %v332, 0.299
    %v341 = vmul.f32 %v327, 0.587
    %v342 = vmul.f32 %v328, 0.587
    %v343 = vmul.f32 %v333, 0.587
    %v344 = vmul.f32 %v334, 0.587
    %v345 = vadd.f32 %v337, %v341
    %v346 = vadd.f32 %v338, %v342
    %v347 = vadd.f32 %v339, %v343
    %v348 = vadd.f32 %v340, %v344
    %v349 = vmul.f32 %v329, 0.114
    %v350 = vmul.f32 %v330, 0.114
    %v351 = vmul.f32 %v335, 0.114
    %v352 = vmul.f32 %v336, 0.114
    %v353 = vadd.f32 %v345, %v349
    %v354 = vadd.f32 %v346, %v350
    %v355 = vadd.f32 %v347, %v351
    %v356 = vadd.f32 %v348, %v352
    %vm357 = vcmask 130048
    %v358 = vsel %vm357, %v353, 0.0
    %359 = vadd.xlane.f32.xlu0 %v358
    %v360 = vpop.xlane.xlu0 %359
    %v361 = vsel %vm357, %v354, 0.0
    %362 = vadd.xlane.f32.xlu0 %v361
    %v363 = vpop.xlane.xlu0 %362
    %v364 = vsel %vm357, %v355, 0.0
    %365 = vadd.xlane.f32.xlu0 %v364
    %v366 = vpop.xlane.xlu0 %365
    %v367 = vsel %vm357, %v356, 0.0
    %368 = vadd.xlane.f32.xlu0 %v367
    %v369 = vpop.xlane.xlu0 %368
    %v370 = vadd.f32 %v360, %v363
    %v371 = vrot.slane %v370, 4
    %v372 = vadd.f32 %v370, %v371
    %v373 = vrot.slane %v372, 2
    %v374 = vadd.f32 %v372, %v373
    %v375 = vrot.slane %v374, 1
    %v376 = vadd.f32 %v374, %v375
    %v377 = vadd.f32 %v366, %v369
    %v378 = vrot.slane %v377, 4
    %v379 = vadd.f32 %v377, %v378
    %v380 = vrot.slane %v379, 2
    %v381 = vadd.f32 %v379, %v380
    %v382 = vrot.slane %v381, 1
    %v383 = vadd.f32 %v381, %v382
    %v384 = vmul.f32 %v376, 0.00390625
    %v385 = vmul.f32 %v383, 0.00390625
    %v386 = vsub.f32 %v325, %v384
    %v387 = vsub.f32 %v326, %v384
    %v388 = vsub.f32 %v327, %v384
    %v389 = vsub.f32 %v328, %v384
    %v390 = vsub.f32 %v329, %v384
    %v391 = vsub.f32 %v330, %v384
    %v392 = vsub.f32 %v331, %v385
    %v393 = vsub.f32 %v332, %v385
    %v394 = vsub.f32 %v333, %v385
    %v395 = vsub.f32 %v334, %v385
    %v396 = vsub.f32 %v335, %v385
    %v397 = vsub.f32 %v336, %v385
    %398 = vset.pattern.permute.xlu0 3
    %399 = vperm.xlu0 %398, %v195
    %v400 = vpop.permute.xlu0 %399
    %402 = vset.pattern.permute.xlu0 3
    %403 = vperm.xlu0 %402, %v199
    %v404 = vpop.permute.xlu0 %403
    %v406 = vmul.f32 %v400, %v386
    %v407 = vmul.f32 %v400, %v387
    %v408 = vmul.f32 %v400, %v388
    %v409 = vmul.f32 %v400, %v389
    %v410 = vmul.f32 %v400, %v390
    %v411 = vmul.f32 %v400, %v391
    %v412 = vmul.f32 %v404, %v392
    %v413 = vmul.f32 %v404, %v393
    %v414 = vmul.f32 %v404, %v394
    %v415 = vmul.f32 %v404, %v395
    %v416 = vmul.f32 %v404, %v396
    %v417 = vmul.f32 %v404, %v397
    %v418 = vadd.f32 %v384, %v406
    %v419 = vadd.f32 %v384, %v407
    %v420 = vadd.f32 %v384, %v408
    %v421 = vadd.f32 %v384, %v409
    %v422 = vadd.f32 %v384, %v410
    %v423 = vadd.f32 %v384, %v411
    %v424 = vadd.f32 %v385, %v412
    %v425 = vadd.f32 %v385, %v413
    %v426 = vadd.f32 %v385, %v414
    %v427 = vadd.f32 %v385, %v415
    %v428 = vadd.f32 %v385, %v416
    %v429 = vadd.f32 %v385, %v417
    %v430 = vsub.f32 %v353, %v384
    %v431 = vsub.f32 %v354, %v384
    %v432 = vsub.f32 %v355, %v385
    %v433 = vsub.f32 %v356, %v385
    %v434 = vmul.f32 %v400, %v430
    %v435 = vmul.f32 %v400, %v431
    %v436 = vmul.f32 %v404, %v432
    %v437 = vmul.f32 %v404, %v433
    %v438 = vadd.f32 %v384, %v434
    %v439 = vadd.f32 %v384, %v435
    %v440 = vadd.f32 %v385, %v436
    %v441 = vadd.f32 %v385, %v437
    %v442 = vsub.f32 %v418, %v438
    %v443 = vsub.f32 %v419, %v439
    %v444 = vsub.f32 %v420, %v438
    %v445 = vsub.f32 %v421, %v439
    %v446 = vsub.f32 %v422, %v438
    %v447 = vsub.f32 %v423, %v439
    %v448 = vsub.f32 %v424, %v440
    %v449 = vsub.f32 %v425, %v441
    %v450 = vsub.f32 %v426, %v440
    %v451 = vsub.f32 %v427, %v441
    %v452 = vsub.f32 %v428, %v440
    %v453 = vsub.f32 %v429, %v441
    %454 = vset.pattern.permute.xlu0 4
    %455 = vperm.xlu0 %454, %v195
    %v456 = vpop.permute.xlu0 %455
    %458 = vset.pattern.permute.xlu0 4
    %459 = vperm.xlu0 %458, %v199
    %v460 = vpop.permute.xlu0 %459
    %v462 = vmul.f32 %v456, %v442
    %v463 = vmul.f32 %v456, %v443
    %v464 = vmul.f32 %v456, %v444
    %v465 = vmul.f32 %v456, %v445
    %v466 = vmul.f32 %v456, %v446
    %v467 = vmul.f32 %v456, %v447
    %v468 = vmul.f32 %v460, %v448
    %v469 = vmul.f32 %v460, %v449
    %v470 = vmul.f32 %v460, %v450
    %v471 = vmul.f32 %v460, %v451
    %v472 = vmul.f32 %v460, %v452
    %v473 = vmul.f32 %v460, %v453
    %v474 = vadd.f32 %v438, %v462
    %v475 = vadd.f32 %v439, %v463
    %v476 = vadd.f32 %v438, %v464
    %v477 = vadd.f32 %v439, %v465
    %v478 = vadd.f32 %v438, %v466
    %v479 = vadd.f32 %v439, %v467
    %v480 = vadd.f32 %v440, %v468
    %v481 = vadd.f32 %v441, %v469
    %v482 = vadd.f32 %v440, %v470
    %v483 = vadd.f32 %v441, %v471
    %v484 = vadd.f32 %v440, %v472
    %v485 = vadd.f32 %v441, %v473
    %486 = vset.pattern.permute.xlu0 5
    %487 = vperm.xlu0 %486, %v195
    %v488 = vpop.permute.xlu0 %487
    %490 = vset.pattern.permute.xlu0 5
    %491 = vperm.xlu0 %490, %v199
    %v492 = vpop.permute.xlu0 %491
    %v494 = vmul.f32 %v474, %v488
    %v495 = vmul.f32 %v475, %v488
    %v496 = vmul.f32 %v476, %v488
    %v497 = vmul.f32 %v477, %v488
    %v498 = vmul.f32 %v478, %v488
    %v499 = vmul.f32 %v479, %v488
    %v500 = vmul.f32 %v480, %v492
    %v501 = vmul.f32 %v481, %v492
    %v502 = vmul.f32 %v482, %v492
    %v503 = vmul.f32 %v483, %v492
    %v504 = vmul.f32 %v484, %v492
    %v505 = vmul.f32 %v485, %v492
    %506 = vst.msk [vmem:[#allocation7] sm:$0xff] %vm357, %v494
    %507 = vst.msk [vmem:[#allocation7 + $0x8] sm:$0xff] %vm357, %v495
    %508 = vst.msk [vmem:[#allocation7 + $0x10] sm:$0xff] %vm357, %v496
    %509 = vst.msk [vmem:[#allocation7 + $0x18] sm:$0xff] %vm357, %v497
    %510 = vst.msk [vmem:[#allocation7 + $0x20] sm:$0xff] %vm357, %v498
    %511 = vst.msk [vmem:[#allocation7 + $0x28] sm:$0xff] %vm357, %v499
    %512 = vst.msk [vmem:[#allocation7 + $0x30] sm:$0xff] %vm357, %v500
    %513 = vst.msk [vmem:[#allocation7 + $0x38] sm:$0xff] %vm357, %v501
    %514 = vst.msk [vmem:[#allocation7 + $0x40] sm:$0xff] %vm357, %v502
    %515 = vst.msk [vmem:[#allocation7 + $0x48] sm:$0xff] %vm357, %v503
    %516 = vst.msk [vmem:[#allocation7 + $0x50] sm:$0xff] %vm357, %v504
    %517 = vst.msk [vmem:[#allocation7 + $0x58] sm:$0xff] %vm357, %v505
    %s518 = sld [smem:[#allocation3 + $0xc]]
    %p519 = scmp.ne.s32.totalorder %s518, 0
    // Predicated region
    $region22: #{tpu_custom_call.1} parent=1 // pred_check
      %p520 = pneg %p519
    $region23: #{tpu_custom_call.1} parent=1 // pred_check_branch
      %522 = sbr.rel (%p520) target = $region25
    $region24: #{tpu_custom_call.1} parent=1 // pred_region
      %v523 = vld [vmem:[#allocation7] sm:$0xff]
      %v524 = vld [vmem:[#allocation7 + $0x8] sm:$0xff]
      %v525 = vld [vmem:[#allocation7 + $0x10] sm:$0xff]
      %v526 = vld [vmem:[#allocation7 + $0x18] sm:$0xff]
      %v527 = vld [vmem:[#allocation7 + $0x20] sm:$0xff]
      %v528 = vld [vmem:[#allocation7 + $0x28] sm:$0xff]
      %v529 = vld [vmem:[#allocation7 + $0x30] sm:$0xff]
      %v530 = vld [vmem:[#allocation7 + $0x38] sm:$0xff]
      %v531 = vld [vmem:[#allocation7 + $0x40] sm:$0xff]
      %v532 = vld [vmem:[#allocation7 + $0x48] sm:$0xff]
      %v533 = vld [vmem:[#allocation7 + $0x50] sm:$0xff]
      %v534 = vld [vmem:[#allocation7 + $0x58] sm:$0xff]
      %v535 = vlaneseq
      %v536 = vand.u32 %v535, 127
      %vm537 = vcmp.ge.s32.totalorder %v536, 1
      %v538 = vsel %vm537, 1, 0
      %v539 = vcvt.s32.f32 %v538
      %vm540 = vcmp.le.s32.totalorder %v536, 14
      %v541 = vsel %vm540, 1, 0
      %v542 = vcvt.s32.f32 %v541
      %vm543 = vcmask 1047680
      %544 = vrot.lane.b32.xlu0 %v523, 16
      %v545 = vpop.permute.xlu0 %544
      %v546 = vsel %vm543, %v545, %v523
      %547 = vrot.lane.b32.xlu0 %v524, 16
      %v548 = vpop.permute.xlu0 %547
      %v549 = vsel %vm543, %v548, %v524
      %550 = vrot.lane.b32.xlu0 %v525, 16
      %v551 = vpop.permute.xlu0 %550
      %v552 = vsel %vm543, %v551, %v525
      %553 = vrot.lane.b32.xlu0 %v526, 16
      %v554 = vpop.permute.xlu0 %553
      %v555 = vsel %vm543, %v554, %v526
      %556 = vrot.lane.b32.xlu0 %v527, 16
      %v557 = vpop.permute.xlu0 %556
      %v558 = vsel %vm543, %v557, %v527
      %559 = vrot.lane.b32.xlu0 %v528, 16
      %v560 = vpop.permute.xlu0 %559
      %v561 = vsel %vm543, %v560, %v528
      %562 = vrot.lane.b32.xlu0 %v529, 16
      %v563 = vpop.permute.xlu0 %562
      %v564 = vsel %vm543, %v563, %v529
      %565 = vrot.lane.b32.xlu0 %v530, 16
      %v566 = vpop.permute.xlu0 %565
      %v567 = vsel %vm543, %v566, %v530
      %568 = vrot.lane.b32.xlu0 %v531, 16
      %v569 = vpop.permute.xlu0 %568
      %v570 = vsel %vm543, %v569, %v531
      %571 = vrot.lane.b32.xlu0 %v532, 16
      %v572 = vpop.permute.xlu0 %571
      %v573 = vsel %vm543, %v572, %v532
      %574 = vrot.lane.b32.xlu0 %v533, 16
      %v575 = vpop.permute.xlu0 %574
      %v576 = vsel %vm543, %v575, %v533
      %577 = vrot.lane.b32.xlu0 %v534, 16
      %v578 = vpop.permute.xlu0 %577
      %v579 = vsel %vm543, %v578, %v534
      %580 = vrot.lane.b32.xlu0 %v546, 16
      %v581 = vpop.permute.xlu0 %580
      %582 = vrot.lane.b32.xlu0 %v549, 16
      %v583 = vpop.permute.xlu0 %582
      %584 = vrot.lane.b32.xlu0 %v552, 16
      %v585 = vpop.permute.xlu0 %584
      %586 = vrot.lane.b32.xlu0 %v555, 16
      %v587 = vpop.permute.xlu0 %586
      %588 = vrot.lane.b32.xlu0 %v558, 16
      %v589 = vpop.permute.xlu0 %588
      %590 = vrot.lane.b32.xlu0 %v561, 16
      %v591 = vpop.permute.xlu0 %590
      %592 = vrot.lane.b32.xlu0 %v564, 16
      %v593 = vpop.permute.xlu0 %592
      %594 = vrot.lane.b32.xlu0 %v567, 16
      %v595 = vpop.permute.xlu0 %594
      %596 = vrot.lane.b32.xlu0 %v570, 16
      %v597 = vpop.permute.xlu0 %596
      %598 = vrot.lane.b32.xlu0 %v573, 16
      %v599 = vpop.permute.xlu0 %598
      %600 = vrot.lane.b32.xlu0 %v576, 16
      %v601 = vpop.permute.xlu0 %600
      %602 = vrot.lane.b32.xlu0 %v579, 16
      %v603 = vpop.permute.xlu0 %602
      %v604 = vsel %vm543, %v581, %v523
      %v605 = vsel %vm543, %v583, %v524
      %v606 = vsel %vm543, %v585, %v525
      %v607 = vsel %vm543, %v587, %v526
      %v608 = vsel %vm543, %v589, %v527
      %v609 = vsel %vm543, %v591, %v528
      %v610 = vsel %vm543, %v593, %v529
      %v611 = vsel %vm543, %v595, %v530
      %v612 = vsel %vm543, %v597, %v531
      %v613 = vsel %vm543, %v599, %v532
      %v614 = vsel %vm543, %v601, %v533
      %v615 = vsel %vm543, %v603, %v534
      %628 = vrot.lane.b32.xlu0 %v604, 113
      %v629 = vpop.permute.xlu0 %628
      %630 = vrot.lane.b32.xlu0 %v605, 113
      %v631 = vpop.permute.xlu0 %630
      %632 = vrot.lane.b32.xlu0 %v606, 113
      %v633 = vpop.permute.xlu0 %632
      %634 = vrot.lane.b32.xlu0 %v607, 113
      %v635 = vpop.permute.xlu0 %634
      %636 = vrot.lane.b32.xlu0 %v608, 113
      %v637 = vpop.permute.xlu0 %636
      %638 = vrot.lane.b32.xlu0 %v609, 113
      %v639 = vpop.permute.xlu0 %638
      %640 = vrot.lane.b32.xlu0 %v610, 113
      %v641 = vpop.permute.xlu0 %640
      %642 = vrot.lane.b32.xlu0 %v611, 113
      %v643 = vpop.permute.xlu0 %642
      %644 = vrot.lane.b32.xlu0 %v612, 113
      %v645 = vpop.permute.xlu0 %644
      %646 = vrot.lane.b32.xlu0 %v613, 113
      %v647 = vpop.permute.xlu0 %646
      %648 = vrot.lane.b32.xlu0 %v614, 113
      %v649 = vpop.permute.xlu0 %648
      %650 = vrot.lane.b32.xlu0 %v615, 113
      %v651 = vpop.permute.xlu0 %650
      %v664 = vmul.f32 %v539, %v629
      %v665 = vmul.f32 %v539, %v631
      %v666 = vmul.f32 %v539, %v633
      %v667 = vmul.f32 %v539, %v635
      %v668 = vmul.f32 %v539, %v637
      %v669 = vmul.f32 %v539, %v639
      %v670 = vmul.f32 %v539, %v641
      %v671 = vmul.f32 %v539, %v643
      %v672 = vmul.f32 %v539, %v645
      %v673 = vmul.f32 %v539, %v647
      %v674 = vmul.f32 %v539, %v649
      %v675 = vmul.f32 %v539, %v651
      %v676 = vadd.f32 %v523, %v664
      %v677 = vadd.f32 %v524, %v665
      %v678 = vadd.f32 %v525, %v666
      %v679 = vadd.f32 %v526, %v667
      %v680 = vadd.f32 %v527, %v668
      %v681 = vadd.f32 %v528, %v669
      %v682 = vadd.f32 %v529, %v670
      %v683 = vadd.f32 %v530, %v671
      %v684 = vadd.f32 %v531, %v672
      %v685 = vadd.f32 %v532, %v673
      %v686 = vadd.f32 %v533, %v674
      %v687 = vadd.f32 %v534, %v675
      %688 = vrot.lane.b32.xlu0 %v604, 127
      %v689 = vpop.permute.xlu0 %688
      %690 = vrot.lane.b32.xlu0 %v605, 127
      %v691 = vpop.permute.xlu0 %690
      %692 = vrot.lane.b32.xlu0 %v606, 127
      %v693 = vpop.permute.xlu0 %692
      %694 = vrot.lane.b32.xlu0 %v607, 127
      %v695 = vpop.permute.xlu0 %694
      %696 = vrot.lane.b32.xlu0 %v608, 127
      %v697 = vpop.permute.xlu0 %696
      %698 = vrot.lane.b32.xlu0 %v609, 127
      %v699 = vpop.permute.xlu0 %698
      %700 = vrot.lane.b32.xlu0 %v610, 127
      %v701 = vpop.permute.xlu0 %700
      %702 = vrot.lane.b32.xlu0 %v611, 127
      %v703 = vpop.permute.xlu0 %702
      %704 = vrot.lane.b32.xlu0 %v612, 127
      %v705 = vpop.permute.xlu0 %704
      %706 = vrot.lane.b32.xlu0 %v613, 127
      %v707 = vpop.permute.xlu0 %706
      %708 = vrot.lane.b32.xlu0 %v614, 127
      %v709 = vpop.permute.xlu0 %708
      %710 = vrot.lane.b32.xlu0 %v615, 127
      %v711 = vpop.permute.xlu0 %710
      %v724 = vmul.f32 %v542, %v689
      %v725 = vmul.f32 %v542, %v691
      %v726 = vmul.f32 %v542, %v693
      %v727 = vmul.f32 %v542, %v695
      %v728 = vmul.f32 %v542, %v697
      %v729 = vmul.f32 %v542, %v699
      %v730 = vmul.f32 %v542, %v701
      %v731 = vmul.f32 %v542, %v703
      %v732 = vmul.f32 %v542, %v705
      %v733 = vmul.f32 %v542, %v707
      %v734 = vmul.f32 %v542, %v709
      %v735 = vmul.f32 %v542, %v711
      %v736 = vadd.f32 %v676, %v724
      %v737 = vadd.f32 %v677, %v725
      %v738 = vadd.f32 %v678, %v726
      %v739 = vadd.f32 %v679, %v727
      %v740 = vadd.f32 %v680, %v728
      %v741 = vadd.f32 %v681, %v729
      %v742 = vadd.f32 %v682, %v730
      %v743 = vadd.f32 %v683, %v731
      %v744 = vadd.f32 %v684, %v732
      %v745 = vadd.f32 %v685, %v733
      %v746 = vadd.f32 %v686, %v734
      %v747 = vadd.f32 %v687, %v735
      %v748 = vlaneseq
      %v749 = vshrl.u32 %v748, 7
      %v750 = vadd.s32 %v749, 8
      %vm751 = vcmp.ge.s32.totalorder %v749, 1
      %vm752 = vcmp.ge.s32.totalorder %v750, 1
      %v753 = vsel %vm751, 1, 0
      %v754 = vsel %vm752, 1, 0
      %v755 = vcvt.s32.f32 %v753
      %v756 = vcvt.s32.f32 %v754
      %vm757 = vcmp.le.s32.totalorder %v749, 14
      %vm758 = vcmp.le.s32.totalorder %v750, 14
      %v759 = vsel %vm757, 1, 0
      %v760 = vsel %vm758, 1, 0
      %v761 = vcvt.s32.f32 %v759
      %v762 = vcvt.s32.f32 %v760
      %v763 = vmul.f32 %v523, 4.0
      %v764 = vmul.f32 %v524, 4.0
      %v765 = vmul.f32 %v525, 4.0
      %v766 = vmul.f32 %v526, 4.0
      %v767 = vmul.f32 %v527, 4.0
      %v768 = vmul.f32 %v528, 4.0
      %v769 = vmul.f32 %v529, 4.0
      %v770 = vmul.f32 %v530, 4.0
      %v771 = vmul.f32 %v531, 4.0
      %v772 = vmul.f32 %v532, 4.0
      %v773 = vmul.f32 %v533, 4.0
      %v774 = vmul.f32 %v534, 4.0
      %v775 = vadd.f32 %v736, %v763
      %v776 = vadd.f32 %v737, %v764
      %v777 = vadd.f32 %v738, %v765
      %v778 = vadd.f32 %v739, %v766
      %v779 = vadd.f32 %v740, %v767
      %v780 = vadd.f32 %v741, %v768
      %v781 = vadd.f32 %v742, %v769
      %v782 = vadd.f32 %v743, %v770
      %v783 = vadd.f32 %v744, %v771
      %v784 = vadd.f32 %v745, %v772
      %v785 = vadd.f32 %v746, %v773
      %v786 = vadd.f32 %v747, %v774
      %v787 = vrot.slane %v736, 7
      %v788 = vrot.slane %v737, 7
      %v789 = vrot.slane %v738, 7
      %v790 = vrot.slane %v739, 7
      %v791 = vrot.slane %v740, 7
      %v792 = vrot.slane %v741, 7
      %v793 = vrot.slane %v742, 7
      %v794 = vrot.slane %v743, 7
      %v795 = vrot.slane %v744, 7
      %v796 = vrot.slane %v745, 7
      %v797 = vrot.slane %v746, 7
      %v798 = vrot.slane %v747, 7
      %vm799 = vcmp.lt.s32.totalorder %v749, 1
      %v800 = vsel %vm799, %v797, %v798
      %v801 = vsel %vm799, %v796, %v797
      %v802 = vsel %vm799, %v795, %v796
      %v803 = vsel %vm799, %v794, %v795
      %v804 = vsel %vm799, %v793, %v794
      %v805 = vsel %vm799, %v792, %v793
      %v806 = vsel %vm799, %v791, %v792
      %v807 = vsel %vm799, %v790, %v791
      %v808 = vsel %vm799, %v789, %v790
      %v809 = vsel %vm799, %v788, %v789
      %v810 = vsel %vm799, %v787, %v788
      %v811 = vsel %vm799, %v798, %v787
      %813 = vset.pattern.permute.xlu0 0
      %814 = vperm.xlu0 %813, %v755
      %v815 = vpop.permute.xlu0 %814
      %818 = vset.pattern.permute.xlu0 0
      %819 = vperm.xlu0 %818, %v756
      %v820 = vpop.permute.xlu0 %819
      %v822 = vmul.f32 %v815, %v811
      %v823 = vmul.f32 %v820, %v810
      %v824 = vmul.f32 %v815, %v809
      %v825 = vmul.f32 %v820, %v808
      %v826 = vmul.f32 %v815, %v807
      %v827 = vmul.f32 %v820, %v806
      %v828 = vmul.f32 %v815, %v805
      %v829 = vmul.f32 %v820, %v804
      %v830 = vmul.f32 %v815, %v803
      %v831 = vmul.f32 %v820, %v802
      %v832 = vmul.f32 %v815, %v801
      %v833 = vmul.f32 %v820, %v800
      %v834 = vadd.f32 %v775, %v822
      %v835 = vadd.f32 %v776, %v823
      %v836 = vadd.f32 %v777, %v824
      %v837 = vadd.f32 %v778, %v825
      %v838 = vadd.f32 %v779, %v826
      %v839 = vadd.f32 %v780, %v827
      %v840 = vadd.f32 %v781, %v828
      %v841 = vadd.f32 %v782, %v829
      %v842 = vadd.f32 %v783, %v830
      %v843 = vadd.f32 %v784, %v831
      %v844 = vadd.f32 %v785, %v832
      %v845 = vadd.f32 %v786, %v833
      %v846 = vrot.slane %v736, 1
      %v847 = vrot.slane %v737, 1
      %v848 = vrot.slane %v738, 1
      %v849 = vrot.slane %v739, 1
      %v850 = vrot.slane %v740, 1
      %v851 = vrot.slane %v741, 1
      %v852 = vrot.slane %v742, 1
      %v853 = vrot.slane %v743, 1
      %v854 = vrot.slane %v744, 1
      %v855 = vrot.slane %v745, 1
      %v856 = vrot.slane %v746, 1
      %v857 = vrot.slane %v747, 1
      %vm858 = vcmp.lt.s32.totalorder %v749, 7
      %v859 = vsel %vm858, %v856, %v857
      %v860 = vsel %vm858, %v855, %v856
      %v861 = vsel %vm858, %v854, %v855
      %v862 = vsel %vm858, %v853, %v854
      %v863 = vsel %vm858, %v852, %v853
      %v864 = vsel %vm858, %v851, %v852
      %v865 = vsel %vm858, %v850, %v851
      %v866 = vsel %vm858, %v849, %v850
      %v867 = vsel %vm858, %v848, %v849
      %v868 = vsel %vm858, %v847, %v848
      %v869 = vsel %vm858, %v846, %v847
      %v870 = vsel %vm858, %v857, %v846
      %872 = vset.pattern.permute.xlu0 0
      %873 = vperm.xlu0 %872, %v761
      %v874 = vpop.permute.xlu0 %873
      %877 = vset.pattern.permute.xlu0 0
      %878 = vperm.xlu0 %877, %v762
      %v879 = vpop.permute.xlu0 %878
      %v881 = vmul.f32 %v874, %v869
      %v882 = vmul.f32 %v879, %v868
      %v883 = vmul.f32 %v874, %v867
      %v884 = vmul.f32 %v879, %v866
      %v885 = vmul.f32 %v874, %v865
      %v886 = vmul.f32 %v879, %v864
      %v887 = vmul.f32 %v874, %v863
      %v888 = vmul.f32 %v879, %v862
      %v889 = vmul.f32 %v874, %v861
      %v890 = vmul.f32 %v879, %v860
      %v891 = vmul.f32 %v874, %v859
      %v892 = vmul.f32 %v879, %v870
      %v893 = vadd.f32 %v834, %v881
      %v894 = vadd.f32 %v835, %v882
      %v895 = vadd.f32 %v836, %v883
      %v896 = vadd.f32 %v837, %v884
      %v897 = vadd.f32 %v838, %v885
      %v898 = vadd.f32 %v839, %v886
      %v899 = vadd.f32 %v840, %v887
      %v900 = vadd.f32 %v841, %v888
      %v901 = vadd.f32 %v842, %v889
      %v902 = vadd.f32 %v843, %v890
      %v903 = vadd.f32 %v844, %v891
      %v904 = vadd.f32 %v845, %v892
      %v905 = vmul.f32 %v893, 0.07692308
      %v906 = vmul.f32 %v894, 0.07692308
      %v907 = vmul.f32 %v895, 0.07692308
      %v908 = vmul.f32 %v896, 0.07692308
      %v909 = vmul.f32 %v897, 0.07692308
      %v910 = vmul.f32 %v898, 0.07692308
      %v911 = vmul.f32 %v899, 0.07692308
      %v912 = vmul.f32 %v900, 0.07692308
      %v913 = vmul.f32 %v901, 0.07692308
      %v914 = vmul.f32 %v902, 0.07692308
      %v915 = vmul.f32 %v903, 0.07692308
      %v916 = vmul.f32 %v904, 0.07692308
      %v917 = vld [vmem:[%s2] sm:$0x1]
      %v918 = vld [vmem:[%s2 + $0x1] sm:$0x1]
      %v919 = vsub.f32 %v523, %v905
      %v920 = vsub.f32 %v524, %v906
      %v921 = vsub.f32 %v525, %v907
      %v922 = vsub.f32 %v526, %v908
      %v923 = vsub.f32 %v527, %v909
      %v924 = vsub.f32 %v528, %v910
      %v925 = vsub.f32 %v529, %v911
      %v926 = vsub.f32 %v530, %v912
      %v927 = vsub.f32 %v531, %v913
      %v928 = vsub.f32 %v532, %v914
      %v929 = vsub.f32 %v533, %v915
      %v930 = vsub.f32 %v534, %v916
      %v933 = vlaneseq
      %v934 = vshrl.u32 %v933, 7
      %v935 = vsub.s32 0, %v934
      %v936 = vrot.slane %v917, %v935
      %v937 = vlaneseq
      %v938 = vshrl.u32 %v937, 7
      %v939 = vsub.s32 0, %v938
      %v940 = vrot.slane %v918, %v939
      %941 = vset.pattern.permute.xlu0 6
      %942 = vperm.xlu0 %941, %v936
      %v943 = vpop.permute.xlu0 %942
      %945 = vset.pattern.permute.xlu0 6
      %946 = vperm.xlu0 %945, %v940
      %v947 = vpop.permute.xlu0 %946
      %v949 = vmul.f32 %v943, %v919
      %v950 = vmul.f32 %v943, %v920
      %v951 = vmul.f32 %v943, %v921
      %v952 = vmul.f32 %v943, %v922
      %v953 = vmul.f32 %v943, %v923
      %v954 = vmul.f32 %v943, %v924
      %v955 = vmul.f32 %v947, %v925
      %v956 = vmul.f32 %v947, %v926
      %v957 = vmul.f32 %v947, %v927
      %v958 = vmul.f32 %v947, %v928
      %v959 = vmul.f32 %v947, %v929
      %v960 = vmul.f32 %v947, %v930
      %v961 = vadd.f32 %v905, %v949
      %v962 = vadd.f32 %v906, %v950
      %v963 = vadd.f32 %v907, %v951
      %v964 = vadd.f32 %v908, %v952
      %v965 = vadd.f32 %v909, %v953
      %v966 = vadd.f32 %v910, %v954
      %v967 = vadd.f32 %v911, %v955
      %v968 = vadd.f32 %v912, %v956
      %v969 = vadd.f32 %v913, %v957
      %v970 = vadd.f32 %v914, %v958
      %v971 = vadd.f32 %v915, %v959
      %v972 = vadd.f32 %v916, %v960
      %973 = vst.msk [vmem:[#allocation7] sm:$0xff] %vm357, %v961
      %974 = vst.msk [vmem:[#allocation7 + $0x8] sm:$0xff] %vm357, %v962
      %975 = vst.msk [vmem:[#allocation7 + $0x10] sm:$0xff] %vm357, %v963
      %976 = vst.msk [vmem:[#allocation7 + $0x18] sm:$0xff] %vm357, %v964
      %977 = vst.msk [vmem:[#allocation7 + $0x20] sm:$0xff] %vm357, %v965
      %978 = vst.msk [vmem:[#allocation7 + $0x28] sm:$0xff] %vm357, %v966
      %979 = vst.msk [vmem:[#allocation7 + $0x30] sm:$0xff] %vm357, %v967
      %980 = vst.msk [vmem:[#allocation7 + $0x38] sm:$0xff] %vm357, %v968
      %981 = vst.msk [vmem:[#allocation7 + $0x40] sm:$0xff] %vm357, %v969
      %982 = vst.msk [vmem:[#allocation7 + $0x48] sm:$0xff] %vm357, %v970
      %983 = vst.msk [vmem:[#allocation7 + $0x50] sm:$0xff] %vm357, %v971
      %984 = vst.msk [vmem:[#allocation7 + $0x58] sm:$0xff] %vm357, %v972
    $region25: #{tpu_custom_call.1} parent=1 // pred_fallthru
      _
    %v985 = vld [vmem:[#allocation7] sm:$0xff]
    %v986 = vld [vmem:[#allocation7 + $0x8] sm:$0xff]
    %v987 = vld [vmem:[#allocation7 + $0x10] sm:$0xff]
    %v988 = vld [vmem:[#allocation7 + $0x18] sm:$0xff]
    %v989 = vld [vmem:[#allocation7 + $0x20] sm:$0xff]
    %v990 = vld [vmem:[#allocation7 + $0x28] sm:$0xff]
    %v991 = vld [vmem:[#allocation7 + $0x30] sm:$0xff]
    %v992 = vld [vmem:[#allocation7 + $0x38] sm:$0xff]
    %v993 = vld [vmem:[#allocation7 + $0x40] sm:$0xff]
    %v994 = vld [vmem:[#allocation7 + $0x48] sm:$0xff]
    %v995 = vld [vmem:[#allocation7 + $0x50] sm:$0xff]
    %v996 = vld [vmem:[#allocation7 + $0x58] sm:$0xff]
    %v997 = vsel %vm357, %v985, inf
    %998 = vmin.xlane.f32.xlu0 %v997
    %v999 = vpop.xlane.xlu0 %998
    %v1000 = vsel %vm357, %v986, inf
    %1001 = vmin.xlane.f32.xlu0 %v1000
    %v1002 = vpop.xlane.xlu0 %1001
    %v1003 = vsel %vm357, %v987, inf
    %1004 = vmin.xlane.f32.xlu0 %v1003
    %v1005 = vpop.xlane.xlu0 %1004
    %v1006 = vsel %vm357, %v988, inf
    %1007 = vmin.xlane.f32.xlu0 %v1006
    %v1008 = vpop.xlane.xlu0 %1007
    %v1009 = vsel %vm357, %v989, inf
    %1010 = vmin.xlane.f32.xlu0 %v1009
    %v1011 = vpop.xlane.xlu0 %1010
    %v1012 = vsel %vm357, %v990, inf
    %1013 = vmin.xlane.f32.xlu0 %v1012
    %v1014 = vpop.xlane.xlu0 %1013
    %v1015 = vsel %vm357, %v991, inf
    %1016 = vmin.xlane.f32.xlu0 %v1015
    %v1017 = vpop.xlane.xlu0 %1016
    %v1018 = vsel %vm357, %v992, inf
    %1019 = vmin.xlane.f32.xlu0 %v1018
    %v1020 = vpop.xlane.xlu0 %1019
    %v1021 = vsel %vm357, %v993, inf
    %1022 = vmin.xlane.f32.xlu0 %v1021
    %v1023 = vpop.xlane.xlu0 %1022
    %v1024 = vsel %vm357, %v994, inf
    %1025 = vmin.xlane.f32.xlu0 %v1024
    %v1026 = vpop.xlane.xlu0 %1025
    %v1027 = vsel %vm357, %v995, inf
    %1028 = vmin.xlane.f32.xlu0 %v1027
    %v1029 = vpop.xlane.xlu0 %1028
    %v1030 = vsel %vm357, %v996, inf
    %1031 = vmin.xlane.f32.xlu0 %v1030
    %v1032 = vpop.xlane.xlu0 %1031
    %v1033 = vmin.f32 %v999, %v1002
    %v1034 = vrot.slane %v1033, 4
    %v1035 = vmin.f32 %v1033, %v1034
    %v1036 = vrot.slane %v1035, 2
    %v1037 = vmin.f32 %v1035, %v1036
    %v1038 = vrot.slane %v1037, 1
    %v1039 = vmin.f32 %v1037, %v1038
    %v1040 = vmin.f32 %v1005, %v1008
    %v1041 = vrot.slane %v1040, 4
    %v1042 = vmin.f32 %v1040, %v1041
    %v1043 = vrot.slane %v1042, 2
    %v1044 = vmin.f32 %v1042, %v1043
    %v1045 = vrot.slane %v1044, 1
    %v1046 = vmin.f32 %v1044, %v1045
    %v1047 = vmin.f32 %v1011, %v1014
    %v1048 = vrot.slane %v1047, 4
    %v1049 = vmin.f32 %v1047, %v1048
    %v1050 = vrot.slane %v1049, 2
    %v1051 = vmin.f32 %v1049, %v1050
    %v1052 = vrot.slane %v1051, 1
    %v1053 = vmin.f32 %v1051, %v1052
    %v1054 = vmin.f32 %v1017, %v1020
    %v1055 = vrot.slane %v1054, 4
    %v1056 = vmin.f32 %v1054, %v1055
    %v1057 = vrot.slane %v1056, 2
    %v1058 = vmin.f32 %v1056, %v1057
    %v1059 = vrot.slane %v1058, 1
    %v1060 = vmin.f32 %v1058, %v1059
    %v1061 = vmin.f32 %v1023, %v1026
    %v1062 = vrot.slane %v1061, 4
    %v1063 = vmin.f32 %v1061, %v1062
    %v1064 = vrot.slane %v1063, 2
    %v1065 = vmin.f32 %v1063, %v1064
    %v1066 = vrot.slane %v1065, 1
    %v1067 = vmin.f32 %v1065, %v1066
    %v1068 = vmin.f32 %v1029, %v1032
    %v1069 = vrot.slane %v1068, 4
    %v1070 = vmin.f32 %v1068, %v1069
    %v1071 = vrot.slane %v1070, 2
    %v1072 = vmin.f32 %v1070, %v1071
    %v1073 = vrot.slane %v1072, 1
    %v1074 = vmin.f32 %v1072, %v1073
    %v1075 = vsel %vm357, %v985, -inf
    %1076 = vmax.xlane.f32.xlu0 %v1075
    %v1077 = vpop.xlane.xlu0 %1076
    %v1078 = vsel %vm357, %v986, -inf
    %1079 = vmax.xlane.f32.xlu0 %v1078
    %v1080 = vpop.xlane.xlu0 %1079
    %v1081 = vsel %vm357, %v987, -inf
    %1082 = vmax.xlane.f32.xlu0 %v1081
    %v1083 = vpop.xlane.xlu0 %1082
    %v1084 = vsel %vm357, %v988, -inf
    %1085 = vmax.xlane.f32.xlu0 %v1084
    %v1086 = vpop.xlane.xlu0 %1085
    %v1087 = vsel %vm357, %v989, -inf
    %1088 = vmax.xlane.f32.xlu0 %v1087
    %v1089 = vpop.xlane.xlu0 %1088
    %v1090 = vsel %vm357, %v990, -inf
    %1091 = vmax.xlane.f32.xlu0 %v1090
    %v1092 = vpop.xlane.xlu0 %1091
    %v1093 = vsel %vm357, %v991, -inf
    %1094 = vmax.xlane.f32.xlu0 %v1093
    %v1095 = vpop.xlane.xlu0 %1094
    %v1096 = vsel %vm357, %v992, -inf
    %1097 = vmax.xlane.f32.xlu0 %v1096
    %v1098 = vpop.xlane.xlu0 %1097
    %v1099 = vsel %vm357, %v993, -inf
    %1100 = vmax.xlane.f32.xlu0 %v1099
    %v1101 = vpop.xlane.xlu0 %1100
    %v1102 = vsel %vm357, %v994, -inf
    %1103 = vmax.xlane.f32.xlu0 %v1102
    %v1104 = vpop.xlane.xlu0 %1103
    %v1105 = vsel %vm357, %v995, -inf
    %1106 = vmax.xlane.f32.xlu0 %v1105
    %v1107 = vpop.xlane.xlu0 %1106
    %v1108 = vsel %vm357, %v996, -inf
    %1109 = vmax.xlane.f32.xlu0 %v1108
    %v1110 = vpop.xlane.xlu0 %1109
    %v1111 = vmax.f32 %v1077, %v1080
    %v1112 = vrot.slane %v1111, 4
    %v1113 = vmax.f32 %v1111, %v1112
    %v1114 = vrot.slane %v1113, 2
    %v1115 = vmax.f32 %v1113, %v1114
    %v1116 = vrot.slane %v1115, 1
    %v1117 = vmax.f32 %v1115, %v1116
    %v1118 = vmax.f32 %v1083, %v1086
    %v1119 = vrot.slane %v1118, 4
    %v1120 = vmax.f32 %v1118, %v1119
    %v1121 = vrot.slane %v1120, 2
    %v1122 = vmax.f32 %v1120, %v1121
    %v1123 = vrot.slane %v1122, 1
    %v1124 = vmax.f32 %v1122, %v1123
    %v1125 = vmax.f32 %v1089, %v1092
    %v1126 = vrot.slane %v1125, 4
    %v1127 = vmax.f32 %v1125, %v1126
    %v1128 = vrot.slane %v1127, 2
    %v1129 = vmax.f32 %v1127, %v1128
    %v1130 = vrot.slane %v1129, 1
    %v1131 = vmax.f32 %v1129, %v1130
    %v1132 = vmax.f32 %v1095, %v1098
    %v1133 = vrot.slane %v1132, 4
    %v1134 = vmax.f32 %v1132, %v1133
    %v1135 = vrot.slane %v1134, 2
    %v1136 = vmax.f32 %v1134, %v1135
    %v1137 = vrot.slane %v1136, 1
    %v1138 = vmax.f32 %v1136, %v1137
    %v1139 = vmax.f32 %v1101, %v1104
    %v1140 = vrot.slane %v1139, 4
    %v1141 = vmax.f32 %v1139, %v1140
    %v1142 = vrot.slane %v1141, 2
    %v1143 = vmax.f32 %v1141, %v1142
    %v1144 = vrot.slane %v1143, 1
    %v1145 = vmax.f32 %v1143, %v1144
    %v1146 = vmax.f32 %v1107, %v1110
    %v1147 = vrot.slane %v1146, 4
    %v1148 = vmax.f32 %v1146, %v1147
    %v1149 = vrot.slane %v1148, 2
    %v1150 = vmax.f32 %v1148, %v1149
    %v1151 = vrot.slane %v1150, 1
    %v1152 = vmax.f32 %v1150, %v1151
    %s1153 = sld [smem:[#allocation3 + $0xd]]
    %p1154 = scmp.ne.s32.totalorder %s1153, 0
    %s1155 = scalar_select %p1154, 1, 0
    %s1156 = scvt.s32.f32 %s1155
    %s1157 = ssub.f32 1.0, %s1156
    %v1158 = vsub.f32 %v1117, %v1039
    %v1159 = vsub.f32 %v1124, %v1046
    %v1160 = vsub.f32 %v1131, %v1053
    %v1161 = vsub.f32 %v1138, %v1060
    %v1162 = vsub.f32 %v1145, %v1067
    %v1163 = vsub.f32 %v1152, %v1074
    %v1164 = vmax.f32 %v1158, 1e-05
    %v1165 = vmax.f32 %v1159, 1e-05
    %v1166 = vmax.f32 %v1160, 1e-05
    %v1167 = vmax.f32 %v1161, 1e-05
    %v1168 = vmax.f32 %v1162, 1e-05
    %v1169 = vmax.f32 %v1163, 1e-05
    %v1170 = vstv %s1156
    %v1171 = vrcp.pop %v1164
    %v1172 = vmul.f32 %v1170, %v1171
    %v1173 = vrcp.pop %v1165
    %v1174 = vmul.f32 %v1170, %v1173
    %v1175 = vrcp.pop %v1166
    %v1176 = vmul.f32 %v1170, %v1175
    %v1177 = vrcp.pop %v1167
    %v1178 = vmul.f32 %v1170, %v1177
    %v1179 = vrcp.pop %v1168
    %v1180 = vmul.f32 %v1170, %v1179
    %v1181 = vrcp.pop %v1169
    %v1182 = vmul.f32 %v1170, %v1181
    %v1183 = vstv %s1157
    %v1184 = vadd.f32 %v1183, %v1172
    %v1185 = vadd.f32 %v1183, %v1174
    %v1186 = vadd.f32 %v1183, %v1176
    %v1187 = vadd.f32 %v1183, %v1178
    %v1188 = vadd.f32 %v1183, %v1180
    %v1189 = vadd.f32 %v1183, %v1182
    %v1190 = vmul.f32 %v1170, %v1039
    %v1191 = vmul.f32 %v1170, %v1046
    %v1192 = vmul.f32 %v1170, %v1053
    %v1193 = vmul.f32 %v1170, %v1060
    %v1194 = vmul.f32 %v1170, %v1067
    %v1195 = vmul.f32 %v1170, %v1074
    %v1196 = vrcp.pop %v42
    %v1197 = vmul.f32 1.0, %v1196
    %v1198 = vrcp.pop %v43
    %v1199 = vmul.f32 1.0, %v1198
    %v1200 = vrcp.pop %v44
    %v1201 = vmul.f32 1.0, %v1200
    %v1202 = vsub.f32 %v985, %v1190
    %v1203 = vsub.f32 %v986, %v1190
    %v1204 = vsub.f32 %v987, %v1191
    %v1205 = vsub.f32 %v988, %v1191
    %v1206 = vsub.f32 %v989, %v1192
    %v1207 = vsub.f32 %v990, %v1192
    %v1208 = vsub.f32 %v991, %v1193
    %v1209 = vsub.f32 %v992, %v1193
    %v1210 = vsub.f32 %v993, %v1194
    %v1211 = vsub.f32 %v994, %v1194
    %v1212 = vsub.f32 %v995, %v1195
    %v1213 = vsub.f32 %v996, %v1195
    %v1214 = vmul.f32 %v1202, %v1184
    %v1215 = vmul.f32 %v1203, %v1184
    %v1216 = vmul.f32 %v1204, %v1185
    %v1217 = vmul.f32 %v1205, %v1185
    %v1218 = vmul.f32 %v1206, %v1186
    %v1219 = vmul.f32 %v1207, %v1186
    %v1220 = vmul.f32 %v1208, %v1187
    %v1221 = vmul.f32 %v1209, %v1187
    %v1222 = vmul.f32 %v1210, %v1188
    %v1223 = vmul.f32 %v1211, %v1188
    %v1224 = vmul.f32 %v1212, %v1189
    %v1225 = vmul.f32 %v1213, %v1189
    %v1226 = vsub.f32 %v1214, %v113
    %v1227 = vsub.f32 %v1215, %v113
    %v1228 = vsub.f32 %v1216, %v117
    %v1229 = vsub.f32 %v1217, %v117
    %v1230 = vsub.f32 %v1218, %v121
    %v1231 = vsub.f32 %v1219, %v121
    %v1232 = vsub.f32 %v1220, %v113
    %v1233 = vsub.f32 %v1221, %v113
    %v1234 = vsub.f32 %v1222, %v117
    %v1235 = vsub.f32 %v1223, %v117
    %v1236 = vsub.f32 %v1224, %v121
    %v1237 = vsub.f32 %v1225, %v121
    %v1241 = vlaneseq
    %v1242 = vshrl.u32 %v1241, 7
    %v1243 = vsub.s32 0, %v1242
    %v1244 = vrot.slane %v1197, %v1243
    %v1245 = vlaneseq
    %v1246 = vshrl.u32 %v1245, 7
    %v1247 = vsub.s32 0, %v1246
    %v1248 = vrot.slane %v1199, %v1247
    %v1249 = vlaneseq
    %v1250 = vshrl.u32 %v1249, 7
    %v1251 = vsub.s32 0, %v1250
    %v1252 = vrot.slane %v1201, %v1251
    %1253 = vset.pattern.permute.xlu0 0
    %1254 = vperm.xlu0 %1253, %v1244
    %v1255 = vpop.permute.xlu0 %1254
    %1257 = vset.pattern.permute.xlu0 0
    %1258 = vperm.xlu0 %1257, %v1248
    %v1259 = vpop.permute.xlu0 %1258
    %1261 = vset.pattern.permute.xlu0 0
    %1262 = vperm.xlu0 %1261, %v1252
    %v1263 = vpop.permute.xlu0 %1262
    %v1265 = vmul.f32 %v1226, %v1255
    %v1266 = vmul.f32 %v1227, %v1255
    %v1267 = vmul.f32 %v1228, %v1259
    %v1268 = vmul.f32 %v1229, %v1259
    %v1269 = vmul.f32 %v1230, %v1263
    %v1270 = vmul.f32 %v1231, %v1263
    %v1271 = vmul.f32 %v1232, %v1255
    %v1272 = vmul.f32 %v1233, %v1255
    %v1273 = vmul.f32 %v1234, %v1259
    %v1274 = vmul.f32 %v1235, %v1259
    %v1275 = vmul.f32 %v1236, %v1263
    %v1276 = vmul.f32 %v1237, %v1263
    %1277 = vst.msk [vmem:[#allocation7] sm:$0xff] %vm357, %v1265
    %1278 = vst.msk [vmem:[#allocation7 + $0x8] sm:$0xff] %vm357, %v1266
    %1279 = vst.msk [vmem:[#allocation7 + $0x10] sm:$0xff] %vm357, %v1267
    %1280 = vst.msk [vmem:[#allocation7 + $0x18] sm:$0xff] %vm357, %v1268
    %1281 = vst.msk [vmem:[#allocation7 + $0x20] sm:$0xff] %vm357, %v1269
    %1282 = vst.msk [vmem:[#allocation7 + $0x28] sm:$0xff] %vm357, %v1270
    %1283 = vst.msk [vmem:[#allocation7 + $0x30] sm:$0xff] %vm357, %v1271
    %1284 = vst.msk [vmem:[#allocation7 + $0x38] sm:$0xff] %vm357, %v1272
    %1285 = vst.msk [vmem:[#allocation7 + $0x40] sm:$0xff] %vm357, %v1273
    %1286 = vst.msk [vmem:[#allocation7 + $0x48] sm:$0xff] %vm357, %v1274
    %1287 = vst.msk [vmem:[#allocation7 + $0x50] sm:$0xff] %vm357, %v1275
    %1288 = vst.msk [vmem:[#allocation7 + $0x58] sm:$0xff] %vm357, %v1276
    // Predicated region
    $region26: #{tpu_custom_call.1} parent=1 // pred_check
      _
    $region27: #{tpu_custom_call.1} parent=1 // pred_check_branch
      %1290 = sbr.rel (0) target = $region29
    $region28: #{tpu_custom_call.1} parent=1 // pred_region
      %s1292 = ssub.s32 1536, 1536
      %1293 = vsyncadd [#allocation6], %s1292
      %s1294 = sshll.u32 [#allocation7], 4
      %s1295 = int_to_ptr.vmem [resolvable:$true] %s1294
      %1300 = dma.vmem_to_hbm [thread:$0]  %s1295, 1536, %s5, [#allocation6], 128, 128, 8
    $region29: #{tpu_custom_call.1} parent=1 // pred_fallthru
      _
    // Predicated region
    $region30: #{tpu_custom_call.1} parent=1 // pred_check
      _
    $region31: #{tpu_custom_call.1} parent=1 // pred_check_branch
      %1302 = sbr.rel (0) target = $region33
    $region32: #{tpu_custom_call.1} parent=1 // pred_region
      %1303 = dma.done [#allocation6], 1536
    $region33: #{tpu_custom_call.1} parent=1 // pred_fallthru
      _
    %1304 = vsyncpa [#allocation5], 1
    %1305 = vsyncpa [#allocation6], 1

// kernel: tpu_custom_call.1
$region0: #{tpu_custom_call.1}
  #allocation0 [shape = 'u32[]', space=smem, size = 0x4, offset = 0x4, fixed_abs, tag = 'smem constant byte address 0x4 - core index']
  #allocation1 [shape = 'u32[144,128]{1,0:T(1,128)}', space=vmem, size = 0x12000, scoped, tag = 'internal scratch']
  #allocation2 [shape = 's32[1]{0}', space=sflag, size = 0x4, scoped, tag = 'scoped memory for tpu_custom_call.1']
  #allocation3 [shape = 'u8[512]{0}', space=smem, size = 0x200, scoped, tag = 'prefetched SMEM operand 0']
  %s0 = inlined_call_operand.vmem [shape: s32[15], index: 0, kind: input, shape index: {}]
  %s1 = inlined_call_operand.hbm [shape: f32[2,3,16,16], index: 1, kind: input, shape index: {}]
  %s2 = inlined_call_operand.vmem [shape: f32[2,1,1,7], index: 2, kind: input, shape index: {}]
  %s3 = inlined_call_operand.vmem [shape: f32[1,3,1,1], index: 3, kind: input, shape index: {}]
  %s4 = inlined_call_operand.vmem [shape: f32[1,3,1,1], index: 4, kind: input, shape index: {}]
  %s5 = inlined_call_operand.hbm [shape: f32[2,3,16,16], index: 5, kind: output, shape index: {}]
  %s6 = sld [smem:[#allocation0]]
  $region34: #{tpu_custom_call.1} parent=0
    _
  %s8 = ssub.s32 1, %s6
  %s9 = scalar_select 0, %s8, %s6
  %s10 = sshll.u32 %s0, 4
  %s11 = int_to_ptr.vmem [resolvable:$true] %s10
  %13 = dma.vmem_to_smem %s11, 16, [#allocation3], [#allocation2]
  %14 = dma.done [#allocation2], 16
  %15 = sfence
  $region1: #{tpu_custom_call.1} parent=0
    #allocation4 [shape = 'u8[49152]{0}', space=vmem, size = 0xc000, scoped, tag = 'input window, operand 1, single buffered']
    #allocation5 [shape = 's32[1]{0}', space=sflag, size = 0x4, scoped, tag = 'scoped memory for tpu_custom_call.1']
    #allocation6 [shape = 's32[1]{0}', space=sflag, size = 0x4, scoped, tag = 'scoped memory for tpu_custom_call.1']
    #allocation7 [shape = 'u8[49152]{0}', space=vmem, size = 0xc000, scoped, tag = 'output window, operand 0, single buffered']
    %16 = vsyncpa [#allocation5], 0
    %17 = vsyncpa [#allocation6], 0
    // Predicated region
    $region2: #{tpu_custom_call.1} parent=1 // pred_check
      _
    $region3: #{tpu_custom_call.1} parent=1 // pred_check_branch
      %19 = sbr.rel (0) target = $region5
    $region4: #{tpu_custom_call.1} parent=1 // pred_region
      %s21 = ssub.s32 1536, 1536
      %22 = vsyncadd [#allocation5], %s21
      %s23 = sshll.u32 [#allocation4], 4
      %s24 = int_to_ptr.vmem [resolvable:$true] %s23
      %29 = dma.hbm_to_vmem [thread:$0]  %s1, 1536, %s24, [#allocation5], 128, 128, 8
    $region5: #{tpu_custom_call.1} parent=1 // pred_fallthru
      _
    // Predicated region
    $region6: #{tpu_custom_call.1} parent=1 // pred_check
      _
    $region7: #{tpu_custom_call.1} parent=1 // pred_check_branch
      %31 = sbr.rel (0) target = $region9
    $region8: #{tpu_custom_call.1} parent=1 // pred_region
      _
    $region9: #{tpu_custom_call.1} parent=1 // pred_fallthru
      _
    // Predicated region
    $region10: #{tpu_custom_call.1} parent=1 // pred_check
      _
    $region11: #{tpu_custom_call.1} parent=1 // pred_check_branch
      %33 = sbr.rel (0) target = $region13
    $region12: #{tpu_custom_call.1} parent=1 // pred_region
      _
    $region13: #{tpu_custom_call.1} parent=1 // pred_fallthru
      _
    // Predicated region
    $region14: #{tpu_custom_call.1} parent=1 // pred_check
      _
    $region15: #{tpu_custom_call.1} parent=1 // pred_check_branch
      %35 = sbr.rel (0) target = $region17
    $region16: #{tpu_custom_call.1} parent=1 // pred_region
      _
    $region17: #{tpu_custom_call.1} parent=1 // pred_fallthru
      _
    // Predicated region
    $region18: #{tpu_custom_call.1} parent=1 // pred_check
      _
    $region19: #{tpu_custom_call.1} parent=1 // pred_check_branch
      %37 = sbr.rel (0) target = $region21
    $region20: #{tpu_custom_call.1} parent=1 // pred_region
      %38 = dma.done [#allocation5], 1536
    $region21: #{tpu_custom_call.1} parent=1 // pred_fallthru
      _
    %v39 = vld [vmem:[%s3] sm:$0x1]
    %v40 = vld [vmem:[%s3 + $0x1] sm:$0x1]
    %v41 = vld [vmem:[%s3 + $0x2] sm:$0x1]
    %v42 = vld [vmem:[%s4] sm:$0x1]
    %v43 = vld [vmem:[%s4 + $0x1] sm:$0x1]
    %v44 = vld [vmem:[%s4 + $0x2] sm:$0x1]
    %v45 = vld [vmem:[#allocation4] sm:$0xff]
    %v46 = vld [vmem:[#allocation4 + $0x8] sm:$0xff]
    %v47 = vld [vmem:[#allocation4 + $0x10] sm:$0xff]
    %v48 = vld [vmem:[#allocation4 + $0x18] sm:$0xff]
    %v49 = vld [vmem:[#allocation4 + $0x20] sm:$0xff]
    %v50 = vld [vmem:[#allocation4 + $0x28] sm:$0xff]
    %v51 = vld [vmem:[#allocation4 + $0x30] sm:$0xff]
    %v52 = vld [vmem:[#allocation4 + $0x38] sm:$0xff]
    %v53 = vld [vmem:[#allocation4 + $0x40] sm:$0xff]
    %v54 = vld [vmem:[#allocation4 + $0x48] sm:$0xff]
    %v55 = vld [vmem:[#allocation4 + $0x50] sm:$0xff]
    %v56 = vld [vmem:[#allocation4 + $0x58] sm:$0xff]
    %v60 = vlaneseq
    %v61 = vshrl.u32 %v60, 7
    %v62 = vsub.s32 0, %v61
    %v63 = vrot.slane %v42, %v62
    %v64 = vlaneseq
    %v65 = vshrl.u32 %v64, 7
    %v66 = vsub.s32 0, %v65
    %v67 = vrot.slane %v43, %v66
    %v68 = vlaneseq
    %v69 = vshrl.u32 %v68, 7
    %v70 = vsub.s32 0, %v69
    %v71 = vrot.slane %v44, %v70
    %72 = vset.pattern.permute.xlu0 0
    %73 = vperm.xlu0 %72, %v63
    %v74 = vpop.permute.xlu0 %73
    %76 = vset.pattern.permute.xlu0 0
    %77 = vperm.xlu0 %76, %v67
    %v78 = vpop.permute.xlu0 %77
    %80 = vset.pattern.permute.xlu0 0
    %81 = vperm.xlu0 %80, %v71
    %v82 = vpop.permute.xlu0 %81
    %v84 = vmul.f32 %v45, %v74
    %v85 = vmul.f32 %v46, %v74
    %v86 = vmul.f32 %v47, %v78
    %v87 = vmul.f32 %v48, %v78
    %v88 = vmul.f32 %v49, %v82
    %v89 = vmul.f32 %v50, %v82
    %v90 = vmul.f32 %v51, %v74
    %v91 = vmul.f32 %v52, %v74
    %v92 = vmul.f32 %v53, %v78
    %v93 = vmul.f32 %v54, %v78
    %v94 = vmul.f32 %v55, %v82
    %v95 = vmul.f32 %v56, %v82
    %v99 = vlaneseq
    %v100 = vshrl.u32 %v99, 7
    %v101 = vsub.s32 0, %v100
    %v102 = vrot.slane %v39, %v101
    %v103 = vlaneseq
    %v104 = vshrl.u32 %v103, 7
    %v105 = vsub.s32 0, %v104
    %v106 = vrot.slane %v40, %v105
    %v107 = vlaneseq
    %v108 = vshrl.u32 %v107, 7
    %v109 = vsub.s32 0, %v108
    %v110 = vrot.slane %v41, %v109
    %111 = vset.pattern.permute.xlu0 0
    %112 = vperm.xlu0 %111, %v102
    %v113 = vpop.permute.xlu0 %112
    %115 = vset.pattern.permute.xlu0 0
    %116 = vperm.xlu0 %115, %v106
    %v117 = vpop.permute.xlu0 %116
    %119 = vset.pattern.permute.xlu0 0
    %120 = vperm.xlu0 %119, %v110
    %v121 = vpop.permute.xlu0 %120
    %v123 = vadd.f32 %v84, %v113
    %v124 = vadd.f32 %v85, %v113
    %v125 = vadd.f32 %v86, %v117
    %v126 = vadd.f32 %v87, %v117
    %v127 = vadd.f32 %v88, %v121
    %v128 = vadd.f32 %v89, %v121
    %v129 = vadd.f32 %v90, %v113
    %v130 = vadd.f32 %v91, %v113
    %v131 = vadd.f32 %v92, %v117
    %v132 = vadd.f32 %v93, %v117
    %v133 = vadd.f32 %v94, %v121
    %v134 = vadd.f32 %v95, %v121
    %s135 = sld [smem:[#allocation3 + $0x6]]
    %p136 = scmp.ne.s32.totalorder %s135, 0
    %s137 = scalar_select %p136, 1, 0
    %s138 = scvt.s32.f32 %s137
    %v139 = vmul.f32 %v123, 2.0
    %v140 = vmul.f32 %v124, 2.0
    %v141 = vmul.f32 %v125, 2.0
    %v142 = vmul.f32 %v126, 2.0
    %v143 = vmul.f32 %v127, 2.0
    %v144 = vmul.f32 %v128, 2.0
    %v145 = vmul.f32 %v129, 2.0
    %v146 = vmul.f32 %v130, 2.0
    %v147 = vmul.f32 %v131, 2.0
    %v148 = vmul.f32 %v132, 2.0
    %v149 = vmul.f32 %v133, 2.0
    %v150 = vmul.f32 %v134, 2.0
    %v151 = vsub.f32 1.0, %v139
    %v152 = vsub.f32 1.0, %v140
    %v153 = vsub.f32 1.0, %v141
    %v154 = vsub.f32 1.0, %v142
    %v155 = vsub.f32 1.0, %v143
    %v156 = vsub.f32 1.0, %v144
    %v157 = vsub.f32 1.0, %v145
    %v158 = vsub.f32 1.0, %v146
    %v159 = vsub.f32 1.0, %v147
    %v160 = vsub.f32 1.0, %v148
    %v161 = vsub.f32 1.0, %v149
    %v162 = vsub.f32 1.0, %v150
    %v163 = vstv %s138
    %v164 = vmul.f32 %v163, %v151
    %v165 = vmul.f32 %v163, %v152
    %v166 = vmul.f32 %v163, %v153
    %v167 = vmul.f32 %v163, %v154
    %v168 = vmul.f32 %v163, %v155
    %v169 = vmul.f32 %v163, %v156
    %v170 = vmul.f32 %v163, %v157
    %v171 = vmul.f32 %v163, %v158
    %v172 = vmul.f32 %v163, %v159
    %v173 = vmul.f32 %v163, %v160
    %v174 = vmul.f32 %v163, %v161
    %v175 = vmul.f32 %v163, %v162
    %v176 = vadd.f32 %v123, %v164
    %v177 = vadd.f32 %v124, %v165
    %v178 = vadd.f32 %v125, %v166
    %v179 = vadd.f32 %v126, %v167
    %v180 = vadd.f32 %v127, %v168
    %v181 = vadd.f32 %v128, %v169
    %v182 = vadd.f32 %v129, %v170
    %v183 = vadd.f32 %v130, %v171
    %v184 = vadd.f32 %v131, %v172
    %v185 = vadd.f32 %v132, %v173
    %v186 = vadd.f32 %v133, %v174
    %v187 = vadd.f32 %v134, %v175
    %v188 = vld [vmem:[%s2] sm:$0x1]
    %v189 = vld [vmem:[%s2 + $0x1] sm:$0x1]
    %v192 = vlaneseq
    %v193 = vshrl.u32 %v192, 7
    %v194 = vsub.s32 0, %v193
    %v195 = vrot.slane %v188, %v194
    %v196 = vlaneseq
    %v197 = vshrl.u32 %v196, 7
    %v198 = vsub.s32 0, %v197
    %v199 = vrot.slane %v189, %v198
    %200 = vset.pattern.permute.xlu0 0
    %201 = vperm.xlu0 %200, %v195
    %v202 = vpop.permute.xlu0 %201
    %204 = vset.pattern.permute.xlu0 0
    %205 = vperm.xlu0 %204, %v199
    %v206 = vpop.permute.xlu0 %205
    %vm208 = vcmp.lt.f32.partialorder %v176, %v202
    %vm209 = vcmp.lt.f32.partialorder %v177, %v202
    %vm210 = vcmp.lt.f32.partialorder %v178, %v202
    %vm211 = vcmp.lt.f32.partialorder %v179, %v202
    %vm212 = vcmp.lt.f32.partialorder %v180, %v202
    %vm213 = vcmp.lt.f32.partialorder %v181, %v202
    %vm214 = vcmp.lt.f32.partialorder %v182, %v206
    %vm215 = vcmp.lt.f32.partialorder %v183, %v206
    %vm216 = vcmp.lt.f32.partialorder %v184, %v206
    %vm217 = vcmp.lt.f32.partialorder %v185, %v206
    %vm218 = vcmp.lt.f32.partialorder %v186, %v206
    %vm219 = vcmp.lt.f32.partialorder %v187, %v206
    %v220 = vsub.f32 1.0, %v176
    %v221 = vsub.f32 1.0, %v177
    %v222 = vsub.f32 1.0, %v178
    %v223 = vsub.f32 1.0, %v179
    %v224 = vsub.f32 1.0, %v180
    %v225 = vsub.f32 1.0, %v181
    %v226 = vsub.f32 1.0, %v182
    %v227 = vsub.f32 1.0, %v183
    %v228 = vsub.f32 1.0, %v184
    %v229 = vsub.f32 1.0, %v185
    %v230 = vsub.f32 1.0, %v186
    %v231 = vsub.f32 1.0, %v187
    %v232 = vsel %vm208, %v176, %v220
    %v233 = vsel %vm209, %v177, %v221
    %v234 = vsel %vm210, %v178, %v222
    %v235 = vsel %vm211, %v179, %v223
    %v236 = vsel %vm212, %v180, %v224
    %v237 = vsel %vm213, %v181, %v225
    %v238 = vsel %vm214, %v182, %v226
    %v239 = vsel %vm215, %v183, %v227
    %v240 = vsel %vm216, %v184, %v228
    %v241 = vsel %vm217, %v185, %v229
    %v242 = vsel %vm218, %v186, %v230
    %v243 = vsel %vm219, %v187, %v231
    %s244 = sld [smem:[#allocation3 + $0x8]]
    %p245 = scmp.ne.s32.totalorder %s244, 0
    %s246 = scalar_select %p245, 1, 0
    %s247 = scvt.s32.f32 %s246
    %248 = vset.pattern.permute.xlu0 1
    %249 = vperm.xlu0 %248, %v195
    %v250 = vpop.permute.xlu0 %249
    %252 = vset.pattern.permute.xlu0 1
    %253 = vperm.xlu0 %252, %v199
    %v254 = vpop.permute.xlu0 %253
    %v256 = vmul.f32 %v232, %v250
    %v257 = vmul.f32 %v233, %v250
    %v258 = vmul.f32 %v234, %v250
    %v259 = vmul.f32 %v235, %v250
    %v260 = vmul.f32 %v236, %v250
    %v261 = vmul.f32 %v237, %v250
    %v262 = vmul.f32 %v238, %v254
    %v263 = vmul.f32 %v239, %v254
    %v264 = vmul.f32 %v240, %v254
    %v265 = vmul.f32 %v241, %v254
    %v266 = vmul.f32 %v242, %v254
    %v267 = vmul.f32 %v243, %v254
    %v268 = vfloor.f32 %v256
    %v269 = vfloor.f32 %v257
    %v270 = vfloor.f32 %v258
    %v271 = vfloor.f32 %v259
    %v272 = vfloor.f32 %v260
    %v273 = vfloor.f32 %v261
    %v274 = vfloor.f32 %v262
    %v275 = vfloor.f32 %v263
    %v276 = vfloor.f32 %v264
    %v277 = vfloor.f32 %v265
    %v278 = vfloor.f32 %v266
    %v279 = vfloor.f32 %v267
    %280 = vset.pattern.permute.xlu0 2
    %281 = vperm.xlu0 %280, %v195
    %v282 = vpop.permute.xlu0 %281
    %284 = vset.pattern.permute.xlu0 2
    %285 = vperm.xlu0 %284, %v199
    %v286 = vpop.permute.xlu0 %285
    %v288 = vmul.f32 %v268, %v282
    %v289 = vmul.f32 %v269, %v282
    %v290 = vmul.f32 %v270, %v282
    %v291 = vmul.f32 %v271, %v282
    %v292 = vmul.f32 %v272, %v282
    %v293 = vmul.f32 %v273, %v282
    %v294 = vmul.f32 %v274, %v286
    %v295 = vmul.f32 %v275, %v286
    %v296 = vmul.f32 %v276, %v286
    %v297 = vmul.f32 %v277, %v286
    %v298 = vmul.f32 %v278, %v286
    %v299 = vmul.f32 %v279, %v286
    %v300 = vsub.f32 %v288, %v232
    %v301 = vsub.f32 %v289, %v233
    %v302 = vsub.f32 %v290, %v234
    %v303 = vsub.f32 %v291, %v235
    %v304 = vsub.f32 %v292, %v236
    %v305 = vsub.f32 %v293, %v237
    %v306 = vsub.f32 %v294, %v238
    %v307 = vsub.f32 %v295, %v239
    %v308 = vsub.f32 %v296, %v240
    %v309 = vsub.f32 %v297, %v241
    %v310 = vsub.f32 %v298, %v242
    %v311 = vsub.f32 %v299, %v243
    %v312 = vstv %s247
    %v313 = vmul.f32 %v312, %v300
    %v314 = vmul.f32 %v312, %v301
    %v315 = vmul.f32 %v312, %v302
    %v316 = vmul.f32 %v312, %v303
    %v317 = vmul.f32 %v312, %v304
    %v318 = vmul.f32 %v312, %v305
    %v319 = vmul.f32 %v312, %v306
    %v320 = vmul.f32 %v312, %v307
    %v321 = vmul.f32 %v312, %v308
    %v322 = vmul.f32 %v312, %v309
    %v323 = vmul.f32 %v312, %v310
    %v324 = vmul.f32 %v312, %v311
    %v325 = vadd.f32 %v232, %v313
    %v326 = vadd.f32 %v233, %v314
    %v327 = vadd.f32 %v234, %v315
    %v328 = vadd.f32 %v235, %v316
    %v329 = vadd.f32 %v236, %v317
    %v330 = vadd.f32 %v237, %v318
    %v331 = vadd.f32 %v238, %v319
    %v332 = vadd.f32 %v239, %v320
    %v333 = vadd.f32 %v240, %v321
    %v334 = vadd.f32 %v241, %v322
    %v335 = vadd.f32 %v242, %v323
    %v336 = vadd.f32 %v243, %v324
    %v337 = vmul.f32 %v325, 0.299
    %v338 = vmul.f32 %v326, 0.299
    %v339 = vmul.f32 %v331, 0.299
    %v340 = vmul.f32 %v332, 0.299
    %v341 = vmul.f32 %v327, 0.587
    %v342 = vmul.f32 %v328, 0.587
    %v343 = vmul.f32 %v333, 0.587
    %v344 = vmul.f32 %v334, 0.587
    %v345 = vadd.f32 %v337, %v341
    %v346 = vadd.f32 %v338, %v342
    %v347 = vadd.f32 %v339, %v343
    %v348 = vadd.f32 %v340, %v344
    %v349 = vmul.f32 %v329, 0.114
    %v350 = vmul.f32 %v330, 0.114
    %v351 = vmul.f32 %v335, 0.114
    %v352 = vmul.f32 %v336, 0.114
    %v353 = vadd.f32 %v345, %v349
    %v354 = vadd.f32 %v346, %v350
    %v355 = vadd.f32 %v347, %v351
    %v356 = vadd.f32 %v348, %v352
    %vm357 = vcmask 130048
    %v358 = vsel %vm357, %v353, 0.0
    %359 = vadd.xlane.f32.xlu0 %v358
    %v360 = vpop.xlane.xlu0 %359
    %v361 = vsel %vm357, %v354, 0.0
    %362 = vadd.xlane.f32.xlu0 %v361
    %v363 = vpop.xlane.xlu0 %362
    %v364 = vsel %vm357, %v355, 0.0
    %365 = vadd.xlane.f32.xlu0 %v364
    %v366 = vpop.xlane.xlu0 %365
    %v367 = vsel %vm357, %v356, 0.0
    %368 = vadd.xlane.f32.xlu0 %v367
    %v369 = vpop.xlane.xlu0 %368
    %v370 = vadd.f32 %v360, %v363
    %v371 = vrot.slane %v370, 4
    %v372 = vadd.f32 %v370, %v371
    %v373 = vrot.slane %v372, 2
    %v374 = vadd.f32 %v372, %v373
    %v375 = vrot.slane %v374, 1
    %v376 = vadd.f32 %v374, %v375
    %v377 = vadd.f32 %v366, %v369
    %v378 = vrot.slane %v377, 4
    %v379 = vadd.f32 %v377, %v378
    %v380 = vrot.slane %v379, 2
    %v381 = vadd.f32 %v379, %v380
    %v382 = vrot.slane %v381, 1
    %v383 = vadd.f32 %v381, %v382
    %v384 = vmul.f32 %v376, 0.00390625
    %v385 = vmul.f32 %v383, 0.00390625
    %v386 = vsub.f32 %v325, %v384
    %v387 = vsub.f32 %v326, %v384
    %v388 = vsub.f32 %v327, %v384
    %v389 = vsub.f32 %v328, %v384
    %v390 = vsub.f32 %v329, %v384
    %v391 = vsub.f32 %v330, %v384
    %v392 = vsub.f32 %v331, %v385
    %v393 = vsub.f32 %v332, %v385
    %v394 = vsub.f32 %v333, %v385
    %v395 = vsub.f32 %v334, %v385
    %v396 = vsub.f32 %v335, %v385
    %v397 = vsub.f32 %v336, %v385
    %398 = vset.pattern.permute.xlu0 3
    %399 = vperm.xlu0 %398, %v195
    %v400 = vpop.permute.xlu0 %399
    %402 = vset.pattern.permute.xlu0 3
    %403 = vperm.xlu0 %402, %v199
    %v404 = vpop.permute.xlu0 %403
    %v406 = vmul.f32 %v400, %v386
    %v407 = vmul.f32 %v400, %v387
    %v408 = vmul.f32 %v400, %v388
    %v409 = vmul.f32 %v400, %v389
    %v410 = vmul.f32 %v400, %v390
    %v411 = vmul.f32 %v400, %v391
    %v412 = vmul.f32 %v404, %v392
    %v413 = vmul.f32 %v404, %v393
    %v414 = vmul.f32 %v404, %v394
    %v415 = vmul.f32 %v404, %v395
    %v416 = vmul.f32 %v404, %v396
    %v417 = vmul.f32 %v404, %v397
    %v418 = vadd.f32 %v384, %v406
    %v419 = vadd.f32 %v384, %v407
    %v420 = vadd.f32 %v384, %v408
    %v421 = vadd.f32 %v384, %v409
    %v422 = vadd.f32 %v384, %v410
    %v423 = vadd.f32 %v384, %v411
    %v424 = vadd.f32 %v385, %v412
    %v425 = vadd.f32 %v385, %v413
    %v426 = vadd.f32 %v385, %v414
    %v427 = vadd.f32 %v385, %v415
    %v428 = vadd.f32 %v385, %v416
    %v429 = vadd.f32 %v385, %v417
    %v430 = vsub.f32 %v353, %v384
    %v431 = vsub.f32 %v354, %v384
    %v432 = vsub.f32 %v355, %v385
    %v433 = vsub.f32 %v356, %v385
    %v434 = vmul.f32 %v400, %v430
    %v435 = vmul.f32 %v400, %v431
    %v436 = vmul.f32 %v404, %v432
    %v437 = vmul.f32 %v404, %v433
    %v438 = vadd.f32 %v384, %v434
    %v439 = vadd.f32 %v384, %v435
    %v440 = vadd.f32 %v385, %v436
    %v441 = vadd.f32 %v385, %v437
    %v442 = vsub.f32 %v418, %v438
    %v443 = vsub.f32 %v419, %v439
    %v444 = vsub.f32 %v420, %v438
    %v445 = vsub.f32 %v421, %v439
    %v446 = vsub.f32 %v422, %v438
    %v447 = vsub.f32 %v423, %v439
    %v448 = vsub.f32 %v424, %v440
    %v449 = vsub.f32 %v425, %v441
    %v450 = vsub.f32 %v426, %v440
    %v451 = vsub.f32 %v427, %v441
    %v452 = vsub.f32 %v428, %v440
    %v453 = vsub.f32 %v429, %v441
    %454 = vset.pattern.permute.xlu0 4
    %455 = vperm.xlu0 %454, %v195
    %v456 = vpop.permute.xlu0 %455
    %458 = vset.pattern.permute.xlu0 4
    %459 = vperm.xlu0 %458, %v199
    %v460 = vpop.permute.xlu0 %459
    %v462 = vmul.f32 %v456, %v442
    %v463 = vmul.f32 %v456, %v443
    %v464 = vmul.f32 %v456, %v444
    %v465 = vmul.f32 %v456, %v445
    %v466 = vmul.f32 %v456, %v446
    %v467 = vmul.f32 %v456, %v447
    %v468 = vmul.f32 %v460, %v448
    %v469 = vmul.f32 %v460, %v449
    %v470 = vmul.f32 %v460, %v450
    %v471 = vmul.f32 %v460, %v451
    %v472 = vmul.f32 %v460, %v452
    %v473 = vmul.f32 %v460, %v453
    %v474 = vadd.f32 %v438, %v462
    %v475 = vadd.f32 %v439, %v463
    %v476 = vadd.f32 %v438, %v464
    %v477 = vadd.f32 %v439, %v465
    %v478 = vadd.f32 %v438, %v466
    %v479 = vadd.f32 %v439, %v467
    %v480 = vadd.f32 %v440, %v468
    %v481 = vadd.f32 %v441, %v469
    %v482 = vadd.f32 %v440, %v470
    %v483 = vadd.f32 %v441, %v471
    %v484 = vadd.f32 %v440, %v472
    %v485 = vadd.f32 %v441, %v473
    %486 = vset.pattern.permute.xlu0 5
    %487 = vperm.xlu0 %486, %v195
    %v488 = vpop.permute.xlu0 %487
    %490 = vset.pattern.permute.xlu0 5
    %491 = vperm.xlu0 %490, %v199
    %v492 = vpop.permute.xlu0 %491
    %v494 = vmul.f32 %v474, %v488
    %v495 = vmul.f32 %v475, %v488
    %v496 = vmul.f32 %v476, %v488
    %v497 = vmul.f32 %v477, %v488
    %v498 = vmul.f32 %v478, %v488
    %v499 = vmul.f32 %v479, %v488
    %v500 = vmul.f32 %v480, %v492
    %v501 = vmul.f32 %v481, %v492
    %v502 = vmul.f32 %v482, %v492
    %v503 = vmul.f32 %v483, %v492
    %v504 = vmul.f32 %v484, %v492
    %v505 = vmul.f32 %v485, %v492
    %506 = vst.msk [vmem:[#allocation7] sm:$0xff] %vm357, %v494
    %507 = vst.msk [vmem:[#allocation7 + $0x8] sm:$0xff] %vm357, %v495
    %508 = vst.msk [vmem:[#allocation7 + $0x10] sm:$0xff] %vm357, %v496
    %509 = vst.msk [vmem:[#allocation7 + $0x18] sm:$0xff] %vm357, %v497
    %510 = vst.msk [vmem:[#allocation7 + $0x20] sm:$0xff] %vm357, %v498
    %511 = vst.msk [vmem:[#allocation7 + $0x28] sm:$0xff] %vm357, %v499
    %512 = vst.msk [vmem:[#allocation7 + $0x30] sm:$0xff] %vm357, %v500
    %513 = vst.msk [vmem:[#allocation7 + $0x38] sm:$0xff] %vm357, %v501
    %514 = vst.msk [vmem:[#allocation7 + $0x40] sm:$0xff] %vm357, %v502
    %515 = vst.msk [vmem:[#allocation7 + $0x48] sm:$0xff] %vm357, %v503
    %516 = vst.msk [vmem:[#allocation7 + $0x50] sm:$0xff] %vm357, %v504
    %517 = vst.msk [vmem:[#allocation7 + $0x58] sm:$0xff] %vm357, %v505
    %s518 = sld [smem:[#allocation3 + $0xc]]
    %p519 = scmp.ne.s32.totalorder %s518, 0
    // Predicated region
    $region22: #{tpu_custom_call.1} parent=1 // pred_check
      %p520 = pneg %p519
    $region23: #{tpu_custom_call.1} parent=1 // pred_check_branch
      %522 = sbr.rel (%p520) target = $region25
    $region24: #{tpu_custom_call.1} parent=1 // pred_region
      %v523 = vld [vmem:[#allocation7] sm:$0xff]
      %v524 = vld [vmem:[#allocation7 + $0x8] sm:$0xff]
      %v525 = vld [vmem:[#allocation7 + $0x10] sm:$0xff]
      %v526 = vld [vmem:[#allocation7 + $0x18] sm:$0xff]
      %v527 = vld [vmem:[#allocation7 + $0x20] sm:$0xff]
      %v528 = vld [vmem:[#allocation7 + $0x28] sm:$0xff]
      %v529 = vld [vmem:[#allocation7 + $0x30] sm:$0xff]
      %v530 = vld [vmem:[#allocation7 + $0x38] sm:$0xff]
      %v531 = vld [vmem:[#allocation7 + $0x40] sm:$0xff]
      %v532 = vld [vmem:[#allocation7 + $0x48] sm:$0xff]
      %v533 = vld [vmem:[#allocation7 + $0x50] sm:$0xff]
      %v534 = vld [vmem:[#allocation7 + $0x58] sm:$0xff]
      %v535 = vlaneseq
      %v536 = vshrl.u32 %v535, 7
      %v537 = vadd.s32 %v536, 8
      %v538 = vlaneseq
      %v539 = vand.u32 %v538, 127
      %v540 = vsub.s32 %v536, %v539
      %v541 = vsub.s32 %v537, %v539
      %vm542 = vcmp.le.s32.totalorder %v540, 1
      %vm543 = vcmp.le.s32.totalorder %v541, 1
      %v544 = vsel %vm542, 1, 0
      %v545 = vsel %vm543, 1, 0
      %v546 = vcvt.s32.f32 %v544
      %v547 = vcvt.s32.f32 %v545
      %v548 = vsub.s32 %v539, %v536
      %v549 = vsub.s32 %v539, %v537
      %vm550 = vcmp.le.s32.totalorder %v548, 1
      %vm551 = vcmp.le.s32.totalorder %v549, 1
      %v552 = vsel %vm550, 1, 0
      %v553 = vsel %vm551, 1, 0
      %v554 = vcvt.s32.f32 %v552
      %v555 = vcvt.s32.f32 %v553
      %v556 = vmul.f32 %v546, %v554
      %v557 = vmul.f32 %v547, %v555
      %v559 = vsel %vm357, %v523, 0
      %v562 = vsel %vm357, %v524, 0
      %v565 = vsel %vm357, %v525, 0
      %v568 = vsel %vm357, %v526, 0
      %v571 = vsel %vm357, %v527, 0
      %v574 = vsel %vm357, %v528, 0
      %v577 = vsel %vm357, %v529, 0
      %v580 = vsel %vm357, %v530, 0
      %v583 = vsel %vm357, %v531, 0
      %v586 = vsel %vm357, %v532, 0
      %v589 = vsel %vm357, %v533, 0
      %v592 = vsel %vm357, %v534, 0
      %594 = vmatprep.subr.mxu0 0.0
      %595 = vmatpush1.msra.mxu0 0.0
      %596 = vmatprep.subr.mxu0 0.0
      %597 = vmatpush1.msra.mxu0 0.0
      %598 = vmatprep.subr.mxu0 0.0
      %599 = vmatpush1.msra.mxu0 0.0
      %600 = vmatprep.subr.mxu0 0.0
      %601 = vmatpush1.msra.mxu0 0.0
      %602 = vmatprep.subr.mxu0 0.0
      %603 = vmatpush1.msra.mxu0 0.0
      %604 = vmatprep.subr.mxu0 0.0
      %605 = vmatpush1.msra.mxu0 0.0
      %606 = vmatprep.subr.mxu0 0.0
      %607 = vmatpush1.msra.mxu0 0.0
      %608 = vmatprep.subr.mxu0 0.0
      %609 = vmatpush1.msra.mxu0 0.0
      %610 = vmatprep.subr.mxu0 0.0
      %611 = vmatpush1.msra.mxu0 0.0
      %612 = vmatprep.subr.mxu0 0.0
      %613 = vmatpush1.msra.mxu0 0.0
      %614 = vmatprep.subr.mxu0 0.0
      %615 = vmatpush1.msra.mxu0 0.0
      %616 = vmatprep.subr.mxu0 0.0
      %617 = vmatpush1.msra.mxu0 0.0
      %618 = vmatprep.subr.mxu0 0.0
      %619 = vmatpush1.msra.mxu0 0.0
      %620 = vmatprep.subr.mxu0 0.0
      %621 = vmatpush1.msra.mxu0 0.0
      %622 = vmatprep.subr.mxu0 0.0
      %623 = vmatpush1.msra.mxu0 %v557
      %624 = vmatprep.subr.mxu0 0.0
      %625 = vmatpush1.msra.mxu0 %v556
      %626 = vmatprep.subr.mxu0 0.0
      %627 = vmatpush2.msra.mxu0 0.0
      %628 = vmatprep.subr.mxu0 0.0
      %629 = vmatpush2.msra.mxu0 0.0
      %630 = vmatprep.subr.mxu0 0.0
      %631 = vmatpush2.msra.mxu0 0.0
      %632 = vmatprep.subr.mxu0 0.0
      %633 = vmatpush2.msra.mxu0 0.0
      %634 = vmatprep.subr.mxu0 0.0
      %635 = vmatpush2.msra.mxu0 0.0
      %636 = vmatprep.subr.mxu0 0.0
      %637 = vmatpush2.msra.mxu0 0.0
      %638 = vmatprep.subr.mxu0 0.0
      %639 = vmatpush2.msra.mxu0 0.0
      %640 = vmatprep.subr.mxu0 0.0
      %641 = vmatpush2.msra.mxu0 0.0
      %642 = vmatprep.subr.mxu0 0.0
      %643 = vmatpush2.msra.mxu0 0.0
      %644 = vmatprep.subr.mxu0 0.0
      %645 = vmatpush2.msra.mxu0 0.0
      %646 = vmatprep.subr.mxu0 0.0
      %647 = vmatpush2.msra.mxu0 0.0
      %648 = vmatprep.subr.mxu0 0.0
      %649 = vmatpush2.msra.mxu0 0.0
      %650 = vmatprep.subr.mxu0 0.0
      %651 = vmatpush2.msra.mxu0 0.0
      %652 = vmatprep.subr.mxu0 0.0
      %653 = vmatpush2.msra.mxu0 0.0
      %654 = vmatprep.subr.mxu0 0.0
      %655 = vmatpush2.msra.mxu0 0.0
      %656 = vmatprep.subr.mxu0 0.0
      %657 = vmatpush2.msra.mxu0 0.0
      %658 = vmatprep.mubr.f32.mxu0 0.0
      %659 = vmatmul.mubr.f32.gmra.mxu0 %v559
      %v660 = vpop.f32.mrf.mxu0
      %v661 = vadd.f32 0.0, %v660
      %v662 = vpop.f32.mrf.mxu0
      %663 = vmatprep.mubr.f32.mxu0 0.0
      %664 = vmatmul.mubr.f32.gmra.mxu0 %v562
      %v665 = vpop.f32.mrf.mxu0
      %v666 = vadd.f32 0.0, %v665
      %v667 = vpop.f32.mrf.mxu0
      %668 = vmatprep.mubr.f32.mxu0 0.0
      %669 = vmatmul.mubr.f32.gmra.mxu0 %v565
      %v670 = vpop.f32.mrf.mxu0
      %v671 = vadd.f32 0.0, %v670
      %v672 = vpop.f32.mrf.mxu0
      %673 = vmatprep.mubr.f32.mxu0 0.0
      %674 = vmatmul.mubr.f32.gmra.mxu0 %v568
      %v675 = vpop.f32.mrf.mxu0
      %v676 = vadd.f32 0.0, %v675
      %v677 = vpop.f32.mrf.mxu0
      %678 = vmatprep.mubr.f32.mxu0 0.0
      %679 = vmatmul.mubr.f32.gmra.mxu0 %v571
      %v680 = vpop.f32.mrf.mxu0
      %v681 = vadd.f32 0.0, %v680
      %v682 = vpop.f32.mrf.mxu0
      %683 = vmatprep.mubr.f32.mxu0 0.0
      %684 = vmatmul.mubr.f32.gmra.mxu0 %v574
      %v685 = vpop.f32.mrf.mxu0
      %v686 = vadd.f32 0.0, %v685
      %v687 = vpop.f32.mrf.mxu0
      %688 = vmatprep.mubr.f32.mxu0 0.0
      %689 = vmatmul.mubr.f32.gmra.mxu0 %v577
      %v690 = vpop.f32.mrf.mxu0
      %v691 = vadd.f32 0.0, %v690
      %v692 = vpop.f32.mrf.mxu0
      %693 = vmatprep.mubr.f32.mxu0 0.0
      %694 = vmatmul.mubr.f32.gmra.mxu0 %v580
      %v695 = vpop.f32.mrf.mxu0
      %v696 = vadd.f32 0.0, %v695
      %v697 = vpop.f32.mrf.mxu0
      %698 = vmatprep.mubr.f32.mxu0 0.0
      %699 = vmatmul.mubr.f32.gmra.mxu0 %v583
      %v700 = vpop.f32.mrf.mxu0
      %v701 = vadd.f32 0.0, %v700
      %v702 = vpop.f32.mrf.mxu0
      %703 = vmatprep.mubr.f32.mxu0 0.0
      %704 = vmatmul.mubr.f32.gmra.mxu0 %v586
      %v705 = vpop.f32.mrf.mxu0
      %v706 = vadd.f32 0.0, %v705
      %v707 = vpop.f32.mrf.mxu0
      %708 = vmatprep.mubr.f32.mxu0 0.0
      %709 = vmatmul.mubr.f32.gmra.mxu0 %v589
      %v710 = vpop.f32.mrf.mxu0
      %v711 = vadd.f32 0.0, %v710
      %v712 = vpop.f32.mrf.mxu0
      %713 = vmatprep.mubr.f32.mxu0 0.0
      %714 = vmatmul.mubr.f32.gmra.mxu0 %v592
      %v715 = vpop.f32.mrf.mxu0
      %v716 = vadd.f32 0.0, %v715
      %v717 = vpop.f32.mrf.mxu0
      %718 = vdwg.mxu0
      %vm719 = vcmp.ge.s32.totalorder %v536, 1
      %vm720 = vcmp.ge.s32.totalorder %v537, 1
      %v721 = vsel %vm719, 1, 0
      %v722 = vsel %vm720, 1, 0
      %v723 = vcvt.s32.f32 %v721
      %v724 = vcvt.s32.f32 %v722
      %vm725 = vcmp.le.s32.totalorder %v536, 14
      %vm726 = vcmp.le.s32.totalorder %v537, 14
      %v727 = vsel %vm725, 1, 0
      %v728 = vsel %vm726, 1, 0
      %v729 = vcvt.s32.f32 %v727
      %v730 = vcvt.s32.f32 %v728
      %v731 = vmul.f32 %v523, 4.0
      %v732 = vmul.f32 %v524, 4.0
      %v733 = vmul.f32 %v525, 4.0
      %v734 = vmul.f32 %v526, 4.0
      %v735 = vmul.f32 %v527, 4.0
      %v736 = vmul.f32 %v528, 4.0
      %v737 = vmul.f32 %v529, 4.0
      %v738 = vmul.f32 %v530, 4.0
      %v739 = vmul.f32 %v531, 4.0
      %v740 = vmul.f32 %v532, 4.0
      %v741 = vmul.f32 %v533, 4.0
      %v742 = vmul.f32 %v534, 4.0
      %v743 = vadd.f32 %v661, %v731
      %v744 = vadd.f32 %v666, %v732
      %v745 = vadd.f32 %v671, %v733
      %v746 = vadd.f32 %v676, %v734
      %v747 = vadd.f32 %v681, %v735
      %v748 = vadd.f32 %v686, %v736
      %v749 = vadd.f32 %v691, %v737
      %v750 = vadd.f32 %v696, %v738
      %v751 = vadd.f32 %v701, %v739
      %v752 = vadd.f32 %v706, %v740
      %v753 = vadd.f32 %v711, %v741
      %v754 = vadd.f32 %v716, %v742
      %v755 = vrot.slane %v661, 7
      %v756 = vrot.slane %v666, 7
      %v757 = vrot.slane %v671, 7
      %v758 = vrot.slane %v676, 7
      %v759 = vrot.slane %v681, 7
      %v760 = vrot.slane %v686, 7
      %v761 = vrot.slane %v691, 7
      %v762 = vrot.slane %v696, 7
      %v763 = vrot.slane %v701, 7
      %v764 = vrot.slane %v706, 7
      %v765 = vrot.slane %v711, 7
      %v766 = vrot.slane %v716, 7
      %vm767 = vcmp.lt.s32.totalorder %v536, 1
      %v768 = vsel %vm767, %v765, %v766
      %v769 = vsel %vm767, %v764, %v765
      %v770 = vsel %vm767, %v763, %v764
      %v771 = vsel %vm767, %v762, %v763
      %v772 = vsel %vm767, %v761, %v762
      %v773 = vsel %vm767, %v760, %v761
      %v774 = vsel %vm767, %v759, %v760
      %v775 = vsel %vm767, %v758, %v759
      %v776 = vsel %vm767, %v757, %v758
      %v777 = vsel %vm767, %v756, %v757
      %v778 = vsel %vm767, %v755, %v756
      %v779 = vsel %vm767, %v766, %v755
      %781 = vset.pattern.permute.xlu0 0
      %782 = vperm.xlu0 %781, %v723
      %v783 = vpop.permute.xlu0 %782
      %786 = vset.pattern.permute.xlu0 0
      %787 = vperm.xlu0 %786, %v724
      %v788 = vpop.permute.xlu0 %787
      %v790 = vmul.f32 %v783, %v779
      %v791 = vmul.f32 %v788, %v778
      %v792 = vmul.f32 %v783, %v777
      %v793 = vmul.f32 %v788, %v776
      %v794 = vmul.f32 %v783, %v775
      %v795 = vmul.f32 %v788, %v774
      %v796 = vmul.f32 %v783, %v773
      %v797 = vmul.f32 %v788, %v772
      %v798 = vmul.f32 %v783, %v771
      %v799 = vmul.f32 %v788, %v770
      %v800 = vmul.f32 %v783, %v769
      %v801 = vmul.f32 %v788, %v768
      %v802 = vadd.f32 %v743, %v790
      %v803 = vadd.f32 %v744, %v791
      %v804 = vadd.f32 %v745, %v792
      %v805 = vadd.f32 %v746, %v793
      %v806 = vadd.f32 %v747, %v794
      %v807 = vadd.f32 %v748, %v795
      %v808 = vadd.f32 %v749, %v796
      %v809 = vadd.f32 %v750, %v797
      %v810 = vadd.f32 %v751, %v798
      %v811 = vadd.f32 %v752, %v799
      %v812 = vadd.f32 %v753, %v800
      %v813 = vadd.f32 %v754, %v801
      %v814 = vrot.slane %v661, 1
      %v815 = vrot.slane %v666, 1
      %v816 = vrot.slane %v671, 1
      %v817 = vrot.slane %v676, 1
      %v818 = vrot.slane %v681, 1
      %v819 = vrot.slane %v686, 1
      %v820 = vrot.slane %v691, 1
      %v821 = vrot.slane %v696, 1
      %v822 = vrot.slane %v701, 1
      %v823 = vrot.slane %v706, 1
      %v824 = vrot.slane %v711, 1
      %v825 = vrot.slane %v716, 1
      %vm826 = vcmp.lt.s32.totalorder %v536, 7
      %v827 = vsel %vm826, %v824, %v825
      %v828 = vsel %vm826, %v823, %v824
      %v829 = vsel %vm826, %v822, %v823
      %v830 = vsel %vm826, %v821, %v822
      %v831 = vsel %vm826, %v820, %v821
      %v832 = vsel %vm826, %v819, %v820
      %v833 = vsel %vm826, %v818, %v819
      %v834 = vsel %vm826, %v817, %v818
      %v835 = vsel %vm826, %v816, %v817
      %v836 = vsel %vm826, %v815, %v816
      %v837 = vsel %vm826, %v814, %v815
      %v838 = vsel %vm826, %v825, %v814
      %840 = vset.pattern.permute.xlu0 0
      %841 = vperm.xlu0 %840, %v729
      %v842 = vpop.permute.xlu0 %841
      %845 = vset.pattern.permute.xlu0 0
      %846 = vperm.xlu0 %845, %v730
      %v847 = vpop.permute.xlu0 %846
      %v849 = vmul.f32 %v842, %v837
      %v850 = vmul.f32 %v847, %v836
      %v851 = vmul.f32 %v842, %v835
      %v852 = vmul.f32 %v847, %v834
      %v853 = vmul.f32 %v842, %v833
      %v854 = vmul.f32 %v847, %v832
      %v855 = vmul.f32 %v842, %v831
      %v856 = vmul.f32 %v847, %v830
      %v857 = vmul.f32 %v842, %v829
      %v858 = vmul.f32 %v847, %v828
      %v859 = vmul.f32 %v842, %v827
      %v860 = vmul.f32 %v847, %v838
      %v861 = vadd.f32 %v802, %v849
      %v862 = vadd.f32 %v803, %v850
      %v863 = vadd.f32 %v804, %v851
      %v864 = vadd.f32 %v805, %v852
      %v865 = vadd.f32 %v806, %v853
      %v866 = vadd.f32 %v807, %v854
      %v867 = vadd.f32 %v808, %v855
      %v868 = vadd.f32 %v809, %v856
      %v869 = vadd.f32 %v810, %v857
      %v870 = vadd.f32 %v811, %v858
      %v871 = vadd.f32 %v812, %v859
      %v872 = vadd.f32 %v813, %v860
      %v873 = vmul.f32 %v861, 0.07692308
      %v874 = vmul.f32 %v862, 0.07692308
      %v875 = vmul.f32 %v863, 0.07692308
      %v876 = vmul.f32 %v864, 0.07692308
      %v877 = vmul.f32 %v865, 0.07692308
      %v878 = vmul.f32 %v866, 0.07692308
      %v879 = vmul.f32 %v867, 0.07692308
      %v880 = vmul.f32 %v868, 0.07692308
      %v881 = vmul.f32 %v869, 0.07692308
      %v882 = vmul.f32 %v870, 0.07692308
      %v883 = vmul.f32 %v871, 0.07692308
      %v884 = vmul.f32 %v872, 0.07692308
      %v885 = vld [vmem:[%s2] sm:$0x1]
      %v886 = vld [vmem:[%s2 + $0x1] sm:$0x1]
      %v887 = vsub.f32 %v523, %v873
      %v888 = vsub.f32 %v524, %v874
      %v889 = vsub.f32 %v525, %v875
      %v890 = vsub.f32 %v526, %v876
      %v891 = vsub.f32 %v527, %v877
      %v892 = vsub.f32 %v528, %v878
      %v893 = vsub.f32 %v529, %v879
      %v894 = vsub.f32 %v530, %v880
      %v895 = vsub.f32 %v531, %v881
      %v896 = vsub.f32 %v532, %v882
      %v897 = vsub.f32 %v533, %v883
      %v898 = vsub.f32 %v534, %v884
      %v901 = vlaneseq
      %v902 = vshrl.u32 %v901, 7
      %v903 = vsub.s32 0, %v902
      %v904 = vrot.slane %v885, %v903
      %v905 = vlaneseq
      %v906 = vshrl.u32 %v905, 7
      %v907 = vsub.s32 0, %v906
      %v908 = vrot.slane %v886, %v907
      %909 = vset.pattern.permute.xlu0 6
      %910 = vperm.xlu0 %909, %v904
      %v911 = vpop.permute.xlu0 %910
      %913 = vset.pattern.permute.xlu0 6
      %914 = vperm.xlu0 %913, %v908
      %v915 = vpop.permute.xlu0 %914
      %v917 = vmul.f32 %v911, %v887
      %v918 = vmul.f32 %v911, %v888
      %v919 = vmul.f32 %v911, %v889
      %v920 = vmul.f32 %v911, %v890
      %v921 = vmul.f32 %v911, %v891
      %v922 = vmul.f32 %v911, %v892
      %v923 = vmul.f32 %v915, %v893
      %v924 = vmul.f32 %v915, %v894
      %v925 = vmul.f32 %v915, %v895
      %v926 = vmul.f32 %v915, %v896
      %v927 = vmul.f32 %v915, %v897
      %v928 = vmul.f32 %v915, %v898
      %v929 = vadd.f32 %v873, %v917
      %v930 = vadd.f32 %v874, %v918
      %v931 = vadd.f32 %v875, %v919
      %v932 = vadd.f32 %v876, %v920
      %v933 = vadd.f32 %v877, %v921
      %v934 = vadd.f32 %v878, %v922
      %v935 = vadd.f32 %v879, %v923
      %v936 = vadd.f32 %v880, %v924
      %v937 = vadd.f32 %v881, %v925
      %v938 = vadd.f32 %v882, %v926
      %v939 = vadd.f32 %v883, %v927
      %v940 = vadd.f32 %v884, %v928
      %941 = vst.msk [vmem:[#allocation7] sm:$0xff] %vm357, %v929
      %942 = vst.msk [vmem:[#allocation7 + $0x8] sm:$0xff] %vm357, %v930
      %943 = vst.msk [vmem:[#allocation7 + $0x10] sm:$0xff] %vm357, %v931
      %944 = vst.msk [vmem:[#allocation7 + $0x18] sm:$0xff] %vm357, %v932
      %945 = vst.msk [vmem:[#allocation7 + $0x20] sm:$0xff] %vm357, %v933
      %946 = vst.msk [vmem:[#allocation7 + $0x28] sm:$0xff] %vm357, %v934
      %947 = vst.msk [vmem:[#allocation7 + $0x30] sm:$0xff] %vm357, %v935
      %948 = vst.msk [vmem:[#allocation7 + $0x38] sm:$0xff] %vm357, %v936
      %949 = vst.msk [vmem:[#allocation7 + $0x40] sm:$0xff] %vm357, %v937
      %950 = vst.msk [vmem:[#allocation7 + $0x48] sm:$0xff] %vm357, %v938
      %951 = vst.msk [vmem:[#allocation7 + $0x50] sm:$0xff] %vm357, %v939
      %952 = vst.msk [vmem:[#allocation7 + $0x58] sm:$0xff] %vm357, %v940
    $region25: #{tpu_custom_call.1} parent=1 // pred_fallthru
      _
    %v953 = vld [vmem:[#allocation7] sm:$0xff]
    %v954 = vld [vmem:[#allocation7 + $0x8] sm:$0xff]
    %v955 = vld [vmem:[#allocation7 + $0x10] sm:$0xff]
    %v956 = vld [vmem:[#allocation7 + $0x18] sm:$0xff]
    %v957 = vld [vmem:[#allocation7 + $0x20] sm:$0xff]
    %v958 = vld [vmem:[#allocation7 + $0x28] sm:$0xff]
    %v959 = vld [vmem:[#allocation7 + $0x30] sm:$0xff]
    %v960 = vld [vmem:[#allocation7 + $0x38] sm:$0xff]
    %v961 = vld [vmem:[#allocation7 + $0x40] sm:$0xff]
    %v962 = vld [vmem:[#allocation7 + $0x48] sm:$0xff]
    %v963 = vld [vmem:[#allocation7 + $0x50] sm:$0xff]
    %v964 = vld [vmem:[#allocation7 + $0x58] sm:$0xff]
    %v965 = vsel %vm357, %v953, inf
    %966 = vmin.xlane.f32.xlu0 %v965
    %v967 = vpop.xlane.xlu0 %966
    %v968 = vsel %vm357, %v954, inf
    %969 = vmin.xlane.f32.xlu0 %v968
    %v970 = vpop.xlane.xlu0 %969
    %v971 = vsel %vm357, %v955, inf
    %972 = vmin.xlane.f32.xlu0 %v971
    %v973 = vpop.xlane.xlu0 %972
    %v974 = vsel %vm357, %v956, inf
    %975 = vmin.xlane.f32.xlu0 %v974
    %v976 = vpop.xlane.xlu0 %975
    %v977 = vsel %vm357, %v957, inf
    %978 = vmin.xlane.f32.xlu0 %v977
    %v979 = vpop.xlane.xlu0 %978
    %v980 = vsel %vm357, %v958, inf
    %981 = vmin.xlane.f32.xlu0 %v980
    %v982 = vpop.xlane.xlu0 %981
    %v983 = vsel %vm357, %v959, inf
    %984 = vmin.xlane.f32.xlu0 %v983
    %v985 = vpop.xlane.xlu0 %984
    %v986 = vsel %vm357, %v960, inf
    %987 = vmin.xlane.f32.xlu0 %v986
    %v988 = vpop.xlane.xlu0 %987
    %v989 = vsel %vm357, %v961, inf
    %990 = vmin.xlane.f32.xlu0 %v989
    %v991 = vpop.xlane.xlu0 %990
    %v992 = vsel %vm357, %v962, inf
    %993 = vmin.xlane.f32.xlu0 %v992
    %v994 = vpop.xlane.xlu0 %993
    %v995 = vsel %vm357, %v963, inf
    %996 = vmin.xlane.f32.xlu0 %v995
    %v997 = vpop.xlane.xlu0 %996
    %v998 = vsel %vm357, %v964, inf
    %999 = vmin.xlane.f32.xlu0 %v998
    %v1000 = vpop.xlane.xlu0 %999
    %v1001 = vmin.f32 %v967, %v970
    %v1002 = vrot.slane %v1001, 4
    %v1003 = vmin.f32 %v1001, %v1002
    %v1004 = vrot.slane %v1003, 2
    %v1005 = vmin.f32 %v1003, %v1004
    %v1006 = vrot.slane %v1005, 1
    %v1007 = vmin.f32 %v1005, %v1006
    %v1008 = vmin.f32 %v973, %v976
    %v1009 = vrot.slane %v1008, 4
    %v1010 = vmin.f32 %v1008, %v1009
    %v1011 = vrot.slane %v1010, 2
    %v1012 = vmin.f32 %v1010, %v1011
    %v1013 = vrot.slane %v1012, 1
    %v1014 = vmin.f32 %v1012, %v1013
    %v1015 = vmin.f32 %v979, %v982
    %v1016 = vrot.slane %v1015, 4
    %v1017 = vmin.f32 %v1015, %v1016
    %v1018 = vrot.slane %v1017, 2
    %v1019 = vmin.f32 %v1017, %v1018
    %v1020 = vrot.slane %v1019, 1
    %v1021 = vmin.f32 %v1019, %v1020
    %v1022 = vmin.f32 %v985, %v988
    %v1023 = vrot.slane %v1022, 4
    %v1024 = vmin.f32 %v1022, %v1023
    %v1025 = vrot.slane %v1024, 2
    %v1026 = vmin.f32 %v1024, %v1025
    %v1027 = vrot.slane %v1026, 1
    %v1028 = vmin.f32 %v1026, %v1027
    %v1029 = vmin.f32 %v991, %v994
    %v1030 = vrot.slane %v1029, 4
    %v1031 = vmin.f32 %v1029, %v1030
    %v1032 = vrot.slane %v1031, 2
    %v1033 = vmin.f32 %v1031, %v1032
    %v1034 = vrot.slane %v1033, 1
    %v1035 = vmin.f32 %v1033, %v1034
    %v1036 = vmin.f32 %v997, %v1000
    %v1037 = vrot.slane %v1036, 4
    %v1038 = vmin.f32 %v1036, %v1037
    %v1039 = vrot.slane %v1038, 2
    %v1040 = vmin.f32 %v1038, %v1039
    %v1041 = vrot.slane %v1040, 1
    %v1042 = vmin.f32 %v1040, %v1041
    %v1043 = vsel %vm357, %v953, -inf
    %1044 = vmax.xlane.f32.xlu0 %v1043
    %v1045 = vpop.xlane.xlu0 %1044
    %v1046 = vsel %vm357, %v954, -inf
    %1047 = vmax.xlane.f32.xlu0 %v1046
    %v1048 = vpop.xlane.xlu0 %1047
    %v1049 = vsel %vm357, %v955, -inf
    %1050 = vmax.xlane.f32.xlu0 %v1049
    %v1051 = vpop.xlane.xlu0 %1050
    %v1052 = vsel %vm357, %v956, -inf
    %1053 = vmax.xlane.f32.xlu0 %v1052
    %v1054 = vpop.xlane.xlu0 %1053
    %v1055 = vsel %vm357, %v957, -inf
    %1056 = vmax.xlane.f32.xlu0 %v1055
    %v1057 = vpop.xlane.xlu0 %1056
    %v1058 = vsel %vm357, %v958, -inf
    %1059 = vmax.xlane.f32.xlu0 %v1058
    %v1060 = vpop.xlane.xlu0 %1059
    %v1061 = vsel %vm357, %v959, -inf
    %1062 = vmax.xlane.f32.xlu0 %v1061
    %v1063 = vpop.xlane.xlu0 %1062
    %v1064 = vsel %vm357, %v960, -inf
    %1065 = vmax.xlane.f32.xlu0 %v1064
    %v1066 = vpop.xlane.xlu0 %1065
    %v1067 = vsel %vm357, %v961, -inf
    %1068 = vmax.xlane.f32.xlu0 %v1067
    %v1069 = vpop.xlane.xlu0 %1068
    %v1070 = vsel %vm357, %v962, -inf
    %1071 = vmax.xlane.f32.xlu0 %v1070
    %v1072 = vpop.xlane.xlu0 %1071
    %v1073 = vsel %vm357, %v963, -inf
    %1074 = vmax.xlane.f32.xlu0 %v1073
    %v1075 = vpop.xlane.xlu0 %1074
    %v1076 = vsel %vm357, %v964, -inf
    %1077 = vmax.xlane.f32.xlu0 %v1076
    %v1078 = vpop.xlane.xlu0 %1077
    %v1079 = vmax.f32 %v1045, %v1048
    %v1080 = vrot.slane %v1079, 4
    %v1081 = vmax.f32 %v1079, %v1080
    %v1082 = vrot.slane %v1081, 2
    %v1083 = vmax.f32 %v1081, %v1082
    %v1084 = vrot.slane %v1083, 1
    %v1085 = vmax.f32 %v1083, %v1084
    %v1086 = vmax.f32 %v1051, %v1054
    %v1087 = vrot.slane %v1086, 4
    %v1088 = vmax.f32 %v1086, %v1087
    %v1089 = vrot.slane %v1088, 2
    %v1090 = vmax.f32 %v1088, %v1089
    %v1091 = vrot.slane %v1090, 1
    %v1092 = vmax.f32 %v1090, %v1091
    %v1093 = vmax.f32 %v1057, %v1060
    %v1094 = vrot.slane %v1093, 4
    %v1095 = vmax.f32 %v1093, %v1094
    %v1096 = vrot.slane %v1095, 2
    %v1097 = vmax.f32 %v1095, %v1096
    %v1098 = vrot.slane %v1097, 1
    %v1099 = vmax.f32 %v1097, %v1098
    %v1100 = vmax.f32 %v1063, %v1066
    %v1101 = vrot.slane %v1100, 4
    %v1102 = vmax.f32 %v1100, %v1101
    %v1103 = vrot.slane %v1102, 2
    %v1104 = vmax.f32 %v1102, %v1103
    %v1105 = vrot.slane %v1104, 1
    %v1106 = vmax.f32 %v1104, %v1105
    %v1107 = vmax.f32 %v1069, %v1072
    %v1108 = vrot.slane %v1107, 4
    %v1109 = vmax.f32 %v1107, %v1108
    %v1110 = vrot.slane %v1109, 2
    %v1111 = vmax.f32 %v1109, %v1110
    %v1112 = vrot.slane %v1111, 1
    %v1113 = vmax.f32 %v1111, %v1112
    %v1114 = vmax.f32 %v1075, %v1078
    %v1115 = vrot.slane %v1114, 4
    %v1116 = vmax.f32 %v1114, %v1115
    %v1117 = vrot.slane %v1116, 2
    %v1118 = vmax.f32 %v1116, %v1117
    %v1119 = vrot.slane %v1118, 1
    %v1120 = vmax.f32 %v1118, %v1119
    %s1121 = sld [smem:[#allocation3 + $0xd]]
    %p1122 = scmp.ne.s32.totalorder %s1121, 0
    %s1123 = scalar_select %p1122, 1, 0
    %s1124 = scvt.s32.f32 %s1123
    %s1125 = ssub.f32 1.0, %s1124
    %v1126 = vsub.f32 %v1085, %v1007
    %v1127 = vsub.f32 %v1092, %v1014
    %v1128 = vsub.f32 %v1099, %v1021
    %v1129 = vsub.f32 %v1106, %v1028
    %v1130 = vsub.f32 %v1113, %v1035
    %v1131 = vsub.f32 %v1120, %v1042
    %v1132 = vmax.f32 %v1126, 1e-05
    %v1133 = vmax.f32 %v1127, 1e-05
    %v1134 = vmax.f32 %v1128, 1e-05
    %v1135 = vmax.f32 %v1129, 1e-05
    %v1136 = vmax.f32 %v1130, 1e-05
    %v1137 = vmax.f32 %v1131, 1e-05
    %v1138 = vstv %s1124
    %v1139 = vrcp.pop %v1132
    %v1140 = vmul.f32 %v1138, %v1139
    %v1141 = vrcp.pop %v1133
    %v1142 = vmul.f32 %v1138, %v1141
    %v1143 = vrcp.pop %v1134
    %v1144 = vmul.f32 %v1138, %v1143
    %v1145 = vrcp.pop %v1135
    %v1146 = vmul.f32 %v1138, %v1145
    %v1147 = vrcp.pop %v1136
    %v1148 = vmul.f32 %v1138, %v1147
    %v1149 = vrcp.pop %v1137
    %v1150 = vmul.f32 %v1138, %v1149
    %v1151 = vstv %s1125
    %v1152 = vadd.f32 %v1151, %v1140
    %v1153 = vadd.f32 %v1151, %v1142
    %v1154 = vadd.f32 %v1151, %v1144
    %v1155 = vadd.f32 %v1151, %v1146
    %v1156 = vadd.f32 %v1151, %v1148
    %v1157 = vadd.f32 %v1151, %v1150
    %v1158 = vmul.f32 %v1138, %v1007
    %v1159 = vmul.f32 %v1138, %v1014
    %v1160 = vmul.f32 %v1138, %v1021
    %v1161 = vmul.f32 %v1138, %v1028
    %v1162 = vmul.f32 %v1138, %v1035
    %v1163 = vmul.f32 %v1138, %v1042
    %v1164 = vrcp.pop %v42
    %v1165 = vmul.f32 1.0, %v1164
    %v1166 = vrcp.pop %v43
    %v1167 = vmul.f32 1.0, %v1166
    %v1168 = vrcp.pop %v44
    %v1169 = vmul.f32 1.0, %v1168
    %v1170 = vsub.f32 %v953, %v1158
    %v1171 = vsub.f32 %v954, %v1158
    %v1172 = vsub.f32 %v955, %v1159
    %v1173 = vsub.f32 %v956, %v1159
    %v1174 = vsub.f32 %v957, %v1160
    %v1175 = vsub.f32 %v958, %v1160
    %v1176 = vsub.f32 %v959, %v1161
    %v1177 = vsub.f32 %v960, %v1161
    %v1178 = vsub.f32 %v961, %v1162
    %v1179 = vsub.f32 %v962, %v1162
    %v1180 = vsub.f32 %v963, %v1163
    %v1181 = vsub.f32 %v964, %v1163
    %v1182 = vmul.f32 %v1170, %v1152
    %v1183 = vmul.f32 %v1171, %v1152
    %v1184 = vmul.f32 %v1172, %v1153
    %v1185 = vmul.f32 %v1173, %v1153
    %v1186 = vmul.f32 %v1174, %v1154
    %v1187 = vmul.f32 %v1175, %v1154
    %v1188 = vmul.f32 %v1176, %v1155
    %v1189 = vmul.f32 %v1177, %v1155
    %v1190 = vmul.f32 %v1178, %v1156
    %v1191 = vmul.f32 %v1179, %v1156
    %v1192 = vmul.f32 %v1180, %v1157
    %v1193 = vmul.f32 %v1181, %v1157
    %v1194 = vsub.f32 %v1182, %v113
    %v1195 = vsub.f32 %v1183, %v113
    %v1196 = vsub.f32 %v1184, %v117
    %v1197 = vsub.f32 %v1185, %v117
    %v1198 = vsub.f32 %v1186, %v121
    %v1199 = vsub.f32 %v1187, %v121
    %v1200 = vsub.f32 %v1188, %v113
    %v1201 = vsub.f32 %v1189, %v113
    %v1202 = vsub.f32 %v1190, %v117
    %v1203 = vsub.f32 %v1191, %v117
    %v1204 = vsub.f32 %v1192, %v121
    %v1205 = vsub.f32 %v1193, %v121
    %v1209 = vlaneseq
    %v1210 = vshrl.u32 %v1209, 7
    %v1211 = vsub.s32 0, %v1210
    %v1212 = vrot.slane %v1165, %v1211
    %v1213 = vlaneseq
    %v1214 = vshrl.u32 %v1213, 7
    %v1215 = vsub.s32 0, %v1214
    %v1216 = vrot.slane %v1167, %v1215
    %v1217 = vlaneseq
    %v1218 = vshrl.u32 %v1217, 7
    %v1219 = vsub.s32 0, %v1218
    %v1220 = vrot.slane %v1169, %v1219
    %1221 = vset.pattern.permute.xlu0 0
    %1222 = vperm.xlu0 %1221, %v1212
    %v1223 = vpop.permute.xlu0 %1222
    %1225 = vset.pattern.permute.xlu0 0
    %1226 = vperm.xlu0 %1225, %v1216
    %v1227 = vpop.permute.xlu0 %1226
    %1229 = vset.pattern.permute.xlu0 0
    %1230 = vperm.xlu0 %1229, %v1220
    %v1231 = vpop.permute.xlu0 %1230
    %v1233 = vmul.f32 %v1194, %v1223
    %v1234 = vmul.f32 %v1195, %v1223
    %v1235 = vmul.f32 %v1196, %v1227
    %v1236 = vmul.f32 %v1197, %v1227
    %v1237 = vmul.f32 %v1198, %v1231
    %v1238 = vmul.f32 %v1199, %v1231
    %v1239 = vmul.f32 %v1200, %v1223
    %v1240 = vmul.f32 %v1201, %v1223
    %v1241 = vmul.f32 %v1202, %v1227
    %v1242 = vmul.f32 %v1203, %v1227
    %v1243 = vmul.f32 %v1204, %v1231
    %v1244 = vmul.f32 %v1205, %v1231
    %1245 = vst.msk [vmem:[#allocation7] sm:$0xff] %vm357, %v1233
    %1246 = vst.msk [vmem:[#allocation7 + $0x8] sm:$0xff] %vm357, %v1234
    %1247 = vst.msk [vmem:[#allocation7 + $0x10] sm:$0xff] %vm357, %v1235
    %1248 = vst.msk [vmem:[#allocation7 + $0x18] sm:$0xff] %vm357, %v1236
    %1249 = vst.msk [vmem:[#allocation7 + $0x20] sm:$0xff] %vm357, %v1237
    %1250 = vst.msk [vmem:[#allocation7 + $0x28] sm:$0xff] %vm357, %v1238
    %1251 = vst.msk [vmem:[#allocation7 + $0x30] sm:$0xff] %vm357, %v1239
    %1252 = vst.msk [vmem:[#allocation7 + $0x38] sm:$0xff] %vm357, %v1240
    %1253 = vst.msk [vmem:[#allocation7 + $0x40] sm:$0xff] %vm357, %v1241
    %1254 = vst.msk [vmem:[#allocation7 + $0x48] sm:$0xff] %vm357, %v1242
    %1255 = vst.msk [vmem:[#allocation7 + $0x50] sm:$0xff] %vm357, %v1243
    %1256 = vst.msk [vmem:[#allocation7 + $0x58] sm:$0xff] %vm357, %v1244
    // Predicated region
    $region26: #{tpu_custom_call.1} parent=1 // pred_check
      _
    $region27: #{tpu_custom_call.1} parent=1 // pred_check_branch
      %1258 = sbr.rel (0) target = $region29
    $region28: #{tpu_custom_call.1} parent=1 // pred_region
      %s1260 = ssub.s32 1536, 1536
      %1261 = vsyncadd [#allocation6], %s1260
      %s1262 = sshll.u32 [#allocation7], 4
      %s1263 = int_to_ptr.vmem [resolvable:$true] %s1262
      %1268 = dma.vmem_to_hbm [thread:$0]  %s1263, 1536, %s5, [#allocation6], 128, 128, 8
    $region29: #{tpu_custom_call.1} parent=1 // pred_fallthru
      _
    // Predicated region
    $region30: #{tpu_custom_call.1} parent=1 // pred_check
      _
    $region31: #{tpu_custom_call.1} parent=1 // pred_check_branch
      %1270 = sbr.rel (0) target = $region33
    $region32: #{tpu_custom_call.1} parent=1 // pred_region
      %1271 = dma.done [#allocation6], 1536
    $region33: #{tpu_custom_call.1} parent=1 // pred_fallthru
      _
    %1272 = vsyncpa [#allocation5], 1
    %1273 = vsyncpa [#allocation6], 1

</llo_original>
